<compile_context>
chip_gen: v5e
topology: v5e:2x2
jax: 0.10.0
libtpu: 0.0.40
codegen_flags: <defaults>
</compile_context>

<pallas_src>
import jax
import jax.numpy as jnp
import numpy as np
from jax import lax
from jax.experimental import pallas as pl
from jax.experimental.pallas import tpu as pltpu

C_IN = 256   # bottleneck input/output channels
C_MID = 64   # bottleneck hidden channels
EPS = 1e-5   # BatchNorm eps


def _resnet_block_kernel(x_ref, w1_ref, b1_ref, w2_ref, b2_ref, w3_ref, b3_ref,
                         o_ref, pad_ref):
    """One grid step = Nb images of shape (H, W, 256)."""
    nb, H, W, _ = x_ref.shape
    M = nb * H * W

    x = x_ref[...]                                   # (nb, H, W, 256) f32
    xm = x.reshape(M, C_IN).astype(jnp.bfloat16)     # bf16 MXU operand

    # --- conv1: 1x1, 256 -> 64 (+ folded BN1) + ReLU -----------------------
    h1 = jnp.dot(xm, w1_ref[...], preferred_element_type=jnp.float32) + b1_ref[...]
    h1 = jnp.maximum(h1, 0.0)                        # (M, 64) f32

    # Fill the zero-padded activation buffer:
    #  * interior rows get [0 | h1 | 0] padded along W in-register (dense store),
    #  * only the top/bottom halo rows are explicitly zeroed (done every step,
    #    NOT under program_id==0, so it stays correct under megacore sharding).
    h1r = h1.astype(jnp.bfloat16).reshape(nb, H, W, C_MID)
    zcol = jnp.zeros((nb, H, 1, C_MID), jnp.bfloat16)
    pad_ref[:, pl.ds(1, H), :, :] = jnp.concatenate([zcol, h1r, zcol], axis=2)
    zrow = jnp.zeros((nb, 1, W + 2, C_MID), jnp.bfloat16)
    pad_ref[:, pl.ds(0, 1), :, :] = zrow
    pad_ref[:, pl.ds(H + 1, 1), :, :] = zrow

    # --- conv2: 3x3 "same", 64 -> 64 (+ folded BN2) + ReLU ------------------
    # im2col: concatenate the 9 shifted views along the lane axis -> (M, 576)
    # slab, then a single K=576 MXU matmul against the (576, 64) folded weight.
    taps = [pad_ref[:, pl.ds(dy, H), pl.ds(dx, W), :]
            for dy in range(3) for dx in range(3)]
    slab = jnp.concatenate(taps, axis=-1).reshape(M, 9 * C_MID)   # (M, 576) bf16
    h2 = jnp.dot(slab, w2_ref[...], preferred_element_type=jnp.float32) + b2_ref[...]
    h2 = jnp.maximum(h2, 0.0)                        # (M, 64) f32

    # --- conv3: 1x1, 64 -> 256 (+ bias), then residual add in f32 ----------
    h3 = jnp.dot(h2.astype(jnp.bfloat16), w3_ref[...],
                 preferred_element_type=jnp.float32) + b3_ref[...]
    o_ref[...] = (x + h3.reshape(nb, H, W, C_IN)).astype(o_ref.dtype)


def resnet_block(x, params, *, nb=2):
    """x: (N, H, W, 256) float32, NHWC. Returns x + bottleneck(x).

    nb = images per grid step.  Pick nb so nb*H*W >= 512 (fills the MXU M dim)
    while the (nb, H, W, 256) f32 in/out blocks (double-buffered) plus the
    (nb, H+2, W+2, 64) bf16 scratch stay within the scoped VMEM budget
    (re-derive for v7x's smaller 64 MiB VMEM at large spatial sizes).
    """
    N, H, W, C = x.shape
    assert C == C_IN and N % nb == 0
    w1, b1, w2, b2, w3, b3 = params

    # bf16 weights for the MXU datapath (biases stay f32; f32 accumulation).
    w1 = w1.astype(jnp.bfloat16)
    w2 = w2.astype(jnp.bfloat16)
    w3 = w3.astype(jnp.bfloat16)

    flops = 2 * N * H * W * (C_IN * C_MID + 9 * C_MID * C_MID + C_MID * C_IN)
    bytes_accessed = (2 * N * H * W * C_IN * 4                               # x in + out
                      + (C_IN * C_MID + 9 * C_MID * C_MID + C_MID * C_IN) * 2
                      + (2 * C_MID + C_IN) * 4)

    kernel = pl.pallas_call(
        _resnet_block_kernel,
        out_shape=jax.ShapeDtypeStruct((N, H, W, C_IN), x.dtype),
        grid_spec=pltpu.PrefetchScalarGridSpec(
            num_scalar_prefetch=0,
            grid=(N // nb,),
            in_specs=[
                pl.BlockSpec((nb, H, W, C_IN), lambda n: (n, 0, 0, 0)),    # x
                pl.BlockSpec((C_IN, C_MID), lambda n: (0, 0)),             # w1 (folded, bf16)
                pl.BlockSpec((1, C_MID), lambda n: (0, 0)),                # b1 (folded)
                pl.BlockSpec((9 * C_MID, C_MID), lambda n: (0, 0)),        # w2 im2col (folded, bf16)
                pl.BlockSpec((1, C_MID), lambda n: (0, 0)),                # b2 (folded)
                pl.BlockSpec((C_MID, C_IN), lambda n: (0, 0)),             # w3 (bf16)
                pl.BlockSpec((1, C_IN), lambda n: (0, 0)),                 # b3
            ],
            out_specs=pl.BlockSpec((nb, H, W, C_IN), lambda n: (n, 0, 0, 0)),
            scratch_shapes=[pltpu.VMEM((nb, H + 2, W + 2, C_MID), jnp.bfloat16)],
        ),
        compiler_params=pltpu.CompilerParams(
            dimension_semantics=("parallel",)),
        cost_estimate=pl.CostEstimate(flops=flops, transcendentals=0,
                                      bytes_accessed=bytes_accessed),
    )
    return kernel(x, w1, b1, w2, b2, w3, b3)


def init_params(key):
    """Deterministic synthetic params with PyTorch-equivalent shapes,
    pre-reshaped to matmul/im2col form and with eval-mode BatchNorm folded in.
    Returned in f32 (the wrapper casts weights to bf16 for the MXU)."""
    k1, k1b, k2, k2b, k3, k3b = jax.random.split(key, 6)

    # Conv weights in PyTorch layout (C_out, C_in, kH, kW), Kaiming-ish scale.
    w1 = jax.random.normal(k1, (C_MID, C_IN, 1, 1), jnp.float32) / np.sqrt(C_IN)
    b1 = jax.random.normal(k1b, (C_MID,), jnp.float32) * 0.1
    w2 = jax.random.normal(k2, (C_MID, C_MID, 3, 3), jnp.float32) / np.sqrt(C_MID * 9)
    b2 = jax.random.normal(k2b, (C_MID,), jnp.float32) * 0.1
    w3 = jax.random.normal(k3, (C_IN, C_MID, 1, 1), jnp.float32) / np.sqrt(C_MID)
    b3 = jax.random.normal(k3b, (C_IN,), jnp.float32) * 0.1

    # BatchNorm2d PyTorch defaults (eval mode): gamma=1, beta=0, mean=0, var=1.
    gamma = jnp.ones((C_MID,), jnp.float32)
    beta = jnp.zeros((C_MID,), jnp.float32)
    mean = jnp.zeros((C_MID,), jnp.float32)
    var = jnp.ones((C_MID,), jnp.float32)
    scale = gamma / jnp.sqrt(var + EPS)              # same for BN1 and BN2 here

    # conv1 -> matmul form (C_in, C_out), fold BN1.
    w1m = jnp.transpose(w1[:, :, 0, 0], (1, 0)) * scale[None, :]
    b1f = ((b1 - mean) * scale + beta)[None, :]

    # conv2 -> im2col form (9*C_in, C_out); row index = (ky*3+kx)*C_in + c_in; fold BN2.
    w2t = jnp.transpose(w2, (2, 3, 1, 0)).reshape(9 * C_MID, C_MID) * scale[None, :]
    b2f = ((b2 - mean) * scale + beta)[None, :]

    # conv3 -> matmul form (C_in, C_out); no BN after it.
    w3m = jnp.transpose(w3[:, :, 0, 0], (1, 0))
    b3f = b3[None, :]

    return w1m, b1f, w2t, b2f, w3m, b3f


def ref_forward(x, w1m, b1f, w2t, b2f, w3m, b3f):
    """Pure-JAX f32 reference of the same (BN-folded) math, for self-check."""
    h = jnp.maximum(jnp.einsum('nhwc,cd->nhwd', x, w1m) + b1f, 0.0)
    w2_hwio = w2t.reshape(3, 3, C_MID, C_MID)
    h = lax.conv_general_dilated(h, w2_hwio, (1, 1), 'SAME',
                                 dimension_numbers=('NHWC', 'HWIO', 'NHWC'))
    h = jnp.maximum(h + b2f, 0.0)
    h = jnp.einsum('nhwc,cd->nhwd', h, w3m) + b3f
    return x + h


if __name__ == "__main__":
    key = jax.random.PRNGKey(0)
    kx, kp = jax.random.split(key)

    # Small spatial; channels fixed at 256 by the module.  N=4 with nb=2 gives an
    # even grid of 2 (both v7x TensorCores busy) and M = nb*H*W = 512 per matmul.
    N, H, W = 4, 16, 16
    x = jax.random.normal(kx, (N, H, W, C_IN), jnp.float32)
    params = init_params(kp)

    out = resnet_block(x, params, nb=2)
    out = jax.block_until_ready(out)

    ref = ref_forward(x, *params)
    # bf16 matmul operands with f32 accumulation -> loosened tolerance vs f32 ref.
    np.testing.assert_allclose(np.asarray(out), np.asarray(ref), rtol=2e-2, atol=5e-2)

    print("KERNEL_OK")
</pallas_src>

<mosaic_0001>
module attributes {stable_mosaic.version = 11 : i64} {
  func.func @_resnet_block_kernel(%arg0: i32, %arg1: memref<2x16x16x256xf32, #tpu.memory_space<vmem>>, %arg2: memref<256x64xbf16, #tpu.memory_space<vmem>>, %arg3: memref<1x64xf32, #tpu.memory_space<vmem>>, %arg4: memref<576x64xbf16, #tpu.memory_space<vmem>>, %arg5: memref<1x64xf32, #tpu.memory_space<vmem>>, %arg6: memref<64x256xbf16, #tpu.memory_space<vmem>>, %arg7: memref<1x256xf32, #tpu.memory_space<vmem>>, %arg8: memref<2x16x16x256xf32, #tpu.memory_space<vmem>>, %arg9: memref<2x18x18x64xbf16, #tpu.memory_space<vmem>>) attributes {dimension_semantics = [#tpu.dimension_semantics<parallel>], iteration_bounds = array<i64: 2>, scalar_prefetch = 0 : i64, scratch_operands = 1 : i64, tpu.core_type = #tpu.core_type<tc>, window_params = [{transform_indices = @transform_0, window_bounds = array<i64: 2, 16, 16, 256>}, {pipeline_mode = #tpu.pipeline_mode<synchronous>, transform_indices = @transform_1, window_bounds = array<i64: 256, 64>}, {pipeline_mode = #tpu.pipeline_mode<synchronous>, transform_indices = @transform_2, window_bounds = array<i64: 1, 64>}, {pipeline_mode = #tpu.pipeline_mode<synchronous>, transform_indices = @transform_3, window_bounds = array<i64: 576, 64>}, {pipeline_mode = #tpu.pipeline_mode<synchronous>, transform_indices = @transform_4, window_bounds = array<i64: 1, 64>}, {pipeline_mode = #tpu.pipeline_mode<synchronous>, transform_indices = @transform_5, window_bounds = array<i64: 64, 256>}, {pipeline_mode = #tpu.pipeline_mode<synchronous>, transform_indices = @transform_6, window_bounds = array<i64: 1, 256>}, {transform_indices = @transform_7, window_bounds = array<i64: 2, 16, 16, 256>}]} {
    %c0 = arith.constant 0 : index
    %c0_0 = arith.constant 0 : index
    %c0_1 = arith.constant 0 : index
    %c0_2 = arith.constant 0 : index
    %0 = vector.load %arg1[%c0, %c0_0, %c0_1, %c0_2] : memref<2x16x16x256xf32, #tpu.memory_space<vmem>>, vector<2x16x16x256xf32>
    %1 = vector.shape_cast %0 : vector<2x16x16x256xf32> to vector<512x256xf32>
    %2 = arith.truncf %1 : vector<512x256xf32> to vector<512x256xbf16>
    %c0_3 = arith.constant 0 : index
    %c0_4 = arith.constant 0 : index
    %3 = vector.load %arg2[%c0_3, %c0_4] : memref<256x64xbf16, #tpu.memory_space<vmem>>, vector<256x64xbf16>
    %cst = arith.constant dense<0.000000e+00> : vector<512x64xf32>
    %4 = tpu.matmul %2, %3, %cst {dimension_numbers = #tpu.dot_dimension_numbers<[1], [0], [0], [1], [0, 0, 1, 1], [], []>} : vector<512x256xbf16>, vector<256x64xbf16>, vector<512x64xf32> -> vector<512x64xf32>
    %c0_5 = arith.constant 0 : index
    %c0_6 = arith.constant 0 : index
    %5 = vector.load %arg3[%c0_5, %c0_6] : memref<1x64xf32, #tpu.memory_space<vmem>>, vector<1x64xf32>
    %6 = vector.broadcast %5 : vector<1x64xf32> to vector<512x64xf32>
    %7 = arith.addf %4, %6 : vector<512x64xf32>
    %cst_7 = arith.constant 0.000000e+00 : f32
    %8 = vector.broadcast %cst_7 : f32 to vector<512x64xf32>
    %9 = arith.maximumf %7, %8 : vector<512x64xf32>
    %10 = arith.truncf %9 : vector<512x64xf32> to vector<512x64xbf16>
    %11 = vector.shape_cast %10 : vector<512x64xbf16> to vector<2x16x16x64xbf16>
    %cst_8 = arith.constant 0.000000e+00 : bf16
    %12 = vector.broadcast %cst_8 : bf16 to vector<2x16x1x64xbf16>
    %13 = tpu.concatenate %12, %11, %12 in 2 : vector<2x16x1x64xbf16>, vector<2x16x16x64xbf16>, vector<2x16x1x64xbf16> -> vector<2x16x18x64xbf16>
    %c0_9 = arith.constant 0 : index
    %c1 = arith.constant 1 : index
    %c0_10 = arith.constant 0 : index
    %c0_11 = arith.constant 0 : index
    %14 = vector.load %arg9[%c0_9, %c1, %c0_10, %c0_11] : memref<2x18x18x64xbf16, #tpu.memory_space<vmem>>, vector<2x16x18x64xbf16>
    tpu.vector_store %arg9[%c0_9, %c1, %c0_10, %c0_11], %13 {strides = array<i32>} : memref<2x18x18x64xbf16, #tpu.memory_space<vmem>>, vector<2x16x18x64xbf16>,
    %cst_12 = arith.constant 0.000000e+00 : bf16
    %15 = vector.broadcast %cst_12 : bf16 to vector<2x1x18x64xbf16>
    %c0_13 = arith.constant 0 : index
    %c0_14 = arith.constant 0 : index
    %c0_15 = arith.constant 0 : index
    %c0_16 = arith.constant 0 : index
    %16 = vector.load %arg9[%c0_13, %c0_14, %c0_15, %c0_16] : memref<2x18x18x64xbf16, #tpu.memory_space<vmem>>, vector<2x1x18x64xbf16>
    tpu.vector_store %arg9[%c0_13, %c0_14, %c0_15, %c0_16], %15 {strides = array<i32>} : memref<2x18x18x64xbf16, #tpu.memory_space<vmem>>, vector<2x1x18x64xbf16>,
    %c0_17 = arith.constant 0 : index
    %c17 = arith.constant 17 : index
    %c0_18 = arith.constant 0 : index
    %c0_19 = arith.constant 0 : index
    %17 = vector.load %arg9[%c0_17, %c17, %c0_18, %c0_19] : memref<2x18x18x64xbf16, #tpu.memory_space<vmem>>, vector<2x1x18x64xbf16>
    tpu.vector_store %arg9[%c0_17, %c17, %c0_18, %c0_19], %15 {strides = array<i32>} : memref<2x18x18x64xbf16, #tpu.memory_space<vmem>>, vector<2x1x18x64xbf16>,
    %c0_20 = arith.constant 0 : index
    %c0_21 = arith.constant 0 : index
    %c0_22 = arith.constant 0 : index
    %c0_23 = arith.constant 0 : index
    %18 = vector.load %arg9[%c0_20, %c0_21, %c0_22, %c0_23] : memref<2x18x18x64xbf16, #tpu.memory_space<vmem>>, vector<2x16x16x64xbf16>
    %c0_24 = arith.constant 0 : index
    %c0_25 = arith.constant 0 : index
    %c1_26 = arith.constant 1 : index
    %c0_27 = arith.constant 0 : index
    %19 = vector.load %arg9[%c0_24, %c0_25, %c1_26, %c0_27] : memref<2x18x18x64xbf16, #tpu.memory_space<vmem>>, vector<2x16x16x64xbf16>
    %c0_28 = arith.constant 0 : index
    %c0_29 = arith.constant 0 : index
    %c2 = arith.constant 2 : index
    %c0_30 = arith.constant 0 : index
    %20 = vector.load %arg9[%c0_28, %c0_29, %c2, %c0_30] : memref<2x18x18x64xbf16, #tpu.memory_space<vmem>>, vector<2x16x16x64xbf16>
    %c0_31 = arith.constant 0 : index
    %c1_32 = arith.constant 1 : index
    %c0_33 = arith.constant 0 : index
    %c0_34 = arith.constant 0 : index
    %21 = vector.load %arg9[%c0_31, %c1_32, %c0_33, %c0_34] : memref<2x18x18x64xbf16, #tpu.memory_space<vmem>>, vector<2x16x16x64xbf16>
    %c0_35 = arith.constant 0 : index
    %c1_36 = arith.constant 1 : index
    %c1_37 = arith.constant 1 : index
    %c0_38 = arith.constant 0 : index
    %22 = vector.load %arg9[%c0_35, %c1_36, %c1_37, %c0_38] : memref<2x18x18x64xbf16, #tpu.memory_space<vmem>>, vector<2x16x16x64xbf16>
    %c0_39 = arith.constant 0 : index
    %c1_40 = arith.constant 1 : index
    %c2_41 = arith.constant 2 : index
    %c0_42 = arith.constant 0 : index
    %23 = vector.load %arg9[%c0_39, %c1_40, %c2_41, %c0_42] : memref<2x18x18x64xbf16, #tpu.memory_space<vmem>>, vector<2x16x16x64xbf16>
    %c0_43 = arith.constant 0 : index
    %c2_44 = arith.constant 2 : index
    %c0_45 = arith.constant 0 : index
    %c0_46 = arith.constant 0 : index
    %24 = vector.load %arg9[%c0_43, %c2_44, %c0_45, %c0_46] : memref<2x18x18x64xbf16, #tpu.memory_space<vmem>>, vector<2x16x16x64xbf16>
    %c0_47 = arith.constant 0 : index
    %c2_48 = arith.constant 2 : index
    %c1_49 = arith.constant 1 : index
    %c0_50 = arith.constant 0 : index
    %25 = vector.load %arg9[%c0_47, %c2_48, %c1_49, %c0_50] : memref<2x18x18x64xbf16, #tpu.memory_space<vmem>>, vector<2x16x16x64xbf16>
    %c0_51 = arith.constant 0 : index
    %c2_52 = arith.constant 2 : index
    %c2_53 = arith.constant 2 : index
    %c0_54 = arith.constant 0 : index
    %26 = vector.load %arg9[%c0_51, %c2_52, %c2_53, %c0_54] : memref<2x18x18x64xbf16, #tpu.memory_space<vmem>>, vector<2x16x16x64xbf16>
    %27 = tpu.concatenate %18, %19, %20, %21, %22, %23, %24, %25, %26 in 3 : vector<2x16x16x64xbf16>, vector<2x16x16x64xbf16>, vector<2x16x16x64xbf16>, vector<2x16x16x64xbf16>, vector<2x16x16x64xbf16>, vector<2x16x16x64xbf16>, vector<2x16x16x64xbf16>, vector<2x16x16x64xbf16>, vector<2x16x16x64xbf16> -> vector<2x16x16x576xbf16>
    %28 = vector.shape_cast %27 : vector<2x16x16x576xbf16> to vector<512x576xbf16>
    %c0_55 = arith.constant 0 : index
    %c0_56 = arith.constant 0 : index
    %29 = vector.load %arg4[%c0_55, %c0_56] : memref<576x64xbf16, #tpu.memory_space<vmem>>, vector<576x64xbf16>
    %cst_57 = arith.constant dense<0.000000e+00> : vector<512x64xf32>
    %30 = tpu.matmul %28, %29, %cst_57 {dimension_numbers = #tpu.dot_dimension_numbers<[1], [0], [0], [1], [0, 0, 1, 1], [], []>} : vector<512x576xbf16>, vector<576x64xbf16>, vector<512x64xf32> -> vector<512x64xf32>
    %c0_58 = arith.constant 0 : index
    %c0_59 = arith.constant 0 : index
    %31 = vector.load %arg5[%c0_58, %c0_59] : memref<1x64xf32, #tpu.memory_space<vmem>>, vector<1x64xf32>
    %32 = vector.broadcast %31 : vector<1x64xf32> to vector<512x64xf32>
    %33 = arith.addf %30, %32 : vector<512x64xf32>
    %cst_60 = arith.constant 0.000000e+00 : f32
    %34 = vector.broadcast %cst_60 : f32 to vector<512x64xf32>
    %35 = arith.maximumf %33, %34 : vector<512x64xf32>
    %36 = arith.truncf %35 : vector<512x64xf32> to vector<512x64xbf16>
    %c0_61 = arith.constant 0 : index
    %c0_62 = arith.constant 0 : index
    %37 = vector.load %arg6[%c0_61, %c0_62] : memref<64x256xbf16, #tpu.memory_space<vmem>>, vector<64x256xbf16>
    %cst_63 = arith.constant dense<0.000000e+00> : vector<512x256xf32>
    %38 = tpu.matmul %36, %37, %cst_63 {dimension_numbers = #tpu.dot_dimension_numbers<[1], [0], [0], [1], [0, 0, 1, 1], [], []>} : vector<512x64xbf16>, vector<64x256xbf16>, vector<512x256xf32> -> vector<512x256xf32>
    %c0_64 = arith.constant 0 : index
    %c0_65 = arith.constant 0 : index
    %39 = vector.load %arg7[%c0_64, %c0_65] : memref<1x256xf32, #tpu.memory_space<vmem>>, vector<1x256xf32>
    %40 = vector.broadcast %39 : vector<1x256xf32> to vector<512x256xf32>
    %41 = arith.addf %38, %40 : vector<512x256xf32>
    %42 = vector.shape_cast %41 : vector<512x256xf32> to vector<2x16x16x256xf32>
    %43 = arith.addf %0, %42 : vector<2x16x16x256xf32>
    %c0_66 = arith.constant 0 : index
    %c0_67 = arith.constant 0 : index
    %c0_68 = arith.constant 0 : index
    %c0_69 = arith.constant 0 : index
    %44 = vector.load %arg8[%c0_66, %c0_67, %c0_68, %c0_69] : memref<2x16x16x256xf32, #tpu.memory_space<vmem>>, vector<2x16x16x256xf32>
    tpu.vector_store %arg8[%c0_66, %c0_67, %c0_68, %c0_69], %43 {strides = array<i32>} : memref<2x16x16x256xf32, #tpu.memory_space<vmem>>, vector<2x16x16x256xf32>,
    return
  }
  func.func @transform_0(%arg0: i32) -> (i32, i32, i32, i32) {
    %c0_i32 = arith.constant 0 : i32
    %c0_i32_0 = arith.constant 0 : i32
    %c0_i32_1 = arith.constant 0 : i32
    %c0_i32_2 = arith.constant 0 : i32
    return %arg0, %c0_i32, %c0_i32_0, %c0_i32_1 : i32, i32, i32, i32
  }
  func.func @transform_1(%arg0: i32) -> (i32, i32) {
    %c0_i32 = arith.constant 0 : i32
    %c0_i32_0 = arith.constant 0 : i32
    %c0_i32_1 = arith.constant 0 : i32
    return %c0_i32, %c0_i32_0 : i32, i32
  }
  func.func @transform_2(%arg0: i32) -> (i32, i32) {
    %c0_i32 = arith.constant 0 : i32
    %c0_i32_0 = arith.constant 0 : i32
    %c0_i32_1 = arith.constant 0 : i32
    return %c0_i32, %c0_i32_0 : i32, i32
  }
  func.func @transform_3(%arg0: i32) -> (i32, i32) {
    %c0_i32 = arith.constant 0 : i32
    %c0_i32_0 = arith.constant 0 : i32
    %c0_i32_1 = arith.constant 0 : i32
    return %c0_i32, %c0_i32_0 : i32, i32
  }
  func.func @transform_4(%arg0: i32) -> (i32, i32) {
    %c0_i32 = arith.constant 0 : i32
    %c0_i32_0 = arith.constant 0 : i32
    %c0_i32_1 = arith.constant 0 : i32
    return %c0_i32, %c0_i32_0 : i32, i32
  }
  func.func @transform_5(%arg0: i32) -> (i32, i32) {
    %c0_i32 = arith.constant 0 : i32
    %c0_i32_0 = arith.constant 0 : i32
    %c0_i32_1 = arith.constant 0 : i32
    return %c0_i32, %c0_i32_0 : i32, i32
  }
  func.func @transform_6(%arg0: i32) -> (i32, i32) {
    %c0_i32 = arith.constant 0 : i32
    %c0_i32_0 = arith.constant 0 : i32
    %c0_i32_1 = arith.constant 0 : i32
    return %c0_i32, %c0_i32_0 : i32, i32
  }
  func.func @transform_7(%arg0: i32) -> (i32, i32, i32, i32) {
    %c0_i32 = arith.constant 0 : i32
    %c0_i32_0 = arith.constant 0 : i32
    %c0_i32_1 = arith.constant 0 : i32
    %c0_i32_2 = arith.constant 0 : i32
    return %arg0, %c0_i32, %c0_i32_0, %c0_i32_1 : i32, i32, i32, i32
  }
}

</mosaic_0001>

<llo_original>
// kernel: tpu_custom_call.1
$region0: #{tpu_custom_call.1}
  #allocation0 [shape = 'u32[]', space=smem, size = 0x4, offset = 0x4, fixed_abs, tag = 'smem constant byte address 0x4 - core index']
  #allocation1 [shape = 'u32[72,128]{1,0:T(1,128)}', space=vmem, size = 0x9000, scoped, tag = 'internal scratch']
  #allocation2 [shape = 'bf16[2,18,18,64]{3,2,1,0:T(8,128)(2,1)}', space=vmem, size = 0x36000, scoped, tag = 'scratch operand']
  %s0 = inlined_call_operand.hbm [shape: f32[4,16,16,256], index: 0, kind: input, shape index: {}]
  %s1 = inlined_call_operand.vmem [shape: bf16[256,64], index: 1, kind: input, shape index: {}]
  %s2 = inlined_call_operand.vmem [shape: f32[1,64], index: 2, kind: input, shape index: {}]
  %s3 = inlined_call_operand.vmem [shape: bf16[576,64], index: 3, kind: input, shape index: {}]
  %s4 = inlined_call_operand.vmem [shape: f32[1,64], index: 4, kind: input, shape index: {}]
  %s5 = inlined_call_operand.vmem [shape: bf16[64,256], index: 5, kind: input, shape index: {}]
  %s6 = inlined_call_operand.vmem [shape: f32[1,256], index: 6, kind: input, shape index: {}]
  %s7 = inlined_call_operand.hbm [shape: f32[4,16,16,256], index: 7, kind: output, shape index: {}]
  %s8 = sld [smem:[#allocation0]]
  $region65: #{tpu_custom_call.1} parent=0
    _
  %s10 = ssub.s32 1, %s8
  %s11 = scalar_select 0, %s10, %s8
  $region1: #{tpu_custom_call.1} parent=0
    #allocation3 [shape = 'u8[1048576]{0}', space=vmem, size = 0x100000, scoped, tag = 'input window, operand 0']
    #allocation4 [shape = 's32[2]{0}', space=sflag, size = 0x8, scoped, tag = 'scoped memory for tpu_custom_call.1']
    #allocation5 [shape = 's32[2]{0}', space=sflag, size = 0x8, scoped, tag = 'scoped memory for tpu_custom_call.1']
    #allocation6 [shape = 'u8[1048576]{0}', space=vmem, size = 0x100000, scoped, tag = 'output window, operand 0']
    %12 = vsyncpa [#allocation4], 0
    %s13 = scalar_lea.sflag [#allocation4], 1
    %14 = vsyncpa %s13, 0
    %15 = vsyncpa [#allocation5], 0
    %s16 = scalar_lea.sflag [#allocation5], 1
    %17 = vsyncpa %s16, 0
    loop: start=0, step=1, limit=4
    $region2: #{tpu_custom_call.1} parent=1 // loop_pre_header
      _
    $region3: #{tpu_custom_call.1} parent=1 // loop_header
      %s19 = sphi 0, %s23
      %p20 = scmp.ge.s32.totalorder %s19, 4
      %s29 = sphi 0, %s31
      %s32 = sphi 0, %s29
      %s33 = sphi 0, %s32
      %s49 = sphi 0, %s33
      %s53 = sphi 0, %s53
      %s55 = sphi 0, %s53
      %s56 = sphi 0, %s55
      %s70 = sphi 0, %s56
      %s74 = sphi 0, %s74
      %s76 = sphi 0, %s74
      %s77 = sphi 0, %s76
      %s91 = sphi 0, %s77
      %s95 = sphi 0, %s95
      %s97 = sphi 0, %s95
      %s98 = sphi 0, %s97
      %s112 = sphi 0, %s98
      %s116 = sphi 0, %s116
      %s118 = sphi 0, %s116
      %s119 = sphi 0, %s118
      %s133 = sphi 0, %s119
      %s137 = sphi 0, %s137
      %s139 = sphi 0, %s137
      %s140 = sphi 0, %s139
      %s154 = sphi 0, %s140
      %s158 = sphi 0, %s158
      %s160 = sphi 0, %s158
      %s161 = sphi 0, %s160
      %s175 = sphi 0, %s161
      %s181 = sphi 0, %s183
      %s184 = sphi 0, %s181
      %s185 = sphi 0, %s184
      %s201 = sphi 0, %s185
    $region4: #{tpu_custom_call.1} parent=1 // loop_header_branch
      %22 = sbr.rel (%p20) target = $region8
    $region5: #{tpu_custom_call.1} parent=1 // loop_body
      %s24 = ssub.s32 %s19, 1
      %s25 = ssub.s32 %s19, 2
      %s26 = sadd.s32 %s19, 1
      %s27 = ssub.s32 %s19, %s26
      %p28 = scmp.eq.s32.totalorder %s27, 0
      %s30 = sadd.s32 %s29, 1
      %s31 = scalar_select %p28, %s29, %s30
      %p34 = pneg %p28
      %p35 = scmp.eq.s32.totalorder %s19, 1
      %p36 = por %p34, %p35
      %p37 = scmp.ne.s32.totalorder %s29, %s32
      %p38 = scmp.eq.s32.totalorder %s19, 0
      %p39 = por %p37, %p38
      %p40 = scmp.ne.s32.totalorder %s29, %s32
      %p41 = scmp.eq.s32.totalorder %s24, 1
      %p42 = por %p40, %p41
      %p43 = scmp.ne.s32.totalorder %s32, %s33
      %p44 = scmp.eq.s32.totalorder %s24, 0
      %p45 = por %p43, %p44
      %p46 = scmp.ne.s32.totalorder %s32, %s33
      %p47 = scmp.eq.s32.totalorder %s25, 1
      %p48 = por %p46, %p47
      %p50 = scmp.ne.s32.totalorder %s33, %s49
      %p51 = scmp.eq.s32.totalorder %s25, 0
      %p52 = por %p50, %p51
      %s54 = sadd.s32 %s53, 1
      %p57 = scmp.eq.s32.totalorder %s19, 1
      %p58 = scmp.ne.s32.totalorder %s53, %s55
      %p59 = scmp.eq.s32.totalorder %s19, 0
      %p60 = por %p58, %p59
      %p61 = scmp.ne.s32.totalorder %s53, %s55
      %p62 = scmp.eq.s32.totalorder %s24, 1
      %p63 = por %p61, %p62
      %p64 = scmp.ne.s32.totalorder %s55, %s56
      %p65 = scmp.eq.s32.totalorder %s24, 0
      %p66 = por %p64, %p65
      %p67 = scmp.ne.s32.totalorder %s55, %s56
      %p68 = scmp.eq.s32.totalorder %s25, 1
      %p69 = por %p67, %p68
      %p71 = scmp.ne.s32.totalorder %s56, %s70
      %p72 = scmp.eq.s32.totalorder %s25, 0
      %p73 = por %p71, %p72
      %s75 = sadd.s32 %s74, 1
      %p78 = scmp.eq.s32.totalorder %s19, 1
      %p79 = scmp.ne.s32.totalorder %s74, %s76
      %p80 = scmp.eq.s32.totalorder %s19, 0
      %p81 = por %p79, %p80
      %p82 = scmp.ne.s32.totalorder %s74, %s76
      %p83 = scmp.eq.s32.totalorder %s24, 1
      %p84 = por %p82, %p83
      %p85 = scmp.ne.s32.totalorder %s76, %s77
      %p86 = scmp.eq.s32.totalorder %s24, 0
      %p87 = por %p85, %p86
      %p88 = scmp.ne.s32.totalorder %s76, %s77
      %p89 = scmp.eq.s32.totalorder %s25, 1
      %p90 = por %p88, %p89
      %p92 = scmp.ne.s32.totalorder %s77, %s91
      %p93 = scmp.eq.s32.totalorder %s25, 0
      %p94 = por %p92, %p93
      %s96 = sadd.s32 %s95, 1
      %p99 = scmp.eq.s32.totalorder %s19, 1
      %p100 = scmp.ne.s32.totalorder %s95, %s97
      %p101 = scmp.eq.s32.totalorder %s19, 0
      %p102 = por %p100, %p101
      %p103 = scmp.ne.s32.totalorder %s95, %s97
      %p104 = scmp.eq.s32.totalorder %s24, 1
      %p105 = por %p103, %p104
      %p106 = scmp.ne.s32.totalorder %s97, %s98
      %p107 = scmp.eq.s32.totalorder %s24, 0
      %p108 = por %p106, %p107
      %p109 = scmp.ne.s32.totalorder %s97, %s98
      %p110 = scmp.eq.s32.totalorder %s25, 1
      %p111 = por %p109, %p110
      %p113 = scmp.ne.s32.totalorder %s98, %s112
      %p114 = scmp.eq.s32.totalorder %s25, 0
      %p115 = por %p113, %p114
      %s117 = sadd.s32 %s116, 1
      %p120 = scmp.eq.s32.totalorder %s19, 1
      %p121 = scmp.ne.s32.totalorder %s116, %s118
      %p122 = scmp.eq.s32.totalorder %s19, 0
      %p123 = por %p121, %p122
      %p124 = scmp.ne.s32.totalorder %s116, %s118
      %p125 = scmp.eq.s32.totalorder %s24, 1
      %p126 = por %p124, %p125
      %p127 = scmp.ne.s32.totalorder %s118, %s119
      %p128 = scmp.eq.s32.totalorder %s24, 0
      %p129 = por %p127, %p128
      %p130 = scmp.ne.s32.totalorder %s118, %s119
      %p131 = scmp.eq.s32.totalorder %s25, 1
      %p132 = por %p130, %p131
      %p134 = scmp.ne.s32.totalorder %s119, %s133
      %p135 = scmp.eq.s32.totalorder %s25, 0
      %p136 = por %p134, %p135
      %s138 = sadd.s32 %s137, 1
      %p141 = scmp.eq.s32.totalorder %s19, 1
      %p142 = scmp.ne.s32.totalorder %s137, %s139
      %p143 = scmp.eq.s32.totalorder %s19, 0
      %p144 = por %p142, %p143
      %p145 = scmp.ne.s32.totalorder %s137, %s139
      %p146 = scmp.eq.s32.totalorder %s24, 1
      %p147 = por %p145, %p146
      %p148 = scmp.ne.s32.totalorder %s139, %s140
      %p149 = scmp.eq.s32.totalorder %s24, 0
      %p150 = por %p148, %p149
      %p151 = scmp.ne.s32.totalorder %s139, %s140
      %p152 = scmp.eq.s32.totalorder %s25, 1
      %p153 = por %p151, %p152
      %p155 = scmp.ne.s32.totalorder %s140, %s154
      %p156 = scmp.eq.s32.totalorder %s25, 0
      %p157 = por %p155, %p156
      %s159 = sadd.s32 %s158, 1
      %p162 = scmp.eq.s32.totalorder %s19, 1
      %p163 = scmp.ne.s32.totalorder %s158, %s160
      %p164 = scmp.eq.s32.totalorder %s19, 0
      %p165 = por %p163, %p164
      %p166 = scmp.ne.s32.totalorder %s158, %s160
      %p167 = scmp.eq.s32.totalorder %s24, 1
      %p168 = por %p166, %p167
      %p169 = scmp.ne.s32.totalorder %s160, %s161
      %p170 = scmp.eq.s32.totalorder %s24, 0
      %p171 = por %p169, %p170
      %p172 = scmp.ne.s32.totalorder %s160, %s161
      %p173 = scmp.eq.s32.totalorder %s25, 1
      %p174 = por %p172, %p173
      %p176 = scmp.ne.s32.totalorder %s161, %s175
      %p177 = scmp.eq.s32.totalorder %s25, 0
      %p178 = por %p176, %p177
      %s179 = ssub.s32 %s19, %s26
      %p180 = scmp.eq.s32.totalorder %s179, 0
      %s182 = sadd.s32 %s181, 1
      %s183 = scalar_select %p180, %s181, %s182
      %p186 = pneg %p180
      %p187 = scmp.eq.s32.totalorder %s19, 1
      %p188 = por %p186, %p187
      %p189 = scmp.ne.s32.totalorder %s181, %s184
      %p190 = scmp.eq.s32.totalorder %s19, 0
      %p191 = por %p189, %p190
      %p192 = scmp.ne.s32.totalorder %s181, %s184
      %p193 = scmp.eq.s32.totalorder %s24, 1
      %p194 = por %p192, %p193
      %p195 = scmp.ne.s32.totalorder %s184, %s185
      %p196 = scmp.eq.s32.totalorder %s24, 0
      %p197 = por %p195, %p196
      %p198 = scmp.ne.s32.totalorder %s184, %s185
      %p199 = scmp.eq.s32.totalorder %s25, 1
      %p200 = por %p198, %p199
      %p202 = scmp.ne.s32.totalorder %s185, %s201
      %p203 = scmp.eq.s32.totalorder %s25, 0
      %p204 = por %p202, %p203
      %p205 = scmp.le.s32.totalorder 1, %s19
      %p206 = scmp.lt.s32.totalorder %s19, 3
      %p207 = pnand %p205, %p206
      %p208 = pneg %p207
      // Predicated region
      $region9: #{tpu_custom_call.1} parent=5 // pred_check
        _
      $region10: #{tpu_custom_call.1} parent=5 // pred_check_branch
        %210 = sbr.rel (%p207) target = $region12
      $region11: #{tpu_custom_call.1} parent=5 // pred_region
        %s211 = ssub.s32 %s19, 1
        // Predicated region
        $region13: #{tpu_custom_call.1} parent=11 // pred_check
          %p212 = pneg %p66
        $region14: #{tpu_custom_call.1} parent=11 // pred_check_branch
          %214 = sbr.rel (%p212) target = $region16
        $region15: #{tpu_custom_call.1} parent=11 // pred_region
          _
        $region16: #{tpu_custom_call.1} parent=11 // pred_fallthru
          _
        // Predicated region
        $region17: #{tpu_custom_call.1} parent=11 // pred_check
          %p215 = pneg %p87
        $region18: #{tpu_custom_call.1} parent=11 // pred_check_branch
          %217 = sbr.rel (%p215) target = $region20
        $region19: #{tpu_custom_call.1} parent=11 // pred_region
          _
        $region20: #{tpu_custom_call.1} parent=11 // pred_fallthru
          _
        // Predicated region
        $region21: #{tpu_custom_call.1} parent=11 // pred_check
          %p218 = pneg %p108
        $region22: #{tpu_custom_call.1} parent=11 // pred_check_branch
          %220 = sbr.rel (%p218) target = $region24
        $region23: #{tpu_custom_call.1} parent=11 // pred_region
          _
        $region24: #{tpu_custom_call.1} parent=11 // pred_fallthru
          _
        // Predicated region
        $region25: #{tpu_custom_call.1} parent=11 // pred_check
          %p221 = pneg %p129
        $region26: #{tpu_custom_call.1} parent=11 // pred_check_branch
          %223 = sbr.rel (%p221) target = $region28
        $region27: #{tpu_custom_call.1} parent=11 // pred_region
          _
        $region28: #{tpu_custom_call.1} parent=11 // pred_fallthru
          _
        // Predicated region
        $region29: #{tpu_custom_call.1} parent=11 // pred_check
          %p224 = pneg %p150
        $region30: #{tpu_custom_call.1} parent=11 // pred_check_branch
          %226 = sbr.rel (%p224) target = $region32
        $region31: #{tpu_custom_call.1} parent=11 // pred_region
          _
        $region32: #{tpu_custom_call.1} parent=11 // pred_fallthru
          _
        // Predicated region
        $region33: #{tpu_custom_call.1} parent=11 // pred_check
          %p227 = pneg %p171
        $region34: #{tpu_custom_call.1} parent=11 // pred_check_branch
          %229 = sbr.rel (%p227) target = $region36
        $region35: #{tpu_custom_call.1} parent=11 // pred_region
          _
        $region36: #{tpu_custom_call.1} parent=11 // pred_fallthru
          _
      $region12: #{tpu_custom_call.1} parent=5 // pred_fallthru
        _
      %p230 = scmp.lt.s32.totalorder %s19, 2
      // Predicated region
      $region37: #{tpu_custom_call.1} parent=5 // pred_check
        %p231 = pneg %p230
      $region38: #{tpu_custom_call.1} parent=5 // pred_check_branch
        %233 = sbr.rel (%p231) target = $region40
      $region39: #{tpu_custom_call.1} parent=5 // pred_region
        // Predicated region
        $region41: #{tpu_custom_call.1} parent=39 // pred_check
          %p234 = pneg %p39
        $region42: #{tpu_custom_call.1} parent=39 // pred_check_branch
          %236 = sbr.rel (%p234) target = $region44
        $region43: #{tpu_custom_call.1} parent=39 // pred_region
          %s237 = sand.u32 %s29, 1
          %s238 = scalar_lea.sflag [#allocation4], %s237
          %s239 = sand.u32 %s29, 1
          %s240 = smul.addr %s239, 1024
          %s241 = scalar_lea.vmem [#allocation3], %s240
          %s242 = smul.u32 2, %s19
          %244 = vsyncadd %s238, 0
          %s245 = smul.addr %s242, 64
          %s246 = smul.addr %s245, 8
          %s247 = scalar_lea.hbm %s0, %s246
          %s248 = sshll.u32 %s247, 4
          %s249 = int_to_ptr.hbm [resolvable:$true] %s248
          %s250 = sshll.u32 %s241, 4
          %s251 = int_to_ptr.vmem [resolvable:$true] %s250
          %256 = dma.hbm_to_vmem [thread:$0]  %s249, 16384, %s251, %s238, 256, 256, 16
        $region44: #{tpu_custom_call.1} parent=39 // pred_fallthru
          _
      $region40: #{tpu_custom_call.1} parent=5 // pred_fallthru
        _
      %p257 = scmp.le.s32.totalorder 1, %s19
      %p258 = scmp.lt.s32.totalorder %s19, 3
      %p259 = pnand %p257, %p258
      %p260 = pneg %p259
      // Predicated region
      $region45: #{tpu_custom_call.1} parent=5 // pred_check
        _
      $region46: #{tpu_custom_call.1} parent=5 // pred_check_branch
        %262 = sbr.rel (%p259) target = $region48
      $region47: #{tpu_custom_call.1} parent=5 // pred_region
        %s263 = ssub.s32 %s19, 1
        %s264 = sand.u32 %s32, 1
        %s265 = scalar_lea.sflag [#allocation4], %s264
        %s266 = sand.u32 %s32, 1
        %s267 = smul.addr %s266, 1024
        %s268 = scalar_lea.vmem [#allocation3], %s267
        // Predicated region
        $region49: #{tpu_custom_call.1} parent=47 // pred_check
          %p269 = pneg %p45
        $region50: #{tpu_custom_call.1} parent=47 // pred_check_branch
          %271 = sbr.rel (%p269) target = $region52
        $region51: #{tpu_custom_call.1} parent=47 // pred_region
          %273 = dma.done %s265, 16384
        $region52: #{tpu_custom_call.1} parent=47 // pred_fallthru
          _
        %s274 = sand.u32 %s32, 1
        %s275 = scalar_lea.sflag [#allocation4], %s274
        %s276 = sand.u32 %s32, 1
        %s277 = smul.addr %s276, 1024
        %s278 = scalar_lea.vmem [#allocation3], %s277
        %p279 = pneg %p45
        %p280 = pneg %p42
        %p281 = pneg %p66
        %p282 = pneg %p63
        %p283 = pneg %p87
        %p284 = pneg %p84
        %p285 = pneg %p108
        %p286 = pneg %p105
        %p287 = pneg %p129
        %p288 = pneg %p126
        %p289 = pneg %p150
        %p290 = pneg %p147
        %p291 = pneg %p171
        %p292 = pneg %p168
        %p293 = pneg %p197
        %p294 = pneg %p194
        %s295 = sand.u32 %s184, 1
        %s296 = scalar_lea.sflag [#allocation5], %s295
        %s297 = sand.u32 %s184, 1
        %s298 = smul.addr %s297, 1024
        %s299 = scalar_lea.vmem [#allocation6], %s298
        %s300 = smul.u32 2, %s24
        %s301 = smul.u32 2, %s24
        %v303 = vld [vmem:[%s268] sm:$0xff]
        %v304 = vld [vmem:[%s268 + $0x8] sm:$0xff]
        %v305 = vld [vmem:[%s268 + $0x10] sm:$0xff]
        %v306 = vld [vmem:[%s268 + $0x18] sm:$0xff]
        %v307 = vld [vmem:[%s268 + $0x20] sm:$0xff]
        %v308 = vld [vmem:[%s268 + $0x28] sm:$0xff]
        %v309 = vld [vmem:[%s268 + $0x30] sm:$0xff]
        %v310 = vld [vmem:[%s268 + $0x38] sm:$0xff]
        %v311 = vld [vmem:[%s268 + $0x40] sm:$0xff]
        %v312 = vld [vmem:[%s268 + $0x48] sm:$0xff]
        %v313 = vld [vmem:[%s268 + $0x50] sm:$0xff]
        %v314 = vld [vmem:[%s268 + $0x58] sm:$0xff]
        %v315 = vld [vmem:[%s268 + $0x60] sm:$0xff]
        %v316 = vld [vmem:[%s268 + $0x68] sm:$0xff]
        %v317 = vld [vmem:[%s268 + $0x70] sm:$0xff]
        %v318 = vld [vmem:[%s268 + $0x78] sm:$0xff]
        %v319 = vld [vmem:[%s268 + $0x80] sm:$0xff]
        %v320 = vld [vmem:[%s268 + $0x88] sm:$0xff]
        %v321 = vld [vmem:[%s268 + $0x90] sm:$0xff]
        %v322 = vld [vmem:[%s268 + $0x98] sm:$0xff]
        %v323 = vld [vmem:[%s268 + $0xa0] sm:$0xff]
        %v324 = vld [vmem:[%s268 + $0xa8] sm:$0xff]
        %v325 = vld [vmem:[%s268 + $0xb0] sm:$0xff]
        %v326 = vld [vmem:[%s268 + $0xb8] sm:$0xff]
        %v327 = vld [vmem:[%s268 + $0xc0] sm:$0xff]
        %v328 = vld [vmem:[%s268 + $0xc8] sm:$0xff]
        %v329 = vld [vmem:[%s268 + $0xd0] sm:$0xff]
        %v330 = vld [vmem:[%s268 + $0xd8] sm:$0xff]
        %v331 = vld [vmem:[%s268 + $0xe0] sm:$0xff]
        %v332 = vld [vmem:[%s268 + $0xe8] sm:$0xff]
        %v333 = vld [vmem:[%s268 + $0xf0] sm:$0xff]
        %v334 = vld [vmem:[%s268 + $0xf8] sm:$0xff]
        %v335 = vld [vmem:[%s268 + $0x100] sm:$0xff]
        %v336 = vld [vmem:[%s268 + $0x108] sm:$0xff]
        %v337 = vld [vmem:[%s268 + $0x110] sm:$0xff]
        %v338 = vld [vmem:[%s268 + $0x118] sm:$0xff]
        %v339 = vld [vmem:[%s268 + $0x120] sm:$0xff]
        %v340 = vld [vmem:[%s268 + $0x128] sm:$0xff]
        %v341 = vld [vmem:[%s268 + $0x130] sm:$0xff]
        %v342 = vld [vmem:[%s268 + $0x138] sm:$0xff]
        %v343 = vld [vmem:[%s268 + $0x140] sm:$0xff]
        %v344 = vld [vmem:[%s268 + $0x148] sm:$0xff]
        %v345 = vld [vmem:[%s268 + $0x150] sm:$0xff]
        %v346 = vld [vmem:[%s268 + $0x158] sm:$0xff]
        %v347 = vld [vmem:[%s268 + $0x160] sm:$0xff]
        %v348 = vld [vmem:[%s268 + $0x168] sm:$0xff]
        %v349 = vld [vmem:[%s268 + $0x170] sm:$0xff]
        %v350 = vld [vmem:[%s268 + $0x178] sm:$0xff]
        %v351 = vld [vmem:[%s268 + $0x180] sm:$0xff]
        %v352 = vld [vmem:[%s268 + $0x188] sm:$0xff]
        %v353 = vld [vmem:[%s268 + $0x190] sm:$0xff]
        %v354 = vld [vmem:[%s268 + $0x198] sm:$0xff]
        %v355 = vld [vmem:[%s268 + $0x1a0] sm:$0xff]
        %v356 = vld [vmem:[%s268 + $0x1a8] sm:$0xff]
        %v357 = vld [vmem:[%s268 + $0x1b0] sm:$0xff]
        %v358 = vld [vmem:[%s268 + $0x1b8] sm:$0xff]
        %v359 = vld [vmem:[%s268 + $0x1c0] sm:$0xff]
        %v360 = vld [vmem:[%s268 + $0x1c8] sm:$0xff]
        %v361 = vld [vmem:[%s268 + $0x1d0] sm:$0xff]
        %v362 = vld [vmem:[%s268 + $0x1d8] sm:$0xff]
        %v363 = vld [vmem:[%s268 + $0x1e0] sm:$0xff]
        %v364 = vld [vmem:[%s268 + $0x1e8] sm:$0xff]
        %v365 = vld [vmem:[%s268 + $0x1f0] sm:$0xff]
        %v366 = vld [vmem:[%s268 + $0x1f8] sm:$0xff]
        %v367 = vld [vmem:[%s268 + $0x200] sm:$0xff]
        %v368 = vld [vmem:[%s268 + $0x208] sm:$0xff]
        %v369 = vld [vmem:[%s268 + $0x210] sm:$0xff]
        %v370 = vld [vmem:[%s268 + $0x218] sm:$0xff]
        %v371 = vld [vmem:[%s268 + $0x220] sm:$0xff]
        %v372 = vld [vmem:[%s268 + $0x228] sm:$0xff]
        %v373 = vld [vmem:[%s268 + $0x230] sm:$0xff]
        %v374 = vld [vmem:[%s268 + $0x238] sm:$0xff]
        %v375 = vld [vmem:[%s268 + $0x240] sm:$0xff]
        %v376 = vld [vmem:[%s268 + $0x248] sm:$0xff]
        %v377 = vld [vmem:[%s268 + $0x250] sm:$0xff]
        %v378 = vld [vmem:[%s268 + $0x258] sm:$0xff]
        %v379 = vld [vmem:[%s268 + $0x260] sm:$0xff]
        %v380 = vld [vmem:[%s268 + $0x268] sm:$0xff]
        %v381 = vld [vmem:[%s268 + $0x270] sm:$0xff]
        %v382 = vld [vmem:[%s268 + $0x278] sm:$0xff]
        %v383 = vld [vmem:[%s268 + $0x280] sm:$0xff]
        %v384 = vld [vmem:[%s268 + $0x288] sm:$0xff]
        %v385 = vld [vmem:[%s268 + $0x290] sm:$0xff]
        %v386 = vld [vmem:[%s268 + $0x298] sm:$0xff]
        %v387 = vld [vmem:[%s268 + $0x2a0] sm:$0xff]
        %v388 = vld [vmem:[%s268 + $0x2a8] sm:$0xff]
        %v389 = vld [vmem:[%s268 + $0x2b0] sm:$0xff]
        %v390 = vld [vmem:[%s268 + $0x2b8] sm:$0xff]
        %v391 = vld [vmem:[%s268 + $0x2c0] sm:$0xff]
        %v392 = vld [vmem:[%s268 + $0x2c8] sm:$0xff]
        %v393 = vld [vmem:[%s268 + $0x2d0] sm:$0xff]
        %v394 = vld [vmem:[%s268 + $0x2d8] sm:$0xff]
        %v395 = vld [vmem:[%s268 + $0x2e0] sm:$0xff]
        %v396 = vld [vmem:[%s268 + $0x2e8] sm:$0xff]
        %v397 = vld [vmem:[%s268 + $0x2f0] sm:$0xff]
        %v398 = vld [vmem:[%s268 + $0x2f8] sm:$0xff]
        %v399 = vld [vmem:[%s268 + $0x300] sm:$0xff]
        %v400 = vld [vmem:[%s268 + $0x308] sm:$0xff]
        %v401 = vld [vmem:[%s268 + $0x310] sm:$0xff]
        %v402 = vld [vmem:[%s268 + $0x318] sm:$0xff]
        %v403 = vld [vmem:[%s268 + $0x320] sm:$0xff]
        %v404 = vld [vmem:[%s268 + $0x328] sm:$0xff]
        %v405 = vld [vmem:[%s268 + $0x330] sm:$0xff]
        %v406 = vld [vmem:[%s268 + $0x338] sm:$0xff]
        %v407 = vld [vmem:[%s268 + $0x340] sm:$0xff]
        %v408 = vld [vmem:[%s268 + $0x348] sm:$0xff]
        %v409 = vld [vmem:[%s268 + $0x350] sm:$0xff]
        %v410 = vld [vmem:[%s268 + $0x358] sm:$0xff]
        %v411 = vld [vmem:[%s268 + $0x360] sm:$0xff]
        %v412 = vld [vmem:[%s268 + $0x368] sm:$0xff]
        %v413 = vld [vmem:[%s268 + $0x370] sm:$0xff]
        %v414 = vld [vmem:[%s268 + $0x378] sm:$0xff]
        %v415 = vld [vmem:[%s268 + $0x380] sm:$0xff]
        %v416 = vld [vmem:[%s268 + $0x388] sm:$0xff]
        %v417 = vld [vmem:[%s268 + $0x390] sm:$0xff]
        %v418 = vld [vmem:[%s268 + $0x398] sm:$0xff]
        %v419 = vld [vmem:[%s268 + $0x3a0] sm:$0xff]
        %v420 = vld [vmem:[%s268 + $0x3a8] sm:$0xff]
        %v421 = vld [vmem:[%s268 + $0x3b0] sm:$0xff]
        %v422 = vld [vmem:[%s268 + $0x3b8] sm:$0xff]
        %v423 = vld [vmem:[%s268 + $0x3c0] sm:$0xff]
        %v424 = vld [vmem:[%s268 + $0x3c8] sm:$0xff]
        %v425 = vld [vmem:[%s268 + $0x3d0] sm:$0xff]
        %v426 = vld [vmem:[%s268 + $0x3d8] sm:$0xff]
        %v427 = vld [vmem:[%s268 + $0x3e0] sm:$0xff]
        %v428 = vld [vmem:[%s268 + $0x3e8] sm:$0xff]
        %v429 = vld [vmem:[%s268 + $0x3f0] sm:$0xff]
        %v430 = vld [vmem:[%s268 + $0x3f8] sm:$0xff]
        %v431 = vpack.c.bf16 %v305, %v303
        %v432 = vpack.c.bf16 %v306, %v304
        %v433 = vpack.c.bf16 %v309, %v307
        %v434 = vpack.c.bf16 %v310, %v308
        %v435 = vpack.c.bf16 %v313, %v311
        %v436 = vpack.c.bf16 %v314, %v312
        %v437 = vpack.c.bf16 %v317, %v315
        %v438 = vpack.c.bf16 %v318, %v316
        %v439 = vpack.c.bf16 %v321, %v319
        %v440 = vpack.c.bf16 %v322, %v320
        %v441 = vpack.c.bf16 %v325, %v323
        %v442 = vpack.c.bf16 %v326, %v324
        %v443 = vpack.c.bf16 %v329, %v327
        %v444 = vpack.c.bf16 %v330, %v328
        %v445 = vpack.c.bf16 %v333, %v331
        %v446 = vpack.c.bf16 %v334, %v332
        %v447 = vpack.c.bf16 %v337, %v335
        %v448 = vpack.c.bf16 %v338, %v336
        %v449 = vpack.c.bf16 %v341, %v339
        %v450 = vpack.c.bf16 %v342, %v340
        %v451 = vpack.c.bf16 %v345, %v343
        %v452 = vpack.c.bf16 %v346, %v344
        %v453 = vpack.c.bf16 %v349, %v347
        %v454 = vpack.c.bf16 %v350, %v348
        %v455 = vpack.c.bf16 %v353, %v351
        %v456 = vpack.c.bf16 %v354, %v352
        %v457 = vpack.c.bf16 %v357, %v355
        %v458 = vpack.c.bf16 %v358, %v356
        %v459 = vpack.c.bf16 %v361, %v359
        %v460 = vpack.c.bf16 %v362, %v360
        %v461 = vpack.c.bf16 %v365, %v363
        %v462 = vpack.c.bf16 %v366, %v364
        %v463 = vpack.c.bf16 %v369, %v367
        %v464 = vpack.c.bf16 %v370, %v368
        %v465 = vpack.c.bf16 %v373, %v371
        %v466 = vpack.c.bf16 %v374, %v372
        %v467 = vpack.c.bf16 %v377, %v375
        %v468 = vpack.c.bf16 %v378, %v376
        %v469 = vpack.c.bf16 %v381, %v379
        %v470 = vpack.c.bf16 %v382, %v380
        %v471 = vpack.c.bf16 %v385, %v383
        %v472 = vpack.c.bf16 %v386, %v384
        %v473 = vpack.c.bf16 %v389, %v387
        %v474 = vpack.c.bf16 %v390, %v388
        %v475 = vpack.c.bf16 %v393, %v391
        %v476 = vpack.c.bf16 %v394, %v392
        %v477 = vpack.c.bf16 %v397, %v395
        %v478 = vpack.c.bf16 %v398, %v396
        %v479 = vpack.c.bf16 %v401, %v399
        %v480 = vpack.c.bf16 %v402, %v400
        %v481 = vpack.c.bf16 %v405, %v403
        %v482 = vpack.c.bf16 %v406, %v404
        %v483 = vpack.c.bf16 %v409, %v407
        %v484 = vpack.c.bf16 %v410, %v408
        %v485 = vpack.c.bf16 %v413, %v411
        %v486 = vpack.c.bf16 %v414, %v412
        %v487 = vpack.c.bf16 %v417, %v415
        %v488 = vpack.c.bf16 %v418, %v416
        %v489 = vpack.c.bf16 %v421, %v419
        %v490 = vpack.c.bf16 %v422, %v420
        %v491 = vpack.c.bf16 %v425, %v423
        %v492 = vpack.c.bf16 %v426, %v424
        %v493 = vpack.c.bf16 %v429, %v427
        %v494 = vpack.c.bf16 %v430, %v428
        %v495 = vld [vmem:[%s1] sm:$0xf]
        %v496 = vld [vmem:[%s1 + $0x4] sm:$0xf]
        %v497 = vld [vmem:[%s1 + $0x8] sm:$0xf]
        %v498 = vld [vmem:[%s1 + $0xc] sm:$0xf]
        %v499 = vld [vmem:[%s1 + $0x10] sm:$0xf]
        %v500 = vld [vmem:[%s1 + $0x14] sm:$0xf]
        %v501 = vld [vmem:[%s1 + $0x18] sm:$0xf]
        %v502 = vld [vmem:[%s1 + $0x1c] sm:$0xf]
        %v503 = vld [vmem:[%s1 + $0x20] sm:$0xf]
        %v504 = vld [vmem:[%s1 + $0x24] sm:$0xf]
        %v505 = vld [vmem:[%s1 + $0x28] sm:$0xf]
        %v506 = vld [vmem:[%s1 + $0x2c] sm:$0xf]
        %v507 = vld [vmem:[%s1 + $0x30] sm:$0xf]
        %v508 = vld [vmem:[%s1 + $0x34] sm:$0xf]
        %v509 = vld [vmem:[%s1 + $0x38] sm:$0xf]
        %v510 = vld [vmem:[%s1 + $0x3c] sm:$0xf]
        %v511 = vld [vmem:[%s1 + $0x40] sm:$0xf]
        %v512 = vld [vmem:[%s1 + $0x44] sm:$0xf]
        %v513 = vld [vmem:[%s1 + $0x48] sm:$0xf]
        %v514 = vld [vmem:[%s1 + $0x4c] sm:$0xf]
        %v515 = vld [vmem:[%s1 + $0x50] sm:$0xf]
        %v516 = vld [vmem:[%s1 + $0x54] sm:$0xf]
        %v517 = vld [vmem:[%s1 + $0x58] sm:$0xf]
        %v518 = vld [vmem:[%s1 + $0x5c] sm:$0xf]
        %v519 = vld [vmem:[%s1 + $0x60] sm:$0xf]
        %v520 = vld [vmem:[%s1 + $0x64] sm:$0xf]
        %v521 = vld [vmem:[%s1 + $0x68] sm:$0xf]
        %v522 = vld [vmem:[%s1 + $0x6c] sm:$0xf]
        %v523 = vld [vmem:[%s1 + $0x70] sm:$0xf]
        %v524 = vld [vmem:[%s1 + $0x74] sm:$0xf]
        %v525 = vld [vmem:[%s1 + $0x78] sm:$0xf]
        %v526 = vld [vmem:[%s1 + $0x7c] sm:$0xf]
        %v527 = vld [vmem:[%s2] sm:$0x1]
        %v529 = vperm.slane %v527, 0
        %v563 = vunpack.c.l.b16 %v495
        %v564 = vunpack.c.l.b16 %v496
        %v565 = vunpack.c.l.b16 %v497
        %v566 = vunpack.c.l.b16 %v498
        %v567 = vunpack.c.l.b16 %v499
        %v568 = vunpack.c.l.b16 %v500
        %v569 = vunpack.c.l.b16 %v501
        %v570 = vunpack.c.l.b16 %v502
        %v571 = vunpack.c.l.b16 %v503
        %v572 = vunpack.c.l.b16 %v504
        %v573 = vunpack.c.l.b16 %v505
        %v574 = vunpack.c.l.b16 %v506
        %v575 = vunpack.c.l.b16 %v507
        %v576 = vunpack.c.l.b16 %v508
        %v577 = vunpack.c.l.b16 %v509
        %v578 = vunpack.c.l.b16 %v510
        %v579 = vunpack.c.l.b16 %v511
        %v580 = vunpack.c.l.b16 %v512
        %v581 = vunpack.c.l.b16 %v513
        %v582 = vunpack.c.l.b16 %v514
        %v583 = vunpack.c.l.b16 %v515
        %v584 = vunpack.c.l.b16 %v516
        %v585 = vunpack.c.l.b16 %v517
        %v586 = vunpack.c.l.b16 %v518
        %v587 = vunpack.c.l.b16 %v519
        %v588 = vunpack.c.l.b16 %v520
        %v589 = vunpack.c.l.b16 %v521
        %v590 = vunpack.c.l.b16 %v522
        %v591 = vunpack.c.l.b16 %v523
        %v592 = vunpack.c.l.b16 %v524
        %v593 = vunpack.c.l.b16 %v525
        %v594 = vunpack.c.l.b16 %v526
        %v595 = vpack.c.b16 %v564, %v563
        %v596 = vpack.c.b16 %v566, %v565
        %v597 = vpack.c.b16 %v568, %v567
        %v598 = vpack.c.b16 %v570, %v569
        %v599 = vpack.c.b16 %v572, %v571
        %v600 = vpack.c.b16 %v574, %v573
        %v601 = vpack.c.b16 %v576, %v575
        %v602 = vpack.c.b16 %v578, %v577
        %v603 = vpack.c.b16 %v580, %v579
        %v604 = vpack.c.b16 %v582, %v581
        %v605 = vpack.c.b16 %v584, %v583
        %v606 = vpack.c.b16 %v586, %v585
        %v607 = vpack.c.b16 %v588, %v587
        %v608 = vpack.c.b16 %v590, %v589
        %v609 = vpack.c.b16 %v592, %v591
        %v610 = vpack.c.b16 %v594, %v593
        %627 = vmatpush.bf16.msra.mxu0 %v602
        %628 = vmatpush.bf16.msra.mxu0 %v601
        %629 = vmatpush.bf16.msra.mxu0 %v600
        %630 = vmatpush.bf16.msra.mxu0 %v599
        %631 = vmatpush.bf16.msra.mxu0 %v598
        %632 = vmatpush.bf16.msra.mxu0 %v597
        %633 = vmatpush.bf16.msra.mxu0 %v596
        %634 = vmatpush.bf16.msra.mxu0 %v595
        %635 = vmatmul.bf16.gmra.mxu0 %v431
        %v636 = vpop.f32.mrf.mxu0
        %v637 = vadd.f32 %v529, %v636
        %v638 = vpop.f32.mrf.mxu0
        %v639 = vadd.f32 %v529, %v638
        %640 = vmatmul.bf16.gmra.mxu0 %v433
        %v641 = vpop.f32.mrf.mxu0
        %v642 = vadd.f32 %v529, %v641
        %v643 = vpop.f32.mrf.mxu0
        %v644 = vadd.f32 %v529, %v643
        %645 = vmatmul.bf16.gmra.mxu0 %v435
        %v646 = vpop.f32.mrf.mxu0
        %v647 = vadd.f32 %v529, %v646
        %v648 = vpop.f32.mrf.mxu0
        %v649 = vadd.f32 %v529, %v648
        %650 = vmatmul.bf16.gmra.mxu0 %v437
        %v651 = vpop.f32.mrf.mxu0
        %v652 = vadd.f32 %v529, %v651
        %v653 = vpop.f32.mrf.mxu0
        %v654 = vadd.f32 %v529, %v653
        %655 = vmatmul.bf16.gmra.mxu0 %v439
        %v656 = vpop.f32.mrf.mxu0
        %v657 = vadd.f32 %v529, %v656
        %v658 = vpop.f32.mrf.mxu0
        %v659 = vadd.f32 %v529, %v658
        %660 = vmatmul.bf16.gmra.mxu0 %v441
        %v661 = vpop.f32.mrf.mxu0
        %v662 = vadd.f32 %v529, %v661
        %v663 = vpop.f32.mrf.mxu0
        %v664 = vadd.f32 %v529, %v663
        %665 = vmatmul.bf16.gmra.mxu0 %v443
        %v666 = vpop.f32.mrf.mxu0
        %v667 = vadd.f32 %v529, %v666
        %v668 = vpop.f32.mrf.mxu0
        %v669 = vadd.f32 %v529, %v668
        %670 = vmatmul.bf16.gmra.mxu0 %v445
        %v671 = vpop.f32.mrf.mxu0
        %v672 = vadd.f32 %v529, %v671
        %v673 = vpop.f32.mrf.mxu0
        %v674 = vadd.f32 %v529, %v673
        %675 = vmatmul.bf16.gmra.mxu0 %v447
        %v676 = vpop.f32.mrf.mxu0
        %v677 = vadd.f32 %v529, %v676
        %v678 = vpop.f32.mrf.mxu0
        %v679 = vadd.f32 %v529, %v678
        %680 = vmatmul.bf16.gmra.mxu0 %v449
        %v681 = vpop.f32.mrf.mxu0
        %v682 = vadd.f32 %v529, %v681
        %v683 = vpop.f32.mrf.mxu0
        %v684 = vadd.f32 %v529, %v683
        %685 = vmatmul.bf16.gmra.mxu0 %v451
        %v686 = vpop.f32.mrf.mxu0
        %v687 = vadd.f32 %v529, %v686
        %v688 = vpop.f32.mrf.mxu0
        %v689 = vadd.f32 %v529, %v688
        %690 = vmatmul.bf16.gmra.mxu0 %v453
        %v691 = vpop.f32.mrf.mxu0
        %v692 = vadd.f32 %v529, %v691
        %v693 = vpop.f32.mrf.mxu0
        %v694 = vadd.f32 %v529, %v693
        %695 = vmatmul.bf16.gmra.mxu0 %v455
        %v696 = vpop.f32.mrf.mxu0
        %v697 = vadd.f32 %v529, %v696
        %v698 = vpop.f32.mrf.mxu0
        %v699 = vadd.f32 %v529, %v698
        %700 = vmatmul.bf16.gmra.mxu0 %v457
        %v701 = vpop.f32.mrf.mxu0
        %v702 = vadd.f32 %v529, %v701
        %v703 = vpop.f32.mrf.mxu0
        %v704 = vadd.f32 %v529, %v703
        %705 = vmatmul.bf16.gmra.mxu0 %v459
        %v706 = vpop.f32.mrf.mxu0
        %v707 = vadd.f32 %v529, %v706
        %v708 = vpop.f32.mrf.mxu0
        %v709 = vadd.f32 %v529, %v708
        %710 = vmatmul.bf16.gmra.mxu0 %v461
        %v711 = vpop.f32.mrf.mxu0
        %v712 = vadd.f32 %v529, %v711
        %v713 = vpop.f32.mrf.mxu0
        %v714 = vadd.f32 %v529, %v713
        %715 = vmatmul.bf16.gmra.mxu0 %v463
        %v716 = vpop.f32.mrf.mxu0
        %v717 = vadd.f32 %v529, %v716
        %v718 = vpop.f32.mrf.mxu0
        %v719 = vadd.f32 %v529, %v718
        %720 = vmatmul.bf16.gmra.mxu0 %v465
        %v721 = vpop.f32.mrf.mxu0
        %v722 = vadd.f32 %v529, %v721
        %v723 = vpop.f32.mrf.mxu0
        %v724 = vadd.f32 %v529, %v723
        %725 = vmatmul.bf16.gmra.mxu0 %v467
        %v726 = vpop.f32.mrf.mxu0
        %v727 = vadd.f32 %v529, %v726
        %v728 = vpop.f32.mrf.mxu0
        %v729 = vadd.f32 %v529, %v728
        %730 = vmatmul.bf16.gmra.mxu0 %v469
        %v731 = vpop.f32.mrf.mxu0
        %v732 = vadd.f32 %v529, %v731
        %v733 = vpop.f32.mrf.mxu0
        %v734 = vadd.f32 %v529, %v733
        %735 = vmatmul.bf16.gmra.mxu0 %v471
        %v736 = vpop.f32.mrf.mxu0
        %v737 = vadd.f32 %v529, %v736
        %v738 = vpop.f32.mrf.mxu0
        %v739 = vadd.f32 %v529, %v738
        %740 = vmatmul.bf16.gmra.mxu0 %v473
        %v741 = vpop.f32.mrf.mxu0
        %v742 = vadd.f32 %v529, %v741
        %v743 = vpop.f32.mrf.mxu0
        %v744 = vadd.f32 %v529, %v743
        %745 = vmatmul.bf16.gmra.mxu0 %v475
        %v746 = vpop.f32.mrf.mxu0
        %v747 = vadd.f32 %v529, %v746
        %v748 = vpop.f32.mrf.mxu0
        %v749 = vadd.f32 %v529, %v748
        %750 = vmatmul.bf16.gmra.mxu0 %v477
        %v751 = vpop.f32.mrf.mxu0
        %v752 = vadd.f32 %v529, %v751
        %v753 = vpop.f32.mrf.mxu0
        %v754 = vadd.f32 %v529, %v753
        %755 = vmatmul.bf16.gmra.mxu0 %v479
        %v756 = vpop.f32.mrf.mxu0
        %v757 = vadd.f32 %v529, %v756
        %v758 = vpop.f32.mrf.mxu0
        %v759 = vadd.f32 %v529, %v758
        %760 = vmatmul.bf16.gmra.mxu0 %v481
        %v761 = vpop.f32.mrf.mxu0
        %v762 = vadd.f32 %v529, %v761
        %v763 = vpop.f32.mrf.mxu0
        %v764 = vadd.f32 %v529, %v763
        %765 = vmatmul.bf16.gmra.mxu0 %v483
        %v766 = vpop.f32.mrf.mxu0
        %v767 = vadd.f32 %v529, %v766
        %v768 = vpop.f32.mrf.mxu0
        %v769 = vadd.f32 %v529, %v768
        %770 = vmatmul.bf16.gmra.mxu0 %v485
        %v771 = vpop.f32.mrf.mxu0
        %v772 = vadd.f32 %v529, %v771
        %v773 = vpop.f32.mrf.mxu0
        %v774 = vadd.f32 %v529, %v773
        %775 = vmatmul.bf16.gmra.mxu0 %v487
        %v776 = vpop.f32.mrf.mxu0
        %v777 = vadd.f32 %v529, %v776
        %v778 = vpop.f32.mrf.mxu0
        %v779 = vadd.f32 %v529, %v778
        %780 = vmatmul.bf16.gmra.mxu0 %v489
        %v781 = vpop.f32.mrf.mxu0
        %v782 = vadd.f32 %v529, %v781
        %v783 = vpop.f32.mrf.mxu0
        %v784 = vadd.f32 %v529, %v783
        %785 = vmatmul.bf16.gmra.mxu0 %v491
        %v786 = vpop.f32.mrf.mxu0
        %v787 = vadd.f32 %v529, %v786
        %v788 = vpop.f32.mrf.mxu0
        %v789 = vadd.f32 %v529, %v788
        %790 = vmatmul.bf16.gmra.mxu0 %v493
        %v791 = vpop.f32.mrf.mxu0
        %v792 = vadd.f32 %v529, %v791
        %v793 = vpop.f32.mrf.mxu0
        %v794 = vadd.f32 %v529, %v793
        %795 = vdwg.mxu0
        %796 = vmatpush.bf16.msra.mxu0 %v610
        %797 = vmatpush.bf16.msra.mxu0 %v609
        %798 = vmatpush.bf16.msra.mxu0 %v608
        %799 = vmatpush.bf16.msra.mxu0 %v607
        %800 = vmatpush.bf16.msra.mxu0 %v606
        %801 = vmatpush.bf16.msra.mxu0 %v605
        %802 = vmatpush.bf16.msra.mxu0 %v604
        %803 = vmatpush.bf16.msra.mxu0 %v603
        %804 = vmatmul.bf16.gmra.mxu0 %v432
        %v805 = vpop.f32.mrf.mxu0
        %v806 = vadd.f32 %v637, %v805
        %v807 = vpop.f32.mrf.mxu0
        %v808 = vadd.f32 %v639, %v807
        %809 = vmatmul.bf16.gmra.mxu0 %v434
        %v810 = vpop.f32.mrf.mxu0
        %v811 = vadd.f32 %v642, %v810
        %v812 = vpop.f32.mrf.mxu0
        %v813 = vadd.f32 %v644, %v812
        %814 = vmatmul.bf16.gmra.mxu0 %v436
        %v815 = vpop.f32.mrf.mxu0
        %v816 = vadd.f32 %v647, %v815
        %v817 = vpop.f32.mrf.mxu0
        %v818 = vadd.f32 %v649, %v817
        %819 = vmatmul.bf16.gmra.mxu0 %v438
        %v820 = vpop.f32.mrf.mxu0
        %v821 = vadd.f32 %v652, %v820
        %v822 = vpop.f32.mrf.mxu0
        %v823 = vadd.f32 %v654, %v822
        %824 = vmatmul.bf16.gmra.mxu0 %v440
        %v825 = vpop.f32.mrf.mxu0
        %v826 = vadd.f32 %v657, %v825
        %v827 = vpop.f32.mrf.mxu0
        %v828 = vadd.f32 %v659, %v827
        %829 = vmatmul.bf16.gmra.mxu0 %v442
        %v830 = vpop.f32.mrf.mxu0
        %v831 = vadd.f32 %v662, %v830
        %v832 = vpop.f32.mrf.mxu0
        %v833 = vadd.f32 %v664, %v832
        %834 = vmatmul.bf16.gmra.mxu0 %v444
        %v835 = vpop.f32.mrf.mxu0
        %v836 = vadd.f32 %v667, %v835
        %v837 = vpop.f32.mrf.mxu0
        %v838 = vadd.f32 %v669, %v837
        %839 = vmatmul.bf16.gmra.mxu0 %v446
        %v840 = vpop.f32.mrf.mxu0
        %v841 = vadd.f32 %v672, %v840
        %v842 = vpop.f32.mrf.mxu0
        %v843 = vadd.f32 %v674, %v842
        %844 = vmatmul.bf16.gmra.mxu0 %v448
        %v845 = vpop.f32.mrf.mxu0
        %v846 = vadd.f32 %v677, %v845
        %v847 = vpop.f32.mrf.mxu0
        %v848 = vadd.f32 %v679, %v847
        %849 = vmatmul.bf16.gmra.mxu0 %v450
        %v850 = vpop.f32.mrf.mxu0
        %v851 = vadd.f32 %v682, %v850
        %v852 = vpop.f32.mrf.mxu0
        %v853 = vadd.f32 %v684, %v852
        %854 = vmatmul.bf16.gmra.mxu0 %v452
        %v855 = vpop.f32.mrf.mxu0
        %v856 = vadd.f32 %v687, %v855
        %v857 = vpop.f32.mrf.mxu0
        %v858 = vadd.f32 %v689, %v857
        %859 = vmatmul.bf16.gmra.mxu0 %v454
        %v860 = vpop.f32.mrf.mxu0
        %v861 = vadd.f32 %v692, %v860
        %v862 = vpop.f32.mrf.mxu0
        %v863 = vadd.f32 %v694, %v862
        %864 = vmatmul.bf16.gmra.mxu0 %v456
        %v865 = vpop.f32.mrf.mxu0
        %v866 = vadd.f32 %v697, %v865
        %v867 = vpop.f32.mrf.mxu0
        %v868 = vadd.f32 %v699, %v867
        %869 = vmatmul.bf16.gmra.mxu0 %v458
        %v870 = vpop.f32.mrf.mxu0
        %v871 = vadd.f32 %v702, %v870
        %v872 = vpop.f32.mrf.mxu0
        %v873 = vadd.f32 %v704, %v872
        %874 = vmatmul.bf16.gmra.mxu0 %v460
        %v875 = vpop.f32.mrf.mxu0
        %v876 = vadd.f32 %v707, %v875
        %v877 = vpop.f32.mrf.mxu0
        %v878 = vadd.f32 %v709, %v877
        %879 = vmatmul.bf16.gmra.mxu0 %v462
        %v880 = vpop.f32.mrf.mxu0
        %v881 = vadd.f32 %v712, %v880
        %v882 = vpop.f32.mrf.mxu0
        %v883 = vadd.f32 %v714, %v882
        %884 = vmatmul.bf16.gmra.mxu0 %v464
        %v885 = vpop.f32.mrf.mxu0
        %v886 = vadd.f32 %v717, %v885
        %v887 = vpop.f32.mrf.mxu0
        %v888 = vadd.f32 %v719, %v887
        %889 = vmatmul.bf16.gmra.mxu0 %v466
        %v890 = vpop.f32.mrf.mxu0
        %v891 = vadd.f32 %v722, %v890
        %v892 = vpop.f32.mrf.mxu0
        %v893 = vadd.f32 %v724, %v892
        %894 = vmatmul.bf16.gmra.mxu0 %v468
        %v895 = vpop.f32.mrf.mxu0
        %v896 = vadd.f32 %v727, %v895
        %v897 = vpop.f32.mrf.mxu0
        %v898 = vadd.f32 %v729, %v897
        %899 = vmatmul.bf16.gmra.mxu0 %v470
        %v900 = vpop.f32.mrf.mxu0
        %v901 = vadd.f32 %v732, %v900
        %v902 = vpop.f32.mrf.mxu0
        %v903 = vadd.f32 %v734, %v902
        %904 = vmatmul.bf16.gmra.mxu0 %v472
        %v905 = vpop.f32.mrf.mxu0
        %v906 = vadd.f32 %v737, %v905
        %v907 = vpop.f32.mrf.mxu0
        %v908 = vadd.f32 %v739, %v907
        %909 = vmatmul.bf16.gmra.mxu0 %v474
        %v910 = vpop.f32.mrf.mxu0
        %v911 = vadd.f32 %v742, %v910
        %v912 = vpop.f32.mrf.mxu0
        %v913 = vadd.f32 %v744, %v912
        %914 = vmatmul.bf16.gmra.mxu0 %v476
        %v915 = vpop.f32.mrf.mxu0
        %v916 = vadd.f32 %v747, %v915
        %v917 = vpop.f32.mrf.mxu0
        %v918 = vadd.f32 %v749, %v917
        %919 = vmatmul.bf16.gmra.mxu0 %v478
        %v920 = vpop.f32.mrf.mxu0
        %v921 = vadd.f32 %v752, %v920
        %v922 = vpop.f32.mrf.mxu0
        %v923 = vadd.f32 %v754, %v922
        %924 = vmatmul.bf16.gmra.mxu0 %v480
        %v925 = vpop.f32.mrf.mxu0
        %v926 = vadd.f32 %v757, %v925
        %v927 = vpop.f32.mrf.mxu0
        %v928 = vadd.f32 %v759, %v927
        %929 = vmatmul.bf16.gmra.mxu0 %v482
        %v930 = vpop.f32.mrf.mxu0
        %v931 = vadd.f32 %v762, %v930
        %v932 = vpop.f32.mrf.mxu0
        %v933 = vadd.f32 %v764, %v932
        %934 = vmatmul.bf16.gmra.mxu0 %v484
        %v935 = vpop.f32.mrf.mxu0
        %v936 = vadd.f32 %v767, %v935
        %v937 = vpop.f32.mrf.mxu0
        %v938 = vadd.f32 %v769, %v937
        %939 = vmatmul.bf16.gmra.mxu0 %v486
        %v940 = vpop.f32.mrf.mxu0
        %v941 = vadd.f32 %v772, %v940
        %v942 = vpop.f32.mrf.mxu0
        %v943 = vadd.f32 %v774, %v942
        %944 = vmatmul.bf16.gmra.mxu0 %v488
        %v945 = vpop.f32.mrf.mxu0
        %v946 = vadd.f32 %v777, %v945
        %v947 = vpop.f32.mrf.mxu0
        %v948 = vadd.f32 %v779, %v947
        %949 = vmatmul.bf16.gmra.mxu0 %v490
        %v950 = vpop.f32.mrf.mxu0
        %v951 = vadd.f32 %v782, %v950
        %v952 = vpop.f32.mrf.mxu0
        %v953 = vadd.f32 %v784, %v952
        %954 = vmatmul.bf16.gmra.mxu0 %v492
        %v955 = vpop.f32.mrf.mxu0
        %v956 = vadd.f32 %v787, %v955
        %v957 = vpop.f32.mrf.mxu0
        %v958 = vadd.f32 %v789, %v957
        %959 = vmatmul.bf16.gmra.mxu0 %v494
        %v960 = vpop.f32.mrf.mxu0
        %v961 = vadd.f32 %v792, %v960
        %v962 = vpop.f32.mrf.mxu0
        %v963 = vadd.f32 %v794, %v962
        %964 = vdwg.mxu0
        %v965 = vmax.f32 %v806, 0.0
        %v966 = vmax.f32 %v808, 0.0
        %v967 = vmax.f32 %v811, 0.0
        %v968 = vmax.f32 %v813, 0.0
        %v969 = vmax.f32 %v816, 0.0
        %v970 = vmax.f32 %v818, 0.0
        %v971 = vmax.f32 %v821, 0.0
        %v972 = vmax.f32 %v823, 0.0
        %v973 = vmax.f32 %v826, 0.0
        %v974 = vmax.f32 %v828, 0.0
        %v975 = vmax.f32 %v831, 0.0
        %v976 = vmax.f32 %v833, 0.0
        %v977 = vmax.f32 %v836, 0.0
        %v978 = vmax.f32 %v838, 0.0
        %v979 = vmax.f32 %v841, 0.0
        %v980 = vmax.f32 %v843, 0.0
        %v981 = vmax.f32 %v846, 0.0
        %v982 = vmax.f32 %v848, 0.0
        %v983 = vmax.f32 %v851, 0.0
        %v984 = vmax.f32 %v853, 0.0
        %v985 = vmax.f32 %v856, 0.0
        %v986 = vmax.f32 %v858, 0.0
        %v987 = vmax.f32 %v861, 0.0
        %v988 = vmax.f32 %v863, 0.0
        %v989 = vmax.f32 %v866, 0.0
        %v990 = vmax.f32 %v868, 0.0
        %v991 = vmax.f32 %v871, 0.0
        %v992 = vmax.f32 %v873, 0.0
        %v993 = vmax.f32 %v876, 0.0
        %v994 = vmax.f32 %v878, 0.0
        %v995 = vmax.f32 %v881, 0.0
        %v996 = vmax.f32 %v883, 0.0
        %v997 = vmax.f32 %v886, 0.0
        %v998 = vmax.f32 %v888, 0.0
        %v999 = vmax.f32 %v891, 0.0
        %v1000 = vmax.f32 %v893, 0.0
        %v1001 = vmax.f32 %v896, 0.0
        %v1002 = vmax.f32 %v898, 0.0
        %v1003 = vmax.f32 %v901, 0.0
        %v1004 = vmax.f32 %v903, 0.0
        %v1005 = vmax.f32 %v906, 0.0
        %v1006 = vmax.f32 %v908, 0.0
        %v1007 = vmax.f32 %v911, 0.0
        %v1008 = vmax.f32 %v913, 0.0
        %v1009 = vmax.f32 %v916, 0.0
        %v1010 = vmax.f32 %v918, 0.0
        %v1011 = vmax.f32 %v921, 0.0
        %v1012 = vmax.f32 %v923, 0.0
        %v1013 = vmax.f32 %v926, 0.0
        %v1014 = vmax.f32 %v928, 0.0
        %v1015 = vmax.f32 %v931, 0.0
        %v1016 = vmax.f32 %v933, 0.0
        %v1017 = vmax.f32 %v936, 0.0
        %v1018 = vmax.f32 %v938, 0.0
        %v1019 = vmax.f32 %v941, 0.0
        %v1020 = vmax.f32 %v943, 0.0
        %v1021 = vmax.f32 %v946, 0.0
        %v1022 = vmax.f32 %v948, 0.0
        %v1023 = vmax.f32 %v951, 0.0
        %v1024 = vmax.f32 %v953, 0.0
        %v1025 = vmax.f32 %v956, 0.0
        %v1026 = vmax.f32 %v958, 0.0
        %v1027 = vmax.f32 %v961, 0.0
        %v1028 = vmax.f32 %v963, 0.0
        %v1029 = vpack.c.bf16 %v965, %v965
        %v1030 = vpack.c.bf16 %v966, %v966
        %v1031 = vpack.c.bf16 %v967, %v967
        %v1032 = vpack.c.bf16 %v968, %v968
        %v1033 = vpack.c.bf16 %v969, %v969
        %v1034 = vpack.c.bf16 %v970, %v970
        %v1035 = vpack.c.bf16 %v971, %v971
        %v1036 = vpack.c.bf16 %v972, %v972
        %v1037 = vpack.c.bf16 %v973, %v973
        %v1038 = vpack.c.bf16 %v974, %v974
        %v1039 = vpack.c.bf16 %v975, %v975
        %v1040 = vpack.c.bf16 %v976, %v976
        %v1041 = vpack.c.bf16 %v977, %v977
        %v1042 = vpack.c.bf16 %v978, %v978
        %v1043 = vpack.c.bf16 %v979, %v979
        %v1044 = vpack.c.bf16 %v980, %v980
        %v1045 = vpack.c.bf16 %v981, %v981
        %v1046 = vpack.c.bf16 %v982, %v982
        %v1047 = vpack.c.bf16 %v983, %v983
        %v1048 = vpack.c.bf16 %v984, %v984
        %v1049 = vpack.c.bf16 %v985, %v985
        %v1050 = vpack.c.bf16 %v986, %v986
        %v1051 = vpack.c.bf16 %v987, %v987
        %v1052 = vpack.c.bf16 %v988, %v988
        %v1053 = vpack.c.bf16 %v989, %v989
        %v1054 = vpack.c.bf16 %v990, %v990
        %v1055 = vpack.c.bf16 %v991, %v991
        %v1056 = vpack.c.bf16 %v992, %v992
        %v1057 = vpack.c.bf16 %v993, %v993
        %v1058 = vpack.c.bf16 %v994, %v994
        %v1059 = vpack.c.bf16 %v995, %v995
        %v1060 = vpack.c.bf16 %v996, %v996
        %v1061 = vpack.c.bf16 %v997, %v997
        %v1062 = vpack.c.bf16 %v998, %v998
        %v1063 = vpack.c.bf16 %v999, %v999
        %v1064 = vpack.c.bf16 %v1000, %v1000
        %v1065 = vpack.c.bf16 %v1001, %v1001
        %v1066 = vpack.c.bf16 %v1002, %v1002
        %v1067 = vpack.c.bf16 %v1003, %v1003
        %v1068 = vpack.c.bf16 %v1004, %v1004
        %v1069 = vpack.c.bf16 %v1005, %v1005
        %v1070 = vpack.c.bf16 %v1006, %v1006
        %v1071 = vpack.c.bf16 %v1007, %v1007
        %v1072 = vpack.c.bf16 %v1008, %v1008
        %v1073 = vpack.c.bf16 %v1009, %v1009
        %v1074 = vpack.c.bf16 %v1010, %v1010
        %v1075 = vpack.c.bf16 %v1011, %v1011
        %v1076 = vpack.c.bf16 %v1012, %v1012
        %v1077 = vpack.c.bf16 %v1013, %v1013
        %v1078 = vpack.c.bf16 %v1014, %v1014
        %v1079 = vpack.c.bf16 %v1015, %v1015
        %v1080 = vpack.c.bf16 %v1016, %v1016
        %v1081 = vpack.c.bf16 %v1017, %v1017
        %v1082 = vpack.c.bf16 %v1018, %v1018
        %v1083 = vpack.c.bf16 %v1019, %v1019
        %v1084 = vpack.c.bf16 %v1020, %v1020
        %v1085 = vpack.c.bf16 %v1021, %v1021
        %v1086 = vpack.c.bf16 %v1022, %v1022
        %v1087 = vpack.c.bf16 %v1023, %v1023
        %v1088 = vpack.c.bf16 %v1024, %v1024
        %v1089 = vpack.c.bf16 %v1025, %v1025
        %v1090 = vpack.c.bf16 %v1026, %v1026
        %v1091 = vpack.c.bf16 %v1027, %v1027
        %v1092 = vpack.c.bf16 %v1028, %v1028
        %v1157 = vunpack.c.l.b16 %v1029
        %v1158 = vunpack.c.l.b16 %v1030
        %v1159 = vunpack.c.l.b16 %v1031
        %v1160 = vunpack.c.l.b16 %v1032
        %v1161 = vunpack.c.l.b16 %v1033
        %v1162 = vunpack.c.l.b16 %v1034
        %v1163 = vunpack.c.l.b16 %v1035
        %v1164 = vunpack.c.l.b16 %v1036
        %v1165 = vunpack.c.l.b16 %v1037
        %v1166 = vunpack.c.l.b16 %v1038
        %v1167 = vunpack.c.l.b16 %v1039
        %v1168 = vunpack.c.l.b16 %v1040
        %v1169 = vunpack.c.l.b16 %v1041
        %v1170 = vunpack.c.l.b16 %v1042
        %v1171 = vunpack.c.l.b16 %v1043
        %v1172 = vunpack.c.l.b16 %v1044
        %v1173 = vunpack.c.l.b16 %v1045
        %v1174 = vunpack.c.l.b16 %v1046
        %v1175 = vunpack.c.l.b16 %v1047
        %v1176 = vunpack.c.l.b16 %v1048
        %v1177 = vunpack.c.l.b16 %v1049
        %v1178 = vunpack.c.l.b16 %v1050
        %v1179 = vunpack.c.l.b16 %v1051
        %v1180 = vunpack.c.l.b16 %v1052
        %v1181 = vunpack.c.l.b16 %v1053
        %v1182 = vunpack.c.l.b16 %v1054
        %v1183 = vunpack.c.l.b16 %v1055
        %v1184 = vunpack.c.l.b16 %v1056
        %v1185 = vunpack.c.l.b16 %v1057
        %v1186 = vunpack.c.l.b16 %v1058
        %v1187 = vunpack.c.l.b16 %v1059
        %v1188 = vunpack.c.l.b16 %v1060
        %v1189 = vunpack.c.l.b16 %v1061
        %v1190 = vunpack.c.l.b16 %v1062
        %v1191 = vunpack.c.l.b16 %v1063
        %v1192 = vunpack.c.l.b16 %v1064
        %v1193 = vunpack.c.l.b16 %v1065
        %v1194 = vunpack.c.l.b16 %v1066
        %v1195 = vunpack.c.l.b16 %v1067
        %v1196 = vunpack.c.l.b16 %v1068
        %v1197 = vunpack.c.l.b16 %v1069
        %v1198 = vunpack.c.l.b16 %v1070
        %v1199 = vunpack.c.l.b16 %v1071
        %v1200 = vunpack.c.l.b16 %v1072
        %v1201 = vunpack.c.l.b16 %v1073
        %v1202 = vunpack.c.l.b16 %v1074
        %v1203 = vunpack.c.l.b16 %v1075
        %v1204 = vunpack.c.l.b16 %v1076
        %v1205 = vunpack.c.l.b16 %v1077
        %v1206 = vunpack.c.l.b16 %v1078
        %v1207 = vunpack.c.l.b16 %v1079
        %v1208 = vunpack.c.l.b16 %v1080
        %v1209 = vunpack.c.l.b16 %v1081
        %v1210 = vunpack.c.l.b16 %v1082
        %v1211 = vunpack.c.l.b16 %v1083
        %v1212 = vunpack.c.l.b16 %v1084
        %v1213 = vunpack.c.l.b16 %v1085
        %v1214 = vunpack.c.l.b16 %v1086
        %v1215 = vunpack.c.l.b16 %v1087
        %v1216 = vunpack.c.l.b16 %v1088
        %v1217 = vunpack.c.l.b16 %v1089
        %v1218 = vunpack.c.l.b16 %v1090
        %v1219 = vunpack.c.l.b16 %v1091
        %v1220 = vunpack.c.l.b16 %v1092
        %v1221 = vpack.c.b16 %v1158, %v1157
        %v1222 = vpack.c.b16 %v1160, %v1159
        %v1223 = vpack.c.b16 %v1162, %v1161
        %v1224 = vpack.c.b16 %v1164, %v1163
        %v1225 = vpack.c.b16 %v1166, %v1165
        %v1226 = vpack.c.b16 %v1168, %v1167
        %v1227 = vpack.c.b16 %v1170, %v1169
        %v1228 = vpack.c.b16 %v1172, %v1171
        %v1229 = vpack.c.b16 %v1174, %v1173
        %v1230 = vpack.c.b16 %v1176, %v1175
        %v1231 = vpack.c.b16 %v1178, %v1177
        %v1232 = vpack.c.b16 %v1180, %v1179
        %v1233 = vpack.c.b16 %v1182, %v1181
        %v1234 = vpack.c.b16 %v1184, %v1183
        %v1235 = vpack.c.b16 %v1186, %v1185
        %v1236 = vpack.c.b16 %v1188, %v1187
        %v1237 = vpack.c.b16 %v1190, %v1189
        %v1238 = vpack.c.b16 %v1192, %v1191
        %v1239 = vpack.c.b16 %v1194, %v1193
        %v1240 = vpack.c.b16 %v1196, %v1195
        %v1241 = vpack.c.b16 %v1198, %v1197
        %v1242 = vpack.c.b16 %v1200, %v1199
        %v1243 = vpack.c.b16 %v1202, %v1201
        %v1244 = vpack.c.b16 %v1204, %v1203
        %v1245 = vpack.c.b16 %v1206, %v1205
        %v1246 = vpack.c.b16 %v1208, %v1207
        %v1247 = vpack.c.b16 %v1210, %v1209
        %v1248 = vpack.c.b16 %v1212, %v1211
        %v1249 = vpack.c.b16 %v1214, %v1213
        %v1250 = vpack.c.b16 %v1216, %v1215
        %v1251 = vpack.c.b16 %v1218, %v1217
        %v1252 = vpack.c.b16 %v1220, %v1219
        %v1254 = vshrl.u32 %v1221, 16
        %v1256 = vrot.slane %v1254, 7
        %v1257 = vshll.u32 %v1221, 16
        %v1259 = vor.u32 %v1256, %v1257
        %v1261 = vshrl.u32 %v1222, 16
        %v1263 = vrot.slane %v1261, 7
        %v1264 = vshll.u32 %v1222, 16
        %v1266 = vor.u32 %v1263, %v1264
        %v1268 = vshrl.u32 %v1223, 16
        %v1270 = vrot.slane %v1268, 7
        %v1271 = vshll.u32 %v1223, 16
        %v1273 = vor.u32 %v1270, %v1271
        %v1275 = vshrl.u32 %v1224, 16
        %v1277 = vrot.slane %v1275, 7
        %v1278 = vshll.u32 %v1224, 16
        %v1280 = vor.u32 %v1277, %v1278
        %v1282 = vshrl.u32 %v1225, 16
        %v1284 = vrot.slane %v1282, 7
        %v1285 = vshll.u32 %v1225, 16
        %v1287 = vor.u32 %v1284, %v1285
        %v1289 = vshrl.u32 %v1226, 16
        %v1291 = vrot.slane %v1289, 7
        %v1292 = vshll.u32 %v1226, 16
        %v1294 = vor.u32 %v1291, %v1292
        %v1296 = vshrl.u32 %v1227, 16
        %v1298 = vrot.slane %v1296, 7
        %v1299 = vshll.u32 %v1227, 16
        %v1301 = vor.u32 %v1298, %v1299
        %v1303 = vshrl.u32 %v1228, 16
        %v1305 = vrot.slane %v1303, 7
        %v1306 = vshll.u32 %v1228, 16
        %v1308 = vor.u32 %v1305, %v1306
        %v1310 = vshrl.u32 %v1229, 16
        %v1312 = vrot.slane %v1310, 7
        %v1313 = vshll.u32 %v1229, 16
        %v1315 = vor.u32 %v1312, %v1313
        %v1317 = vshrl.u32 %v1230, 16
        %v1319 = vrot.slane %v1317, 7
        %v1320 = vshll.u32 %v1230, 16
        %v1322 = vor.u32 %v1319, %v1320
        %v1324 = vshrl.u32 %v1231, 16
        %v1326 = vrot.slane %v1324, 7
        %v1327 = vshll.u32 %v1231, 16
        %v1329 = vor.u32 %v1326, %v1327
        %v1331 = vshrl.u32 %v1232, 16
        %v1333 = vrot.slane %v1331, 7
        %v1334 = vshll.u32 %v1232, 16
        %v1336 = vor.u32 %v1333, %v1334
        %v1338 = vshrl.u32 %v1233, 16
        %v1340 = vrot.slane %v1338, 7
        %v1341 = vshll.u32 %v1233, 16
        %v1343 = vor.u32 %v1340, %v1341
        %v1345 = vshrl.u32 %v1234, 16
        %v1347 = vrot.slane %v1345, 7
        %v1348 = vshll.u32 %v1234, 16
        %v1350 = vor.u32 %v1347, %v1348
        %v1352 = vshrl.u32 %v1235, 16
        %v1354 = vrot.slane %v1352, 7
        %v1355 = vshll.u32 %v1235, 16
        %v1357 = vor.u32 %v1354, %v1355
        %v1359 = vshrl.u32 %v1236, 16
        %v1361 = vrot.slane %v1359, 7
        %v1362 = vshll.u32 %v1236, 16
        %v1364 = vor.u32 %v1361, %v1362
        %v1366 = vshrl.u32 %v1237, 16
        %v1368 = vrot.slane %v1366, 7
        %v1369 = vshll.u32 %v1237, 16
        %v1371 = vor.u32 %v1368, %v1369
        %v1373 = vshrl.u32 %v1238, 16
        %v1375 = vrot.slane %v1373, 7
        %v1376 = vshll.u32 %v1238, 16
        %v1378 = vor.u32 %v1375, %v1376
        %v1380 = vshrl.u32 %v1239, 16
        %v1382 = vrot.slane %v1380, 7
        %v1383 = vshll.u32 %v1239, 16
        %v1385 = vor.u32 %v1382, %v1383
        %v1387 = vshrl.u32 %v1240, 16
        %v1389 = vrot.slane %v1387, 7
        %v1390 = vshll.u32 %v1240, 16
        %v1392 = vor.u32 %v1389, %v1390
        %v1394 = vshrl.u32 %v1241, 16
        %v1396 = vrot.slane %v1394, 7
        %v1397 = vshll.u32 %v1241, 16
        %v1399 = vor.u32 %v1396, %v1397
        %v1401 = vshrl.u32 %v1242, 16
        %v1403 = vrot.slane %v1401, 7
        %v1404 = vshll.u32 %v1242, 16
        %v1406 = vor.u32 %v1403, %v1404
        %v1408 = vshrl.u32 %v1243, 16
        %v1410 = vrot.slane %v1408, 7
        %v1411 = vshll.u32 %v1243, 16
        %v1413 = vor.u32 %v1410, %v1411
        %v1415 = vshrl.u32 %v1244, 16
        %v1417 = vrot.slane %v1415, 7
        %v1418 = vshll.u32 %v1244, 16
        %v1420 = vor.u32 %v1417, %v1418
        %v1422 = vshrl.u32 %v1245, 16
        %v1424 = vrot.slane %v1422, 7
        %v1425 = vshll.u32 %v1245, 16
        %v1427 = vor.u32 %v1424, %v1425
        %v1429 = vshrl.u32 %v1246, 16
        %v1431 = vrot.slane %v1429, 7
        %v1432 = vshll.u32 %v1246, 16
        %v1434 = vor.u32 %v1431, %v1432
        %v1436 = vshrl.u32 %v1247, 16
        %v1438 = vrot.slane %v1436, 7
        %v1439 = vshll.u32 %v1247, 16
        %v1441 = vor.u32 %v1438, %v1439
        %v1443 = vshrl.u32 %v1248, 16
        %v1445 = vrot.slane %v1443, 7
        %v1446 = vshll.u32 %v1248, 16
        %v1448 = vor.u32 %v1445, %v1446
        %v1450 = vshrl.u32 %v1249, 16
        %v1452 = vrot.slane %v1450, 7
        %v1453 = vshll.u32 %v1249, 16
        %v1455 = vor.u32 %v1452, %v1453
        %v1457 = vshrl.u32 %v1250, 16
        %v1459 = vrot.slane %v1457, 7
        %v1460 = vshll.u32 %v1250, 16
        %v1462 = vor.u32 %v1459, %v1460
        %v1464 = vshrl.u32 %v1251, 16
        %v1466 = vrot.slane %v1464, 7
        %v1467 = vshll.u32 %v1251, 16
        %v1469 = vor.u32 %v1466, %v1467
        %v1471 = vshrl.u32 %v1252, 16
        %v1473 = vrot.slane %v1471, 7
        %v1474 = vshll.u32 %v1252, 16
        %v1476 = vor.u32 %v1473, %v1474
        %vm1541 = vcmask 1040384
        %vm1542 = vsmask.f32 256
        %vm1543 = vmand %vm1541, %vm1542
        %v1544 = vsel %vm1543, 0, %v1259
        %v1545 = vsel %vm1543, 0, %v1266
        %v1546 = vsel %vm1543, 0, %v1273
        %v1547 = vsel %vm1543, 0, %v1280
        %v1548 = vsel %vm1543, 0, %v1287
        %v1549 = vsel %vm1543, 0, %v1294
        %v1550 = vsel %vm1543, 0, %v1301
        %v1551 = vsel %vm1543, 0, %v1308
        %v1552 = vsel %vm1543, 0, %v1315
        %v1553 = vsel %vm1543, 0, %v1322
        %v1554 = vsel %vm1543, 0, %v1329
        %v1555 = vsel %vm1543, 0, %v1336
        %v1556 = vsel %vm1543, 0, %v1343
        %v1557 = vsel %vm1543, 0, %v1350
        %v1558 = vsel %vm1543, 0, %v1357
        %v1559 = vsel %vm1543, 0, %v1364
        %v1560 = vsel %vm1543, 0, %v1371
        %v1561 = vsel %vm1543, 0, %v1378
        %v1562 = vsel %vm1543, 0, %v1385
        %v1563 = vsel %vm1543, 0, %v1392
        %v1564 = vsel %vm1543, 0, %v1399
        %v1565 = vsel %vm1543, 0, %v1406
        %v1566 = vsel %vm1543, 0, %v1413
        %v1567 = vsel %vm1543, 0, %v1420
        %v1568 = vsel %vm1543, 0, %v1427
        %v1569 = vsel %vm1543, 0, %v1434
        %v1570 = vsel %vm1543, 0, %v1441
        %v1571 = vsel %vm1543, 0, %v1448
        %v1572 = vsel %vm1543, 0, %v1455
        %v1573 = vsel %vm1543, 0, %v1462
        %v1574 = vsel %vm1543, 0, %v1469
        %v1575 = vsel %vm1543, 0, %v1476
        %v1576 = vsel %vm1543, %v1256, 0
        %v1577 = vsel %vm1543, %v1263, 0
        %v1578 = vsel %vm1543, %v1270, 0
        %v1579 = vsel %vm1543, %v1277, 0
        %v1580 = vsel %vm1543, %v1284, 0
        %v1581 = vsel %vm1543, %v1291, 0
        %v1582 = vsel %vm1543, %v1298, 0
        %v1583 = vsel %vm1543, %v1305, 0
        %v1584 = vsel %vm1543, %v1312, 0
        %v1585 = vsel %vm1543, %v1319, 0
        %v1586 = vsel %vm1543, %v1326, 0
        %v1587 = vsel %vm1543, %v1333, 0
        %v1588 = vsel %vm1543, %v1340, 0
        %v1589 = vsel %vm1543, %v1347, 0
        %v1590 = vsel %vm1543, %v1354, 0
        %v1591 = vsel %vm1543, %v1361, 0
        %v1592 = vsel %vm1543, %v1368, 0
        %v1593 = vsel %vm1543, %v1375, 0
        %v1594 = vsel %vm1543, %v1382, 0
        %v1595 = vsel %vm1543, %v1389, 0
        %v1596 = vsel %vm1543, %v1396, 0
        %v1597 = vsel %vm1543, %v1403, 0
        %v1598 = vsel %vm1543, %v1410, 0
        %v1599 = vsel %vm1543, %v1417, 0
        %v1600 = vsel %vm1543, %v1424, 0
        %v1601 = vsel %vm1543, %v1431, 0
        %v1602 = vsel %vm1543, %v1438, 0
        %v1603 = vsel %vm1543, %v1445, 0
        %v1604 = vsel %vm1543, %v1452, 0
        %v1605 = vsel %vm1543, %v1459, 0
        %v1606 = vsel %vm1543, %v1466, 0
        %v1607 = vsel %vm1543, %v1473, 0
        %v1672 = vunpack.c.l.b16 %v1544
        %v1673 = vunpack.c.h.b16 %v1544
        %v1674 = vunpack.c.l.b16 %v1576
        %v1675 = vunpack.c.l.b16 %v1545
        %v1676 = vunpack.c.h.b16 %v1545
        %v1677 = vunpack.c.l.b16 %v1577
        %v1678 = vunpack.c.l.b16 %v1546
        %v1679 = vunpack.c.h.b16 %v1546
        %v1680 = vunpack.c.l.b16 %v1578
        %v1681 = vunpack.c.l.b16 %v1547
        %v1682 = vunpack.c.h.b16 %v1547
        %v1683 = vunpack.c.l.b16 %v1579
        %v1684 = vunpack.c.l.b16 %v1548
        %v1685 = vunpack.c.h.b16 %v1548
        %v1686 = vunpack.c.l.b16 %v1580
        %v1687 = vunpack.c.l.b16 %v1549
        %v1688 = vunpack.c.h.b16 %v1549
        %v1689 = vunpack.c.l.b16 %v1581
        %v1690 = vunpack.c.l.b16 %v1550
        %v1691 = vunpack.c.h.b16 %v1550
        %v1692 = vunpack.c.l.b16 %v1582
        %v1693 = vunpack.c.l.b16 %v1551
        %v1694 = vunpack.c.h.b16 %v1551
        %v1695 = vunpack.c.l.b16 %v1583
        %v1696 = vunpack.c.l.b16 %v1552
        %v1697 = vunpack.c.h.b16 %v1552
        %v1698 = vunpack.c.l.b16 %v1584
        %v1699 = vunpack.c.l.b16 %v1553
        %v1700 = vunpack.c.h.b16 %v1553
        %v1701 = vunpack.c.l.b16 %v1585
        %v1702 = vunpack.c.l.b16 %v1554
        %v1703 = vunpack.c.h.b16 %v1554
        %v1704 = vunpack.c.l.b16 %v1586
        %v1705 = vunpack.c.l.b16 %v1555
        %v1706 = vunpack.c.h.b16 %v1555
        %v1707 = vunpack.c.l.b16 %v1587
        %v1708 = vunpack.c.l.b16 %v1556
        %v1709 = vunpack.c.h.b16 %v1556
        %v1710 = vunpack.c.l.b16 %v1588
        %v1711 = vunpack.c.l.b16 %v1557
        %v1712 = vunpack.c.h.b16 %v1557
        %v1713 = vunpack.c.l.b16 %v1589
        %v1714 = vunpack.c.l.b16 %v1558
        %v1715 = vunpack.c.h.b16 %v1558
        %v1716 = vunpack.c.l.b16 %v1590
        %v1717 = vunpack.c.l.b16 %v1559
        %v1718 = vunpack.c.h.b16 %v1559
        %v1719 = vunpack.c.l.b16 %v1591
        %v1720 = vunpack.c.l.b16 %v1560
        %v1721 = vunpack.c.h.b16 %v1560
        %v1722 = vunpack.c.l.b16 %v1592
        %v1723 = vunpack.c.l.b16 %v1561
        %v1724 = vunpack.c.h.b16 %v1561
        %v1725 = vunpack.c.l.b16 %v1593
        %v1726 = vunpack.c.l.b16 %v1562
        %v1727 = vunpack.c.h.b16 %v1562
        %v1728 = vunpack.c.l.b16 %v1594
        %v1729 = vunpack.c.l.b16 %v1563
        %v1730 = vunpack.c.h.b16 %v1563
        %v1731 = vunpack.c.l.b16 %v1595
        %v1732 = vunpack.c.l.b16 %v1564
        %v1733 = vunpack.c.h.b16 %v1564
        %v1734 = vunpack.c.l.b16 %v1596
        %v1735 = vunpack.c.l.b16 %v1565
        %v1736 = vunpack.c.h.b16 %v1565
        %v1737 = vunpack.c.l.b16 %v1597
        %v1738 = vunpack.c.l.b16 %v1566
        %v1739 = vunpack.c.h.b16 %v1566
        %v1740 = vunpack.c.l.b16 %v1598
        %v1741 = vunpack.c.l.b16 %v1567
        %v1742 = vunpack.c.h.b16 %v1567
        %v1743 = vunpack.c.l.b16 %v1599
        %v1744 = vunpack.c.l.b16 %v1568
        %v1745 = vunpack.c.h.b16 %v1568
        %v1746 = vunpack.c.l.b16 %v1600
        %v1747 = vunpack.c.l.b16 %v1569
        %v1748 = vunpack.c.h.b16 %v1569
        %v1749 = vunpack.c.l.b16 %v1601
        %v1750 = vunpack.c.l.b16 %v1570
        %v1751 = vunpack.c.h.b16 %v1570
        %v1752 = vunpack.c.l.b16 %v1602
        %v1753 = vunpack.c.l.b16 %v1571
        %v1754 = vunpack.c.h.b16 %v1571
        %v1755 = vunpack.c.l.b16 %v1603
        %v1756 = vunpack.c.l.b16 %v1572
        %v1757 = vunpack.c.h.b16 %v1572
        %v1758 = vunpack.c.l.b16 %v1604
        %v1759 = vunpack.c.l.b16 %v1573
        %v1760 = vunpack.c.h.b16 %v1573
        %v1761 = vunpack.c.l.b16 %v1605
        %v1762 = vunpack.c.l.b16 %v1574
        %v1763 = vunpack.c.h.b16 %v1574
        %v1764 = vunpack.c.l.b16 %v1606
        %v1765 = vunpack.c.l.b16 %v1575
        %v1766 = vunpack.c.h.b16 %v1575
        %v1767 = vunpack.c.l.b16 %v1607
        %v1768 = vpack.c.b16 %v1672, %v1672
        %v1769 = vpack.c.b16 %v1673, %v1673
        %v1770 = vpack.c.b16 %v1674, %v1674
        %v1771 = vpack.c.b16 %v1675, %v1675
        %v1772 = vpack.c.b16 %v1676, %v1676
        %v1773 = vpack.c.b16 %v1677, %v1677
        %v1774 = vpack.c.b16 %v1678, %v1678
        %v1775 = vpack.c.b16 %v1679, %v1679
        %v1776 = vpack.c.b16 %v1680, %v1680
        %v1777 = vpack.c.b16 %v1681, %v1681
        %v1778 = vpack.c.b16 %v1682, %v1682
        %v1779 = vpack.c.b16 %v1683, %v1683
        %v1780 = vpack.c.b16 %v1684, %v1684
        %v1781 = vpack.c.b16 %v1685, %v1685
        %v1782 = vpack.c.b16 %v1686, %v1686
        %v1783 = vpack.c.b16 %v1687, %v1687
        %v1784 = vpack.c.b16 %v1688, %v1688
        %v1785 = vpack.c.b16 %v1689, %v1689
        %v1786 = vpack.c.b16 %v1690, %v1690
        %v1787 = vpack.c.b16 %v1691, %v1691
        %v1788 = vpack.c.b16 %v1692, %v1692
        %v1789 = vpack.c.b16 %v1693, %v1693
        %v1790 = vpack.c.b16 %v1694, %v1694
        %v1791 = vpack.c.b16 %v1695, %v1695
        %v1792 = vpack.c.b16 %v1696, %v1696
        %v1793 = vpack.c.b16 %v1697, %v1697
        %v1794 = vpack.c.b16 %v1698, %v1698
        %v1795 = vpack.c.b16 %v1699, %v1699
        %v1796 = vpack.c.b16 %v1700, %v1700
        %v1797 = vpack.c.b16 %v1701, %v1701
        %v1798 = vpack.c.b16 %v1702, %v1702
        %v1799 = vpack.c.b16 %v1703, %v1703
        %v1800 = vpack.c.b16 %v1704, %v1704
        %v1801 = vpack.c.b16 %v1705, %v1705
        %v1802 = vpack.c.b16 %v1706, %v1706
        %v1803 = vpack.c.b16 %v1707, %v1707
        %v1804 = vpack.c.b16 %v1708, %v1708
        %v1805 = vpack.c.b16 %v1709, %v1709
        %v1806 = vpack.c.b16 %v1710, %v1710
        %v1807 = vpack.c.b16 %v1711, %v1711
        %v1808 = vpack.c.b16 %v1712, %v1712
        %v1809 = vpack.c.b16 %v1713, %v1713
        %v1810 = vpack.c.b16 %v1714, %v1714
        %v1811 = vpack.c.b16 %v1715, %v1715
        %v1812 = vpack.c.b16 %v1716, %v1716
        %v1813 = vpack.c.b16 %v1717, %v1717
        %v1814 = vpack.c.b16 %v1718, %v1718
        %v1815 = vpack.c.b16 %v1719, %v1719
        %v1816 = vpack.c.b16 %v1720, %v1720
        %v1817 = vpack.c.b16 %v1721, %v1721
        %v1818 = vpack.c.b16 %v1722, %v1722
        %v1819 = vpack.c.b16 %v1723, %v1723
        %v1820 = vpack.c.b16 %v1724, %v1724
        %v1821 = vpack.c.b16 %v1725, %v1725
        %v1822 = vpack.c.b16 %v1726, %v1726
        %v1823 = vpack.c.b16 %v1727, %v1727
        %v1824 = vpack.c.b16 %v1728, %v1728
        %v1825 = vpack.c.b16 %v1729, %v1729
        %v1826 = vpack.c.b16 %v1730, %v1730
        %v1827 = vpack.c.b16 %v1731, %v1731
        %v1828 = vpack.c.b16 %v1732, %v1732
        %v1829 = vpack.c.b16 %v1733, %v1733
        %v1830 = vpack.c.b16 %v1734, %v1734
        %v1831 = vpack.c.b16 %v1735, %v1735
        %v1832 = vpack.c.b16 %v1736, %v1736
        %v1833 = vpack.c.b16 %v1737, %v1737
        %v1834 = vpack.c.b16 %v1738, %v1738
        %v1835 = vpack.c.b16 %v1739, %v1739
        %v1836 = vpack.c.b16 %v1740, %v1740
        %v1837 = vpack.c.b16 %v1741, %v1741
        %v1838 = vpack.c.b16 %v1742, %v1742
        %v1839 = vpack.c.b16 %v1743, %v1743
        %v1840 = vpack.c.b16 %v1744, %v1744
        %v1841 = vpack.c.b16 %v1745, %v1745
        %v1842 = vpack.c.b16 %v1746, %v1746
        %v1843 = vpack.c.b16 %v1747, %v1747
        %v1844 = vpack.c.b16 %v1748, %v1748
        %v1845 = vpack.c.b16 %v1749, %v1749
        %v1846 = vpack.c.b16 %v1750, %v1750
        %v1847 = vpack.c.b16 %v1751, %v1751
        %v1848 = vpack.c.b16 %v1752, %v1752
        %v1849 = vpack.c.b16 %v1753, %v1753
        %v1850 = vpack.c.b16 %v1754, %v1754
        %v1851 = vpack.c.b16 %v1755, %v1755
        %v1852 = vpack.c.b16 %v1756, %v1756
        %v1853 = vpack.c.b16 %v1757, %v1757
        %v1854 = vpack.c.b16 %v1758, %v1758
        %v1855 = vpack.c.b16 %v1759, %v1759
        %v1856 = vpack.c.b16 %v1760, %v1760
        %v1857 = vpack.c.b16 %v1761, %v1761
        %v1858 = vpack.c.b16 %v1762, %v1762
        %v1859 = vpack.c.b16 %v1763, %v1763
        %v1860 = vpack.c.b16 %v1764, %v1764
        %v1861 = vpack.c.b16 %v1765, %v1765
        %v1862 = vpack.c.b16 %v1766, %v1766
        %v1863 = vpack.c.b16 %v1767, %v1767
        %s1960 = scalar_lea.vmem [#allocation2], 12
        %vm1961 = vcmask 519168
        %1962 = vst.msk [vmem:[%s1960] sm:$0xf] %vm1961, %v1768
        %1963 = vst.msk [vmem:[%s1960 + $0x4] sm:$0xf] %vm1961, %v1769
        %vm1964 = vcmask 516096
        %1965 = vst.msk [vmem:[%s1960 + $0x8] sm:$0x1] %vm1964, %v1770
        %1966 = vst.msk [vmem:[%s1960 + $0xc] sm:$0xf] %vm1961, %v1771
        %1967 = vst.msk [vmem:[%s1960 + $0x10] sm:$0xf] %vm1961, %v1772
        %1968 = vst.msk [vmem:[%s1960 + $0x14] sm:$0x1] %vm1964, %v1773
        %1969 = vst.msk [vmem:[%s1960 + $0x18] sm:$0xf] %vm1961, %v1774
        %1970 = vst.msk [vmem:[%s1960 + $0x1c] sm:$0xf] %vm1961, %v1775
        %1971 = vst.msk [vmem:[%s1960 + $0x20] sm:$0x1] %vm1964, %v1776
        %1972 = vst.msk [vmem:[%s1960 + $0x24] sm:$0xf] %vm1961, %v1777
        %1973 = vst.msk [vmem:[%s1960 + $0x28] sm:$0xf] %vm1961, %v1778
        %1974 = vst.msk [vmem:[%s1960 + $0x2c] sm:$0x1] %vm1964, %v1779
        %1975 = vst.msk [vmem:[%s1960 + $0x30] sm:$0xf] %vm1961, %v1780
        %1976 = vst.msk [vmem:[%s1960 + $0x34] sm:$0xf] %vm1961, %v1781
        %1977 = vst.msk [vmem:[%s1960 + $0x38] sm:$0x1] %vm1964, %v1782
        %1978 = vst.msk [vmem:[%s1960 + $0x3c] sm:$0xf] %vm1961, %v1783
        %1979 = vst.msk [vmem:[%s1960 + $0x40] sm:$0xf] %vm1961, %v1784
        %1980 = vst.msk [vmem:[%s1960 + $0x44] sm:$0x1] %vm1964, %v1785
        %1981 = vst.msk [vmem:[%s1960 + $0x48] sm:$0xf] %vm1961, %v1786
        %1982 = vst.msk [vmem:[%s1960 + $0x4c] sm:$0xf] %vm1961, %v1787
        %1983 = vst.msk [vmem:[%s1960 + $0x50] sm:$0x1] %vm1964, %v1788
        %1984 = vst.msk [vmem:[%s1960 + $0x54] sm:$0xf] %vm1961, %v1789
        %1985 = vst.msk [vmem:[%s1960 + $0x58] sm:$0xf] %vm1961, %v1790
        %1986 = vst.msk [vmem:[%s1960 + $0x5c] sm:$0x1] %vm1964, %v1791
        %1987 = vst.msk [vmem:[%s1960 + $0x60] sm:$0xf] %vm1961, %v1792
        %1988 = vst.msk [vmem:[%s1960 + $0x64] sm:$0xf] %vm1961, %v1793
        %1989 = vst.msk [vmem:[%s1960 + $0x68] sm:$0x1] %vm1964, %v1794
        %1990 = vst.msk [vmem:[%s1960 + $0x6c] sm:$0xf] %vm1961, %v1795
        %1991 = vst.msk [vmem:[%s1960 + $0x70] sm:$0xf] %vm1961, %v1796
        %1992 = vst.msk [vmem:[%s1960 + $0x74] sm:$0x1] %vm1964, %v1797
        %1993 = vst.msk [vmem:[%s1960 + $0x78] sm:$0xf] %vm1961, %v1798
        %1994 = vst.msk [vmem:[%s1960 + $0x7c] sm:$0xf] %vm1961, %v1799
        %1995 = vst.msk [vmem:[%s1960 + $0x80] sm:$0x1] %vm1964, %v1800
        %1996 = vst.msk [vmem:[%s1960 + $0x84] sm:$0xf] %vm1961, %v1801
        %1997 = vst.msk [vmem:[%s1960 + $0x88] sm:$0xf] %vm1961, %v1802
        %1998 = vst.msk [vmem:[%s1960 + $0x8c] sm:$0x1] %vm1964, %v1803
        %1999 = vst.msk [vmem:[%s1960 + $0x90] sm:$0xf] %vm1961, %v1804
        %2000 = vst.msk [vmem:[%s1960 + $0x94] sm:$0xf] %vm1961, %v1805
        %2001 = vst.msk [vmem:[%s1960 + $0x98] sm:$0x1] %vm1964, %v1806
        %2002 = vst.msk [vmem:[%s1960 + $0x9c] sm:$0xf] %vm1961, %v1807
        %2003 = vst.msk [vmem:[%s1960 + $0xa0] sm:$0xf] %vm1961, %v1808
        %2004 = vst.msk [vmem:[%s1960 + $0xa4] sm:$0x1] %vm1964, %v1809
        %2005 = vst.msk [vmem:[%s1960 + $0xa8] sm:$0xf] %vm1961, %v1810
        %2006 = vst.msk [vmem:[%s1960 + $0xac] sm:$0xf] %vm1961, %v1811
        %2007 = vst.msk [vmem:[%s1960 + $0xb0] sm:$0x1] %vm1964, %v1812
        %2008 = vst.msk [vmem:[%s1960 + $0xb4] sm:$0xf] %vm1961, %v1813
        %2009 = vst.msk [vmem:[%s1960 + $0xb8] sm:$0xf] %vm1961, %v1814
        %2010 = vst.msk [vmem:[%s1960 + $0xbc] sm:$0x1] %vm1964, %v1815
        %2011 = vst.msk [vmem:[%s1960 + $0xd8] sm:$0xf] %vm1961, %v1816
        %2012 = vst.msk [vmem:[%s1960 + $0xdc] sm:$0xf] %vm1961, %v1817
        %2013 = vst.msk [vmem:[%s1960 + $0xe0] sm:$0x1] %vm1964, %v1818
        %2014 = vst.msk [vmem:[%s1960 + $0xe4] sm:$0xf] %vm1961, %v1819
        %2015 = vst.msk [vmem:[%s1960 + $0xe8] sm:$0xf] %vm1961, %v1820
        %2016 = vst.msk [vmem:[%s1960 + $0xec] sm:$0x1] %vm1964, %v1821
        %2017 = vst.msk [vmem:[%s1960 + $0xf0] sm:$0xf] %vm1961, %v1822
        %2018 = vst.msk [vmem:[%s1960 + $0xf4] sm:$0xf] %vm1961, %v1823
        %2019 = vst.msk [vmem:[%s1960 + $0xf8] sm:$0x1] %vm1964, %v1824
        %2020 = vst.msk [vmem:[%s1960 + $0xfc] sm:$0xf] %vm1961, %v1825
        %2021 = vst.msk [vmem:[%s1960 + $0x100] sm:$0xf] %vm1961, %v1826
        %2022 = vst.msk [vmem:[%s1960 + $0x104] sm:$0x1] %vm1964, %v1827
        %2023 = vst.msk [vmem:[%s1960 + $0x108] sm:$0xf] %vm1961, %v1828
        %2024 = vst.msk [vmem:[%s1960 + $0x10c] sm:$0xf] %vm1961, %v1829
        %2025 = vst.msk [vmem:[%s1960 + $0x110] sm:$0x1] %vm1964, %v1830
        %2026 = vst.msk [vmem:[%s1960 + $0x114] sm:$0xf] %vm1961, %v1831
        %2027 = vst.msk [vmem:[%s1960 + $0x118] sm:$0xf] %vm1961, %v1832
        %2028 = vst.msk [vmem:[%s1960 + $0x11c] sm:$0x1] %vm1964, %v1833
        %2029 = vst.msk [vmem:[%s1960 + $0x120] sm:$0xf] %vm1961, %v1834
        %2030 = vst.msk [vmem:[%s1960 + $0x124] sm:$0xf] %vm1961, %v1835
        %2031 = vst.msk [vmem:[%s1960 + $0x128] sm:$0x1] %vm1964, %v1836
        %2032 = vst.msk [vmem:[%s1960 + $0x12c] sm:$0xf] %vm1961, %v1837
        %2033 = vst.msk [vmem:[%s1960 + $0x130] sm:$0xf] %vm1961, %v1838
        %2034 = vst.msk [vmem:[%s1960 + $0x134] sm:$0x1] %vm1964, %v1839
        %2035 = vst.msk [vmem:[%s1960 + $0x138] sm:$0xf] %vm1961, %v1840
        %2036 = vst.msk [vmem:[%s1960 + $0x13c] sm:$0xf] %vm1961, %v1841
        %2037 = vst.msk [vmem:[%s1960 + $0x140] sm:$0x1] %vm1964, %v1842
        %2038 = vst.msk [vmem:[%s1960 + $0x144] sm:$0xf] %vm1961, %v1843
        %2039 = vst.msk [vmem:[%s1960 + $0x148] sm:$0xf] %vm1961, %v1844
        %2040 = vst.msk [vmem:[%s1960 + $0x14c] sm:$0x1] %vm1964, %v1845
        %2041 = vst.msk [vmem:[%s1960 + $0x150] sm:$0xf] %vm1961, %v1846
        %2042 = vst.msk [vmem:[%s1960 + $0x154] sm:$0xf] %vm1961, %v1847
        %2043 = vst.msk [vmem:[%s1960 + $0x158] sm:$0x1] %vm1964, %v1848
        %2044 = vst.msk [vmem:[%s1960 + $0x15c] sm:$0xf] %vm1961, %v1849
        %2045 = vst.msk [vmem:[%s1960 + $0x160] sm:$0xf] %vm1961, %v1850
        %2046 = vst.msk [vmem:[%s1960 + $0x164] sm:$0x1] %vm1964, %v1851
        %2047 = vst.msk [vmem:[%s1960 + $0x168] sm:$0xf] %vm1961, %v1852
        %2048 = vst.msk [vmem:[%s1960 + $0x16c] sm:$0xf] %vm1961, %v1853
        %2049 = vst.msk [vmem:[%s1960 + $0x170] sm:$0x1] %vm1964, %v1854
        %2050 = vst.msk [vmem:[%s1960 + $0x174] sm:$0xf] %vm1961, %v1855
        %2051 = vst.msk [vmem:[%s1960 + $0x178] sm:$0xf] %vm1961, %v1856
        %2052 = vst.msk [vmem:[%s1960 + $0x17c] sm:$0x1] %vm1964, %v1857
        %2053 = vst.msk [vmem:[%s1960 + $0x180] sm:$0xf] %vm1961, %v1858
        %2054 = vst.msk [vmem:[%s1960 + $0x184] sm:$0xf] %vm1961, %v1859
        %2055 = vst.msk [vmem:[%s1960 + $0x188] sm:$0x1] %vm1964, %v1860
        %2056 = vst.msk [vmem:[%s1960 + $0x18c] sm:$0xf] %vm1961, %v1861
        %2057 = vst.msk [vmem:[%s1960 + $0x190] sm:$0xf] %vm1961, %v1862
        %2058 = vst.msk [vmem:[%s1960 + $0x194] sm:$0x1] %vm1964, %v1863
        %2059 = vst.msk [vmem:[#allocation2] sm:$0xf] %vm1961, 0
        %2060 = vst.msk [vmem:[#allocation2 + $0x4] sm:$0xf] %vm1961, 0
        %2061 = vst.msk [vmem:[#allocation2 + $0x8] sm:$0x1] %vm1964, 0
        %2062 = vst.msk [vmem:[#allocation2 + $0xd8] sm:$0xf] %vm1961, 0
        %2063 = vst.msk [vmem:[#allocation2 + $0xdc] sm:$0xf] %vm1961, 0
        %2064 = vst.msk [vmem:[#allocation2 + $0xe0] sm:$0x1] %vm1964, 0
        %s2065 = scalar_lea.vmem [#allocation2], 204
        %2066 = vst.msk [vmem:[%s2065] sm:$0xf] %vm1961, 0
        %2067 = vst.msk [vmem:[%s2065 + $0x4] sm:$0xf] %vm1961, 0
        %2068 = vst.msk [vmem:[%s2065 + $0x8] sm:$0x1] %vm1964, 0
        %2069 = vst.msk [vmem:[%s2065 + $0xd8] sm:$0xf] %vm1961, 0
        %2070 = vst.msk [vmem:[%s2065 + $0xdc] sm:$0xf] %vm1961, 0
        %2071 = vst.msk [vmem:[%s2065 + $0xe0] sm:$0x1] %vm1964, 0
        %v2072 = vld [vmem:[#allocation2] sm:$0xf]
        %v2073 = vld [vmem:[#allocation2 + $0x4] sm:$0xf]
        %v2074 = vld [vmem:[#allocation2 + $0xc] sm:$0xf]
        %v2075 = vld [vmem:[#allocation2 + $0x10] sm:$0xf]
        %v2076 = vld [vmem:[#allocation2 + $0x18] sm:$0xf]
        %v2077 = vld [vmem:[#allocation2 + $0x1c] sm:$0xf]
        %v2078 = vld [vmem:[#allocation2 + $0x24] sm:$0xf]
        %v2079 = vld [vmem:[#allocation2 + $0x28] sm:$0xf]
        %v2080 = vld [vmem:[#allocation2 + $0x30] sm:$0xf]
        %v2081 = vld [vmem:[#allocation2 + $0x34] sm:$0xf]
        %v2082 = vld [vmem:[#allocation2 + $0x3c] sm:$0xf]
        %v2083 = vld [vmem:[#allocation2 + $0x40] sm:$0xf]
        %v2084 = vld [vmem:[#allocation2 + $0x48] sm:$0xf]
        %v2085 = vld [vmem:[#allocation2 + $0x4c] sm:$0xf]
        %v2086 = vld [vmem:[#allocation2 + $0x54] sm:$0xf]
        %v2087 = vld [vmem:[#allocation2 + $0x58] sm:$0xf]
        %v2088 = vld [vmem:[#allocation2 + $0x60] sm:$0xf]
        %v2089 = vld [vmem:[#allocation2 + $0x64] sm:$0xf]
        %v2090 = vld [vmem:[#allocation2 + $0x6c] sm:$0xf]
        %v2091 = vld [vmem:[#allocation2 + $0x70] sm:$0xf]
        %v2092 = vld [vmem:[#allocation2 + $0x78] sm:$0xf]
        %v2093 = vld [vmem:[#allocation2 + $0x7c] sm:$0xf]
        %v2094 = vld [vmem:[#allocation2 + $0x84] sm:$0xf]
        %v2095 = vld [vmem:[#allocation2 + $0x88] sm:$0xf]
        %v2096 = vld [vmem:[#allocation2 + $0x90] sm:$0xf]
        %v2097 = vld [vmem:[#allocation2 + $0x94] sm:$0xf]
        %v2098 = vld [vmem:[#allocation2 + $0x9c] sm:$0xf]
        %v2099 = vld [vmem:[#allocation2 + $0xa0] sm:$0xf]
        %v2100 = vld [vmem:[#allocation2 + $0xa8] sm:$0xf]
        %v2101 = vld [vmem:[#allocation2 + $0xac] sm:$0xf]
        %v2102 = vld [vmem:[#allocation2 + $0xb4] sm:$0xf]
        %v2103 = vld [vmem:[#allocation2 + $0xb8] sm:$0xf]
        %v2104 = vld [vmem:[#allocation2 + $0xd8] sm:$0xf]
        %v2105 = vld [vmem:[#allocation2 + $0xdc] sm:$0xf]
        %v2106 = vld [vmem:[#allocation2 + $0xe4] sm:$0xf]
        %v2107 = vld [vmem:[#allocation2 + $0xe8] sm:$0xf]
        %v2108 = vld [vmem:[#allocation2 + $0xf0] sm:$0xf]
        %v2109 = vld [vmem:[#allocation2 + $0xf4] sm:$0xf]
        %v2110 = vld [vmem:[#allocation2 + $0xfc] sm:$0xf]
        %v2111 = vld [vmem:[#allocation2 + $0x100] sm:$0xf]
        %v2112 = vld [vmem:[#allocation2 + $0x108] sm:$0xf]
        %v2113 = vld [vmem:[#allocation2 + $0x10c] sm:$0xf]
        %v2114 = vld [vmem:[#allocation2 + $0x114] sm:$0xf]
        %v2115 = vld [vmem:[#allocation2 + $0x118] sm:$0xf]
        %v2116 = vld [vmem:[#allocation2 + $0x120] sm:$0xf]
        %v2117 = vld [vmem:[#allocation2 + $0x124] sm:$0xf]
        %v2118 = vld [vmem:[#allocation2 + $0x12c] sm:$0xf]
        %v2119 = vld [vmem:[#allocation2 + $0x130] sm:$0xf]
        %v2120 = vld [vmem:[#allocation2 + $0x138] sm:$0xf]
        %v2121 = vld [vmem:[#allocation2 + $0x13c] sm:$0xf]
        %v2122 = vld [vmem:[#allocation2 + $0x144] sm:$0xf]
        %v2123 = vld [vmem:[#allocation2 + $0x148] sm:$0xf]
        %v2124 = vld [vmem:[#allocation2 + $0x150] sm:$0xf]
        %v2125 = vld [vmem:[#allocation2 + $0x154] sm:$0xf]
        %v2126 = vld [vmem:[#allocation2 + $0x15c] sm:$0xf]
        %v2127 = vld [vmem:[#allocation2 + $0x160] sm:$0xf]
        %v2128 = vld [vmem:[#allocation2 + $0x168] sm:$0xf]
        %v2129 = vld [vmem:[#allocation2 + $0x16c] sm:$0xf]
        %v2130 = vld [vmem:[#allocation2 + $0x174] sm:$0xf]
        %v2131 = vld [vmem:[#allocation2 + $0x178] sm:$0xf]
        %v2132 = vld [vmem:[#allocation2 + $0x180] sm:$0xf]
        %v2133 = vld [vmem:[#allocation2 + $0x184] sm:$0xf]
        %v2134 = vld [vmem:[#allocation2 + $0x18c] sm:$0xf]
        %v2135 = vld [vmem:[#allocation2 + $0x190] sm:$0xf]
        %v2136 = vld [vmem:[#allocation2 + $0x8] sm:$0x1]
        %v2137 = vld [vmem:[#allocation2 + $0x14] sm:$0x1]
        %v2138 = vld [vmem:[#allocation2 + $0x20] sm:$0x1]
        %v2139 = vld [vmem:[#allocation2 + $0x2c] sm:$0x1]
        %v2140 = vld [vmem:[#allocation2 + $0x38] sm:$0x1]
        %v2141 = vld [vmem:[#allocation2 + $0x44] sm:$0x1]
        %v2142 = vld [vmem:[#allocation2 + $0x50] sm:$0x1]
        %v2143 = vld [vmem:[#allocation2 + $0x5c] sm:$0x1]
        %v2144 = vld [vmem:[#allocation2 + $0x68] sm:$0x1]
        %v2145 = vld [vmem:[#allocation2 + $0x74] sm:$0x1]
        %v2146 = vld [vmem:[#allocation2 + $0x80] sm:$0x1]
        %v2147 = vld [vmem:[#allocation2 + $0x8c] sm:$0x1]
        %v2148 = vld [vmem:[#allocation2 + $0x98] sm:$0x1]
        %v2149 = vld [vmem:[#allocation2 + $0xa4] sm:$0x1]
        %v2150 = vld [vmem:[#allocation2 + $0xb0] sm:$0x1]
        %v2151 = vld [vmem:[#allocation2 + $0xbc] sm:$0x1]
        %v2152 = vld [vmem:[#allocation2 + $0xe0] sm:$0x1]
        %v2153 = vld [vmem:[#allocation2 + $0xec] sm:$0x1]
        %v2154 = vld [vmem:[#allocation2 + $0xf8] sm:$0x1]
        %v2155 = vld [vmem:[#allocation2 + $0x104] sm:$0x1]
        %v2156 = vld [vmem:[#allocation2 + $0x110] sm:$0x1]
        %v2157 = vld [vmem:[#allocation2 + $0x11c] sm:$0x1]
        %v2158 = vld [vmem:[#allocation2 + $0x128] sm:$0x1]
        %v2159 = vld [vmem:[#allocation2 + $0x134] sm:$0x1]
        %v2160 = vld [vmem:[#allocation2 + $0x140] sm:$0x1]
        %v2161 = vld [vmem:[#allocation2 + $0x14c] sm:$0x1]
        %v2162 = vld [vmem:[#allocation2 + $0x158] sm:$0x1]
        %v2163 = vld [vmem:[#allocation2 + $0x164] sm:$0x1]
        %v2164 = vld [vmem:[#allocation2 + $0x170] sm:$0x1]
        %v2165 = vld [vmem:[#allocation2 + $0x17c] sm:$0x1]
        %v2166 = vld [vmem:[#allocation2 + $0x188] sm:$0x1]
        %v2167 = vld [vmem:[#allocation2 + $0x194] sm:$0x1]
        %v2168 = vld [vmem:[#allocation2] sm:$0xe]
        %v2169 = vld [vmem:[#allocation2 + $0xc] sm:$0xe]
        %v2170 = vld [vmem:[#allocation2 + $0x18] sm:$0xe]
        %v2171 = vld [vmem:[#allocation2 + $0x24] sm:$0xe]
        %v2172 = vld [vmem:[#allocation2 + $0x30] sm:$0xe]
        %v2173 = vld [vmem:[#allocation2 + $0x3c] sm:$0xe]
        %v2174 = vld [vmem:[#allocation2 + $0x48] sm:$0xe]
        %v2175 = vld [vmem:[#allocation2 + $0x54] sm:$0xe]
        %v2176 = vld [vmem:[#allocation2 + $0x60] sm:$0xe]
        %v2177 = vld [vmem:[#allocation2 + $0x6c] sm:$0xe]
        %v2178 = vld [vmem:[#allocation2 + $0x78] sm:$0xe]
        %v2179 = vld [vmem:[#allocation2 + $0x84] sm:$0xe]
        %v2180 = vld [vmem:[#allocation2 + $0x90] sm:$0xe]
        %v2181 = vld [vmem:[#allocation2 + $0x9c] sm:$0xe]
        %v2182 = vld [vmem:[#allocation2 + $0xa8] sm:$0xe]
        %v2183 = vld [vmem:[#allocation2 + $0xb4] sm:$0xe]
        %v2184 = vld [vmem:[#allocation2 + $0xd8] sm:$0xe]
        %v2185 = vld [vmem:[#allocation2 + $0xe4] sm:$0xe]
        %v2186 = vld [vmem:[#allocation2 + $0xf0] sm:$0xe]
        %v2187 = vld [vmem:[#allocation2 + $0xfc] sm:$0xe]
        %v2188 = vld [vmem:[#allocation2 + $0x108] sm:$0xe]
        %v2189 = vld [vmem:[#allocation2 + $0x114] sm:$0xe]
        %v2190 = vld [vmem:[#allocation2 + $0x120] sm:$0xe]
        %v2191 = vld [vmem:[#allocation2 + $0x12c] sm:$0xe]
        %v2192 = vld [vmem:[#allocation2 + $0x138] sm:$0xe]
        %v2193 = vld [vmem:[#allocation2 + $0x144] sm:$0xe]
        %v2194 = vld [vmem:[#allocation2 + $0x150] sm:$0xe]
        %v2195 = vld [vmem:[#allocation2 + $0x15c] sm:$0xe]
        %v2196 = vld [vmem:[#allocation2 + $0x168] sm:$0xe]
        %v2197 = vld [vmem:[#allocation2 + $0x174] sm:$0xe]
        %v2198 = vld [vmem:[#allocation2 + $0x180] sm:$0xe]
        %v2199 = vld [vmem:[#allocation2 + $0x18c] sm:$0xe]
        %v2200 = vld [vmem:[%s1960] sm:$0xf]
        %v2201 = vld [vmem:[%s1960 + $0x4] sm:$0xf]
        %v2202 = vld [vmem:[%s1960 + $0xc] sm:$0xf]
        %v2203 = vld [vmem:[%s1960 + $0x10] sm:$0xf]
        %v2204 = vld [vmem:[%s1960 + $0x18] sm:$0xf]
        %v2205 = vld [vmem:[%s1960 + $0x1c] sm:$0xf]
        %v2206 = vld [vmem:[%s1960 + $0x24] sm:$0xf]
        %v2207 = vld [vmem:[%s1960 + $0x28] sm:$0xf]
        %v2208 = vld [vmem:[%s1960 + $0x30] sm:$0xf]
        %v2209 = vld [vmem:[%s1960 + $0x34] sm:$0xf]
        %v2210 = vld [vmem:[%s1960 + $0x3c] sm:$0xf]
        %v2211 = vld [vmem:[%s1960 + $0x40] sm:$0xf]
        %v2212 = vld [vmem:[%s1960 + $0x48] sm:$0xf]
        %v2213 = vld [vmem:[%s1960 + $0x4c] sm:$0xf]
        %v2214 = vld [vmem:[%s1960 + $0x54] sm:$0xf]
        %v2215 = vld [vmem:[%s1960 + $0x58] sm:$0xf]
        %v2216 = vld [vmem:[%s1960 + $0x60] sm:$0xf]
        %v2217 = vld [vmem:[%s1960 + $0x64] sm:$0xf]
        %v2218 = vld [vmem:[%s1960 + $0x6c] sm:$0xf]
        %v2219 = vld [vmem:[%s1960 + $0x70] sm:$0xf]
        %v2220 = vld [vmem:[%s1960 + $0x78] sm:$0xf]
        %v2221 = vld [vmem:[%s1960 + $0x7c] sm:$0xf]
        %v2222 = vld [vmem:[%s1960 + $0x84] sm:$0xf]
        %v2223 = vld [vmem:[%s1960 + $0x88] sm:$0xf]
        %v2224 = vld [vmem:[%s1960 + $0x90] sm:$0xf]
        %v2225 = vld [vmem:[%s1960 + $0x94] sm:$0xf]
        %v2226 = vld [vmem:[%s1960 + $0x9c] sm:$0xf]
        %v2227 = vld [vmem:[%s1960 + $0xa0] sm:$0xf]
        %v2228 = vld [vmem:[%s1960 + $0xa8] sm:$0xf]
        %v2229 = vld [vmem:[%s1960 + $0xac] sm:$0xf]
        %v2230 = vld [vmem:[%s1960 + $0xb4] sm:$0xf]
        %v2231 = vld [vmem:[%s1960 + $0xb8] sm:$0xf]
        %v2232 = vld [vmem:[%s1960 + $0xd8] sm:$0xf]
        %v2233 = vld [vmem:[%s1960 + $0xdc] sm:$0xf]
        %v2234 = vld [vmem:[%s1960 + $0xe4] sm:$0xf]
        %v2235 = vld [vmem:[%s1960 + $0xe8] sm:$0xf]
        %v2236 = vld [vmem:[%s1960 + $0xf0] sm:$0xf]
        %v2237 = vld [vmem:[%s1960 + $0xf4] sm:$0xf]
        %v2238 = vld [vmem:[%s1960 + $0xfc] sm:$0xf]
        %v2239 = vld [vmem:[%s1960 + $0x100] sm:$0xf]
        %v2240 = vld [vmem:[%s1960 + $0x108] sm:$0xf]
        %v2241 = vld [vmem:[%s1960 + $0x10c] sm:$0xf]
        %v2242 = vld [vmem:[%s1960 + $0x114] sm:$0xf]
        %v2243 = vld [vmem:[%s1960 + $0x118] sm:$0xf]
        %v2244 = vld [vmem:[%s1960 + $0x120] sm:$0xf]
        %v2245 = vld [vmem:[%s1960 + $0x124] sm:$0xf]
        %v2246 = vld [vmem:[%s1960 + $0x12c] sm:$0xf]
        %v2247 = vld [vmem:[%s1960 + $0x130] sm:$0xf]
        %v2248 = vld [vmem:[%s1960 + $0x138] sm:$0xf]
        %v2249 = vld [vmem:[%s1960 + $0x13c] sm:$0xf]
        %v2250 = vld [vmem:[%s1960 + $0x144] sm:$0xf]
        %v2251 = vld [vmem:[%s1960 + $0x148] sm:$0xf]
        %v2252 = vld [vmem:[%s1960 + $0x150] sm:$0xf]
        %v2253 = vld [vmem:[%s1960 + $0x154] sm:$0xf]
        %v2254 = vld [vmem:[%s1960 + $0x15c] sm:$0xf]
        %v2255 = vld [vmem:[%s1960 + $0x160] sm:$0xf]
        %v2256 = vld [vmem:[%s1960 + $0x168] sm:$0xf]
        %v2257 = vld [vmem:[%s1960 + $0x16c] sm:$0xf]
        %v2258 = vld [vmem:[%s1960 + $0x174] sm:$0xf]
        %v2259 = vld [vmem:[%s1960 + $0x178] sm:$0xf]
        %v2260 = vld [vmem:[%s1960 + $0x180] sm:$0xf]
        %v2261 = vld [vmem:[%s1960 + $0x184] sm:$0xf]
        %v2262 = vld [vmem:[%s1960 + $0x18c] sm:$0xf]
        %v2263 = vld [vmem:[%s1960 + $0x190] sm:$0xf]
        %v2264 = vld [vmem:[%s1960 + $0x8] sm:$0x1]
        %v2265 = vld [vmem:[%s1960 + $0x14] sm:$0x1]
        %v2266 = vld [vmem:[%s1960 + $0x20] sm:$0x1]
        %v2267 = vld [vmem:[%s1960 + $0x2c] sm:$0x1]
        %v2268 = vld [vmem:[%s1960 + $0x38] sm:$0x1]
        %v2269 = vld [vmem:[%s1960 + $0x44] sm:$0x1]
        %v2270 = vld [vmem:[%s1960 + $0x50] sm:$0x1]
        %v2271 = vld [vmem:[%s1960 + $0x5c] sm:$0x1]
        %v2272 = vld [vmem:[%s1960 + $0x68] sm:$0x1]
        %v2273 = vld [vmem:[%s1960 + $0x74] sm:$0x1]
        %v2274 = vld [vmem:[%s1960 + $0x80] sm:$0x1]
        %v2275 = vld [vmem:[%s1960 + $0x8c] sm:$0x1]
        %v2276 = vld [vmem:[%s1960 + $0x98] sm:$0x1]
        %v2277 = vld [vmem:[%s1960 + $0xa4] sm:$0x1]
        %v2278 = vld [vmem:[%s1960 + $0xb0] sm:$0x1]
        %v2279 = vld [vmem:[%s1960 + $0xbc] sm:$0x1]
        %v2280 = vld [vmem:[%s1960 + $0xe0] sm:$0x1]
        %v2281 = vld [vmem:[%s1960 + $0xec] sm:$0x1]
        %v2282 = vld [vmem:[%s1960 + $0xf8] sm:$0x1]
        %v2283 = vld [vmem:[%s1960 + $0x104] sm:$0x1]
        %v2284 = vld [vmem:[%s1960 + $0x110] sm:$0x1]
        %v2285 = vld [vmem:[%s1960 + $0x11c] sm:$0x1]
        %v2286 = vld [vmem:[%s1960 + $0x128] sm:$0x1]
        %v2287 = vld [vmem:[%s1960 + $0x134] sm:$0x1]
        %v2288 = vld [vmem:[%s1960 + $0x140] sm:$0x1]
        %v2289 = vld [vmem:[%s1960 + $0x14c] sm:$0x1]
        %v2290 = vld [vmem:[%s1960 + $0x158] sm:$0x1]
        %v2291 = vld [vmem:[%s1960 + $0x164] sm:$0x1]
        %v2292 = vld [vmem:[%s1960 + $0x170] sm:$0x1]
        %v2293 = vld [vmem:[%s1960 + $0x17c] sm:$0x1]
        %v2294 = vld [vmem:[%s1960 + $0x188] sm:$0x1]
        %v2295 = vld [vmem:[%s1960 + $0x194] sm:$0x1]
        %v2296 = vld [vmem:[%s1960] sm:$0xe]
        %v2297 = vld [vmem:[%s1960 + $0xc] sm:$0xe]
        %v2298 = vld [vmem:[%s1960 + $0x18] sm:$0xe]
        %v2299 = vld [vmem:[%s1960 + $0x24] sm:$0xe]
        %v2300 = vld [vmem:[%s1960 + $0x30] sm:$0xe]
        %v2301 = vld [vmem:[%s1960 + $0x3c] sm:$0xe]
        %v2302 = vld [vmem:[%s1960 + $0x48] sm:$0xe]
        %v2303 = vld [vmem:[%s1960 + $0x54] sm:$0xe]
        %v2304 = vld [vmem:[%s1960 + $0x60] sm:$0xe]
        %v2305 = vld [vmem:[%s1960 + $0x6c] sm:$0xe]
        %v2306 = vld [vmem:[%s1960 + $0x78] sm:$0xe]
        %v2307 = vld [vmem:[%s1960 + $0x84] sm:$0xe]
        %v2308 = vld [vmem:[%s1960 + $0x90] sm:$0xe]
        %v2309 = vld [vmem:[%s1960 + $0x9c] sm:$0xe]
        %v2310 = vld [vmem:[%s1960 + $0xa8] sm:$0xe]
        %v2311 = vld [vmem:[%s1960 + $0xb4] sm:$0xe]
        %v2312 = vld [vmem:[%s1960 + $0xd8] sm:$0xe]
        %v2313 = vld [vmem:[%s1960 + $0xe4] sm:$0xe]
        %v2314 = vld [vmem:[%s1960 + $0xf0] sm:$0xe]
        %v2315 = vld [vmem:[%s1960 + $0xfc] sm:$0xe]
        %v2316 = vld [vmem:[%s1960 + $0x108] sm:$0xe]
        %v2317 = vld [vmem:[%s1960 + $0x114] sm:$0xe]
        %v2318 = vld [vmem:[%s1960 + $0x120] sm:$0xe]
        %v2319 = vld [vmem:[%s1960 + $0x12c] sm:$0xe]
        %v2320 = vld [vmem:[%s1960 + $0x138] sm:$0xe]
        %v2321 = vld [vmem:[%s1960 + $0x144] sm:$0xe]
        %v2322 = vld [vmem:[%s1960 + $0x150] sm:$0xe]
        %v2323 = vld [vmem:[%s1960 + $0x15c] sm:$0xe]
        %v2324 = vld [vmem:[%s1960 + $0x168] sm:$0xe]
        %v2325 = vld [vmem:[%s1960 + $0x174] sm:$0xe]
        %v2326 = vld [vmem:[%s1960 + $0x180] sm:$0xe]
        %v2327 = vld [vmem:[%s1960 + $0x18c] sm:$0xe]
        %s2328 = scalar_lea.vmem [#allocation2], 24
        %v2329 = vld [vmem:[%s2328] sm:$0xf]
        %v2330 = vld [vmem:[%s2328 + $0x4] sm:$0xf]
        %v2331 = vld [vmem:[%s2328 + $0xc] sm:$0xf]
        %v2332 = vld [vmem:[%s2328 + $0x10] sm:$0xf]
        %v2333 = vld [vmem:[%s2328 + $0x18] sm:$0xf]
        %v2334 = vld [vmem:[%s2328 + $0x1c] sm:$0xf]
        %v2335 = vld [vmem:[%s2328 + $0x24] sm:$0xf]
        %v2336 = vld [vmem:[%s2328 + $0x28] sm:$0xf]
        %v2337 = vld [vmem:[%s2328 + $0x30] sm:$0xf]
        %v2338 = vld [vmem:[%s2328 + $0x34] sm:$0xf]
        %v2339 = vld [vmem:[%s2328 + $0x3c] sm:$0xf]
        %v2340 = vld [vmem:[%s2328 + $0x40] sm:$0xf]
        %v2341 = vld [vmem:[%s2328 + $0x48] sm:$0xf]
        %v2342 = vld [vmem:[%s2328 + $0x4c] sm:$0xf]
        %v2343 = vld [vmem:[%s2328 + $0x54] sm:$0xf]
        %v2344 = vld [vmem:[%s2328 + $0x58] sm:$0xf]
        %v2345 = vld [vmem:[%s2328 + $0x60] sm:$0xf]
        %v2346 = vld [vmem:[%s2328 + $0x64] sm:$0xf]
        %v2347 = vld [vmem:[%s2328 + $0x6c] sm:$0xf]
        %v2348 = vld [vmem:[%s2328 + $0x70] sm:$0xf]
        %v2349 = vld [vmem:[%s2328 + $0x78] sm:$0xf]
        %v2350 = vld [vmem:[%s2328 + $0x7c] sm:$0xf]
        %v2351 = vld [vmem:[%s2328 + $0x84] sm:$0xf]
        %v2352 = vld [vmem:[%s2328 + $0x88] sm:$0xf]
        %v2353 = vld [vmem:[%s2328 + $0x90] sm:$0xf]
        %v2354 = vld [vmem:[%s2328 + $0x94] sm:$0xf]
        %v2355 = vld [vmem:[%s2328 + $0x9c] sm:$0xf]
        %v2356 = vld [vmem:[%s2328 + $0xa0] sm:$0xf]
        %v2357 = vld [vmem:[%s2328 + $0xa8] sm:$0xf]
        %v2358 = vld [vmem:[%s2328 + $0xac] sm:$0xf]
        %v2359 = vld [vmem:[%s2328 + $0xb4] sm:$0xf]
        %v2360 = vld [vmem:[%s2328 + $0xb8] sm:$0xf]
        %v2361 = vld [vmem:[%s2328 + $0xd8] sm:$0xf]
        %v2362 = vld [vmem:[%s2328 + $0xdc] sm:$0xf]
        %v2363 = vld [vmem:[%s2328 + $0xe4] sm:$0xf]
        %v2364 = vld [vmem:[%s2328 + $0xe8] sm:$0xf]
        %v2365 = vld [vmem:[%s2328 + $0xf0] sm:$0xf]
        %v2366 = vld [vmem:[%s2328 + $0xf4] sm:$0xf]
        %v2367 = vld [vmem:[%s2328 + $0xfc] sm:$0xf]
        %v2368 = vld [vmem:[%s2328 + $0x100] sm:$0xf]
        %v2369 = vld [vmem:[%s2328 + $0x108] sm:$0xf]
        %v2370 = vld [vmem:[%s2328 + $0x10c] sm:$0xf]
        %v2371 = vld [vmem:[%s2328 + $0x114] sm:$0xf]
        %v2372 = vld [vmem:[%s2328 + $0x118] sm:$0xf]
        %v2373 = vld [vmem:[%s2328 + $0x120] sm:$0xf]
        %v2374 = vld [vmem:[%s2328 + $0x124] sm:$0xf]
        %v2375 = vld [vmem:[%s2328 + $0x12c] sm:$0xf]
        %v2376 = vld [vmem:[%s2328 + $0x130] sm:$0xf]
        %v2377 = vld [vmem:[%s2328 + $0x138] sm:$0xf]
        %v2378 = vld [vmem:[%s2328 + $0x13c] sm:$0xf]
        %v2379 = vld [vmem:[%s2328 + $0x144] sm:$0xf]
        %v2380 = vld [vmem:[%s2328 + $0x148] sm:$0xf]
        %v2381 = vld [vmem:[%s2328 + $0x150] sm:$0xf]
        %v2382 = vld [vmem:[%s2328 + $0x154] sm:$0xf]
        %v2383 = vld [vmem:[%s2328 + $0x15c] sm:$0xf]
        %v2384 = vld [vmem:[%s2328 + $0x160] sm:$0xf]
        %v2385 = vld [vmem:[%s2328 + $0x168] sm:$0xf]
        %v2386 = vld [vmem:[%s2328 + $0x16c] sm:$0xf]
        %v2387 = vld [vmem:[%s2328 + $0x174] sm:$0xf]
        %v2388 = vld [vmem:[%s2328 + $0x178] sm:$0xf]
        %v2389 = vld [vmem:[%s2328 + $0x180] sm:$0xf]
        %v2390 = vld [vmem:[%s2328 + $0x184] sm:$0xf]
        %v2391 = vld [vmem:[%s2328 + $0x18c] sm:$0xf]
        %v2392 = vld [vmem:[%s2328 + $0x190] sm:$0xf]
        %v2393 = vld [vmem:[%s2328 + $0x8] sm:$0x1]
        %v2394 = vld [vmem:[%s2328 + $0x14] sm:$0x1]
        %v2395 = vld [vmem:[%s2328 + $0x20] sm:$0x1]
        %v2396 = vld [vmem:[%s2328 + $0x2c] sm:$0x1]
        %v2397 = vld [vmem:[%s2328 + $0x38] sm:$0x1]
        %v2398 = vld [vmem:[%s2328 + $0x44] sm:$0x1]
        %v2399 = vld [vmem:[%s2328 + $0x50] sm:$0x1]
        %v2400 = vld [vmem:[%s2328 + $0x5c] sm:$0x1]
        %v2401 = vld [vmem:[%s2328 + $0x68] sm:$0x1]
        %v2402 = vld [vmem:[%s2328 + $0x74] sm:$0x1]
        %v2403 = vld [vmem:[%s2328 + $0x80] sm:$0x1]
        %v2404 = vld [vmem:[%s2328 + $0x8c] sm:$0x1]
        %v2405 = vld [vmem:[%s2328 + $0x98] sm:$0x1]
        %v2406 = vld [vmem:[%s2328 + $0xa4] sm:$0x1]
        %v2407 = vld [vmem:[%s2328 + $0xb0] sm:$0x1]
        %v2408 = vld [vmem:[%s2328 + $0xbc] sm:$0x1]
        %v2409 = vld [vmem:[%s2328 + $0xe0] sm:$0x1]
        %v2410 = vld [vmem:[%s2328 + $0xec] sm:$0x1]
        %v2411 = vld [vmem:[%s2328 + $0xf8] sm:$0x1]
        %v2412 = vld [vmem:[%s2328 + $0x104] sm:$0x1]
        %v2413 = vld [vmem:[%s2328 + $0x110] sm:$0x1]
        %v2414 = vld [vmem:[%s2328 + $0x11c] sm:$0x1]
        %v2415 = vld [vmem:[%s2328 + $0x128] sm:$0x1]
        %v2416 = vld [vmem:[%s2328 + $0x134] sm:$0x1]
        %v2417 = vld [vmem:[%s2328 + $0x140] sm:$0x1]
        %v2418 = vld [vmem:[%s2328 + $0x14c] sm:$0x1]
        %v2419 = vld [vmem:[%s2328 + $0x158] sm:$0x1]
        %v2420 = vld [vmem:[%s2328 + $0x164] sm:$0x1]
        %v2421 = vld [vmem:[%s2328 + $0x170] sm:$0x1]
        %v2422 = vld [vmem:[%s2328 + $0x17c] sm:$0x1]
        %v2423 = vld [vmem:[%s2328 + $0x188] sm:$0x1]
        %v2424 = vld [vmem:[%s2328 + $0x194] sm:$0x1]
        %v2425 = vld [vmem:[%s2328] sm:$0xe]
        %v2426 = vld [vmem:[%s2328 + $0xc] sm:$0xe]
        %v2427 = vld [vmem:[%s2328 + $0x18] sm:$0xe]
        %v2428 = vld [vmem:[%s2328 + $0x24] sm:$0xe]
        %v2429 = vld [vmem:[%s2328 + $0x30] sm:$0xe]
        %v2430 = vld [vmem:[%s2328 + $0x3c] sm:$0xe]
        %v2431 = vld [vmem:[%s2328 + $0x48] sm:$0xe]
        %v2432 = vld [vmem:[%s2328 + $0x54] sm:$0xe]
        %v2433 = vld [vmem:[%s2328 + $0x60] sm:$0xe]
        %v2434 = vld [vmem:[%s2328 + $0x6c] sm:$0xe]
        %v2435 = vld [vmem:[%s2328 + $0x78] sm:$0xe]
        %v2436 = vld [vmem:[%s2328 + $0x84] sm:$0xe]
        %v2437 = vld [vmem:[%s2328 + $0x90] sm:$0xe]
        %v2438 = vld [vmem:[%s2328 + $0x9c] sm:$0xe]
        %v2439 = vld [vmem:[%s2328 + $0xa8] sm:$0xe]
        %v2440 = vld [vmem:[%s2328 + $0xb4] sm:$0xe]
        %v2441 = vld [vmem:[%s2328 + $0xd8] sm:$0xe]
        %v2442 = vld [vmem:[%s2328 + $0xe4] sm:$0xe]
        %v2443 = vld [vmem:[%s2328 + $0xf0] sm:$0xe]
        %v2444 = vld [vmem:[%s2328 + $0xfc] sm:$0xe]
        %v2445 = vld [vmem:[%s2328 + $0x108] sm:$0xe]
        %v2446 = vld [vmem:[%s2328 + $0x114] sm:$0xe]
        %v2447 = vld [vmem:[%s2328 + $0x120] sm:$0xe]
        %v2448 = vld [vmem:[%s2328 + $0x12c] sm:$0xe]
        %v2449 = vld [vmem:[%s2328 + $0x138] sm:$0xe]
        %v2450 = vld [vmem:[%s2328 + $0x144] sm:$0xe]
        %v2451 = vld [vmem:[%s2328 + $0x150] sm:$0xe]
        %v2452 = vld [vmem:[%s2328 + $0x15c] sm:$0xe]
        %v2453 = vld [vmem:[%s2328 + $0x168] sm:$0xe]
        %v2454 = vld [vmem:[%s2328 + $0x174] sm:$0xe]
        %v2455 = vld [vmem:[%s2328 + $0x180] sm:$0xe]
        %v2456 = vld [vmem:[%s2328 + $0x18c] sm:$0xe]
        %v2521 = vunpack.c.l.b16 %v2072
        %v2522 = vunpack.c.l.b16 %v2073
        %v2523 = vunpack.c.l.b16 %v2074
        %v2524 = vunpack.c.l.b16 %v2075
        %v2525 = vunpack.c.l.b16 %v2076
        %v2526 = vunpack.c.l.b16 %v2077
        %v2527 = vunpack.c.l.b16 %v2078
        %v2528 = vunpack.c.l.b16 %v2079
        %v2529 = vunpack.c.l.b16 %v2080
        %v2530 = vunpack.c.l.b16 %v2081
        %v2531 = vunpack.c.l.b16 %v2082
        %v2532 = vunpack.c.l.b16 %v2083
        %v2533 = vunpack.c.l.b16 %v2084
        %v2534 = vunpack.c.l.b16 %v2085
        %v2535 = vunpack.c.l.b16 %v2086
        %v2536 = vunpack.c.l.b16 %v2087
        %v2537 = vunpack.c.l.b16 %v2088
        %v2538 = vunpack.c.l.b16 %v2089
        %v2539 = vunpack.c.l.b16 %v2090
        %v2540 = vunpack.c.l.b16 %v2091
        %v2541 = vunpack.c.l.b16 %v2092
        %v2542 = vunpack.c.l.b16 %v2093
        %v2543 = vunpack.c.l.b16 %v2094
        %v2544 = vunpack.c.l.b16 %v2095
        %v2545 = vunpack.c.l.b16 %v2096
        %v2546 = vunpack.c.l.b16 %v2097
        %v2547 = vunpack.c.l.b16 %v2098
        %v2548 = vunpack.c.l.b16 %v2099
        %v2549 = vunpack.c.l.b16 %v2100
        %v2550 = vunpack.c.l.b16 %v2101
        %v2551 = vunpack.c.l.b16 %v2102
        %v2552 = vunpack.c.l.b16 %v2103
        %v2553 = vunpack.c.l.b16 %v2104
        %v2554 = vunpack.c.l.b16 %v2105
        %v2555 = vunpack.c.l.b16 %v2106
        %v2556 = vunpack.c.l.b16 %v2107
        %v2557 = vunpack.c.l.b16 %v2108
        %v2558 = vunpack.c.l.b16 %v2109
        %v2559 = vunpack.c.l.b16 %v2110
        %v2560 = vunpack.c.l.b16 %v2111
        %v2561 = vunpack.c.l.b16 %v2112
        %v2562 = vunpack.c.l.b16 %v2113
        %v2563 = vunpack.c.l.b16 %v2114
        %v2564 = vunpack.c.l.b16 %v2115
        %v2565 = vunpack.c.l.b16 %v2116
        %v2566 = vunpack.c.l.b16 %v2117
        %v2567 = vunpack.c.l.b16 %v2118
        %v2568 = vunpack.c.l.b16 %v2119
        %v2569 = vunpack.c.l.b16 %v2120
        %v2570 = vunpack.c.l.b16 %v2121
        %v2571 = vunpack.c.l.b16 %v2122
        %v2572 = vunpack.c.l.b16 %v2123
        %v2573 = vunpack.c.l.b16 %v2124
        %v2574 = vunpack.c.l.b16 %v2125
        %v2575 = vunpack.c.l.b16 %v2126
        %v2576 = vunpack.c.l.b16 %v2127
        %v2577 = vunpack.c.l.b16 %v2128
        %v2578 = vunpack.c.l.b16 %v2129
        %v2579 = vunpack.c.l.b16 %v2130
        %v2580 = vunpack.c.l.b16 %v2131
        %v2581 = vunpack.c.l.b16 %v2132
        %v2582 = vunpack.c.l.b16 %v2133
        %v2583 = vunpack.c.l.b16 %v2134
        %v2584 = vunpack.c.l.b16 %v2135
        %v2585 = vpack.c.b16 %v2522, %v2521
        %v2586 = vpack.c.b16 %v2524, %v2523
        %v2587 = vpack.c.b16 %v2526, %v2525
        %v2588 = vpack.c.b16 %v2528, %v2527
        %v2589 = vpack.c.b16 %v2530, %v2529
        %v2590 = vpack.c.b16 %v2532, %v2531
        %v2591 = vpack.c.b16 %v2534, %v2533
        %v2592 = vpack.c.b16 %v2536, %v2535
        %v2593 = vpack.c.b16 %v2538, %v2537
        %v2594 = vpack.c.b16 %v2540, %v2539
        %v2595 = vpack.c.b16 %v2542, %v2541
        %v2596 = vpack.c.b16 %v2544, %v2543
        %v2597 = vpack.c.b16 %v2546, %v2545
        %v2598 = vpack.c.b16 %v2548, %v2547
        %v2599 = vpack.c.b16 %v2550, %v2549
        %v2600 = vpack.c.b16 %v2552, %v2551
        %v2601 = vpack.c.b16 %v2554, %v2553
        %v2602 = vpack.c.b16 %v2556, %v2555
        %v2603 = vpack.c.b16 %v2558, %v2557
        %v2604 = vpack.c.b16 %v2560, %v2559
        %v2605 = vpack.c.b16 %v2562, %v2561
        %v2606 = vpack.c.b16 %v2564, %v2563
        %v2607 = vpack.c.b16 %v2566, %v2565
        %v2608 = vpack.c.b16 %v2568, %v2567
        %v2609 = vpack.c.b16 %v2570, %v2569
        %v2610 = vpack.c.b16 %v2572, %v2571
        %v2611 = vpack.c.b16 %v2574, %v2573
        %v2612 = vpack.c.b16 %v2576, %v2575
        %v2613 = vpack.c.b16 %v2578, %v2577
        %v2614 = vpack.c.b16 %v2580, %v2579
        %v2615 = vpack.c.b16 %v2582, %v2581
        %v2616 = vpack.c.b16 %v2584, %v2583
        %v2649 = vunpack.c.l.b16 %v2136
        %v2650 = vunpack.c.l.b16 %v2137
        %v2651 = vunpack.c.l.b16 %v2138
        %v2652 = vunpack.c.l.b16 %v2139
        %v2653 = vunpack.c.l.b16 %v2140
        %v2654 = vunpack.c.l.b16 %v2141
        %v2655 = vunpack.c.l.b16 %v2142
        %v2656 = vunpack.c.l.b16 %v2143
        %v2657 = vunpack.c.l.b16 %v2144
        %v2658 = vunpack.c.l.b16 %v2145
        %v2659 = vunpack.c.l.b16 %v2146
        %v2660 = vunpack.c.l.b16 %v2147
        %v2661 = vunpack.c.l.b16 %v2148
        %v2662 = vunpack.c.l.b16 %v2149
        %v2663 = vunpack.c.l.b16 %v2150
        %v2664 = vunpack.c.l.b16 %v2151
        %v2665 = vunpack.c.l.b16 %v2152
        %v2666 = vunpack.c.l.b16 %v2153
        %v2667 = vunpack.c.l.b16 %v2154
        %v2668 = vunpack.c.l.b16 %v2155
        %v2669 = vunpack.c.l.b16 %v2156
        %v2670 = vunpack.c.l.b16 %v2157
        %v2671 = vunpack.c.l.b16 %v2158
        %v2672 = vunpack.c.l.b16 %v2159
        %v2673 = vunpack.c.l.b16 %v2160
        %v2674 = vunpack.c.l.b16 %v2161
        %v2675 = vunpack.c.l.b16 %v2162
        %v2676 = vunpack.c.l.b16 %v2163
        %v2677 = vunpack.c.l.b16 %v2164
        %v2678 = vunpack.c.l.b16 %v2165
        %v2679 = vunpack.c.l.b16 %v2166
        %v2680 = vunpack.c.l.b16 %v2167
        %v2681 = vpack.c.b16 %v2649, %v2649
        %v2682 = vpack.c.b16 %v2650, %v2650
        %v2683 = vpack.c.b16 %v2651, %v2651
        %v2684 = vpack.c.b16 %v2652, %v2652
        %v2685 = vpack.c.b16 %v2653, %v2653
        %v2686 = vpack.c.b16 %v2654, %v2654
        %v2687 = vpack.c.b16 %v2655, %v2655
        %v2688 = vpack.c.b16 %v2656, %v2656
        %v2689 = vpack.c.b16 %v2657, %v2657
        %v2690 = vpack.c.b16 %v2658, %v2658
        %v2691 = vpack.c.b16 %v2659, %v2659
        %v2692 = vpack.c.b16 %v2660, %v2660
        %v2693 = vpack.c.b16 %v2661, %v2661
        %v2694 = vpack.c.b16 %v2662, %v2662
        %v2695 = vpack.c.b16 %v2663, %v2663
        %v2696 = vpack.c.b16 %v2664, %v2664
        %v2697 = vpack.c.b16 %v2665, %v2665
        %v2698 = vpack.c.b16 %v2666, %v2666
        %v2699 = vpack.c.b16 %v2667, %v2667
        %v2700 = vpack.c.b16 %v2668, %v2668
        %v2701 = vpack.c.b16 %v2669, %v2669
        %v2702 = vpack.c.b16 %v2670, %v2670
        %v2703 = vpack.c.b16 %v2671, %v2671
        %v2704 = vpack.c.b16 %v2672, %v2672
        %v2705 = vpack.c.b16 %v2673, %v2673
        %v2706 = vpack.c.b16 %v2674, %v2674
        %v2707 = vpack.c.b16 %v2675, %v2675
        %v2708 = vpack.c.b16 %v2676, %v2676
        %v2709 = vpack.c.b16 %v2677, %v2677
        %v2710 = vpack.c.b16 %v2678, %v2678
        %v2711 = vpack.c.b16 %v2679, %v2679
        %v2712 = vpack.c.b16 %v2680, %v2680
        %vm2713 = vsmask.f32 7424
        %v2715 = vshrl.u32 %v2585, 16
        %v2717 = vshll.u32 %v2585, 16
        %v2719 = vrot.slane %v2717, 1
        %v2720 = vor.u32 %v2715, %v2719
        %v2722 = vshll.u32 %v2681, 16
        %v2724 = vrot.slane %v2722, 1
        %v2725 = vsel %vm2713, %v2720, %v2724
        %v2727 = vshrl.u32 %v2586, 16
        %v2729 = vshll.u32 %v2586, 16
        %v2731 = vrot.slane %v2729, 1
        %v2732 = vor.u32 %v2727, %v2731
        %v2734 = vshll.u32 %v2682, 16
        %v2736 = vrot.slane %v2734, 1
        %v2737 = vsel %vm2713, %v2732, %v2736
        %v2739 = vshrl.u32 %v2587, 16
        %v2741 = vshll.u32 %v2587, 16
        %v2743 = vrot.slane %v2741, 1
        %v2744 = vor.u32 %v2739, %v2743
        %v2746 = vshll.u32 %v2683, 16
        %v2748 = vrot.slane %v2746, 1
        %v2749 = vsel %vm2713, %v2744, %v2748
        %v2751 = vshrl.u32 %v2588, 16
        %v2753 = vshll.u32 %v2588, 16
        %v2755 = vrot.slane %v2753, 1
        %v2756 = vor.u32 %v2751, %v2755
        %v2758 = vshll.u32 %v2684, 16
        %v2760 = vrot.slane %v2758, 1
        %v2761 = vsel %vm2713, %v2756, %v2760
        %v2763 = vshrl.u32 %v2589, 16
        %v2765 = vshll.u32 %v2589, 16
        %v2767 = vrot.slane %v2765, 1
        %v2768 = vor.u32 %v2763, %v2767
        %v2770 = vshll.u32 %v2685, 16
        %v2772 = vrot.slane %v2770, 1
        %v2773 = vsel %vm2713, %v2768, %v2772
        %v2775 = vshrl.u32 %v2590, 16
        %v2777 = vshll.u32 %v2590, 16
        %v2779 = vrot.slane %v2777, 1
        %v2780 = vor.u32 %v2775, %v2779
        %v2782 = vshll.u32 %v2686, 16
        %v2784 = vrot.slane %v2782, 1
        %v2785 = vsel %vm2713, %v2780, %v2784
        %v2787 = vshrl.u32 %v2591, 16
        %v2789 = vshll.u32 %v2591, 16
        %v2791 = vrot.slane %v2789, 1
        %v2792 = vor.u32 %v2787, %v2791
        %v2794 = vshll.u32 %v2687, 16
        %v2796 = vrot.slane %v2794, 1
        %v2797 = vsel %vm2713, %v2792, %v2796
        %v2799 = vshrl.u32 %v2592, 16
        %v2801 = vshll.u32 %v2592, 16
        %v2803 = vrot.slane %v2801, 1
        %v2804 = vor.u32 %v2799, %v2803
        %v2806 = vshll.u32 %v2688, 16
        %v2808 = vrot.slane %v2806, 1
        %v2809 = vsel %vm2713, %v2804, %v2808
        %v2811 = vshrl.u32 %v2593, 16
        %v2813 = vshll.u32 %v2593, 16
        %v2815 = vrot.slane %v2813, 1
        %v2816 = vor.u32 %v2811, %v2815
        %v2818 = vshll.u32 %v2689, 16
        %v2820 = vrot.slane %v2818, 1
        %v2821 = vsel %vm2713, %v2816, %v2820
        %v2823 = vshrl.u32 %v2594, 16
        %v2825 = vshll.u32 %v2594, 16
        %v2827 = vrot.slane %v2825, 1
        %v2828 = vor.u32 %v2823, %v2827
        %v2830 = vshll.u32 %v2690, 16
        %v2832 = vrot.slane %v2830, 1
        %v2833 = vsel %vm2713, %v2828, %v2832
        %v2835 = vshrl.u32 %v2595, 16
        %v2837 = vshll.u32 %v2595, 16
        %v2839 = vrot.slane %v2837, 1
        %v2840 = vor.u32 %v2835, %v2839
        %v2842 = vshll.u32 %v2691, 16
        %v2844 = vrot.slane %v2842, 1
        %v2845 = vsel %vm2713, %v2840, %v2844
        %v2847 = vshrl.u32 %v2596, 16
        %v2849 = vshll.u32 %v2596, 16
        %v2851 = vrot.slane %v2849, 1
        %v2852 = vor.u32 %v2847, %v2851
        %v2854 = vshll.u32 %v2692, 16
        %v2856 = vrot.slane %v2854, 1
        %v2857 = vsel %vm2713, %v2852, %v2856
        %v2859 = vshrl.u32 %v2597, 16
        %v2861 = vshll.u32 %v2597, 16
        %v2863 = vrot.slane %v2861, 1
        %v2864 = vor.u32 %v2859, %v2863
        %v2866 = vshll.u32 %v2693, 16
        %v2868 = vrot.slane %v2866, 1
        %v2869 = vsel %vm2713, %v2864, %v2868
        %v2871 = vshrl.u32 %v2598, 16
        %v2873 = vshll.u32 %v2598, 16
        %v2875 = vrot.slane %v2873, 1
        %v2876 = vor.u32 %v2871, %v2875
        %v2878 = vshll.u32 %v2694, 16
        %v2880 = vrot.slane %v2878, 1
        %v2881 = vsel %vm2713, %v2876, %v2880
        %v2883 = vshrl.u32 %v2599, 16
        %v2885 = vshll.u32 %v2599, 16
        %v2887 = vrot.slane %v2885, 1
        %v2888 = vor.u32 %v2883, %v2887
        %v2890 = vshll.u32 %v2695, 16
        %v2892 = vrot.slane %v2890, 1
        %v2893 = vsel %vm2713, %v2888, %v2892
        %v2895 = vshrl.u32 %v2600, 16
        %v2897 = vshll.u32 %v2600, 16
        %v2899 = vrot.slane %v2897, 1
        %v2900 = vor.u32 %v2895, %v2899
        %v2902 = vshll.u32 %v2696, 16
        %v2904 = vrot.slane %v2902, 1
        %v2905 = vsel %vm2713, %v2900, %v2904
        %v2907 = vshrl.u32 %v2601, 16
        %v2909 = vshll.u32 %v2601, 16
        %v2911 = vrot.slane %v2909, 1
        %v2912 = vor.u32 %v2907, %v2911
        %v2914 = vshll.u32 %v2697, 16
        %v2916 = vrot.slane %v2914, 1
        %v2917 = vsel %vm2713, %v2912, %v2916
        %v2919 = vshrl.u32 %v2602, 16
        %v2921 = vshll.u32 %v2602, 16
        %v2923 = vrot.slane %v2921, 1
        %v2924 = vor.u32 %v2919, %v2923
        %v2926 = vshll.u32 %v2698, 16
        %v2928 = vrot.slane %v2926, 1
        %v2929 = vsel %vm2713, %v2924, %v2928
        %v2931 = vshrl.u32 %v2603, 16
        %v2933 = vshll.u32 %v2603, 16
        %v2935 = vrot.slane %v2933, 1
        %v2936 = vor.u32 %v2931, %v2935
        %v2938 = vshll.u32 %v2699, 16
        %v2940 = vrot.slane %v2938, 1
        %v2941 = vsel %vm2713, %v2936, %v2940
        %v2943 = vshrl.u32 %v2604, 16
        %v2945 = vshll.u32 %v2604, 16
        %v2947 = vrot.slane %v2945, 1
        %v2948 = vor.u32 %v2943, %v2947
        %v2950 = vshll.u32 %v2700, 16
        %v2952 = vrot.slane %v2950, 1
        %v2953 = vsel %vm2713, %v2948, %v2952
        %v2955 = vshrl.u32 %v2605, 16
        %v2957 = vshll.u32 %v2605, 16
        %v2959 = vrot.slane %v2957, 1
        %v2960 = vor.u32 %v2955, %v2959
        %v2962 = vshll.u32 %v2701, 16
        %v2964 = vrot.slane %v2962, 1
        %v2965 = vsel %vm2713, %v2960, %v2964
        %v2967 = vshrl.u32 %v2606, 16
        %v2969 = vshll.u32 %v2606, 16
        %v2971 = vrot.slane %v2969, 1
        %v2972 = vor.u32 %v2967, %v2971
        %v2974 = vshll.u32 %v2702, 16
        %v2976 = vrot.slane %v2974, 1
        %v2977 = vsel %vm2713, %v2972, %v2976
        %v2979 = vshrl.u32 %v2607, 16
        %v2981 = vshll.u32 %v2607, 16
        %v2983 = vrot.slane %v2981, 1
        %v2984 = vor.u32 %v2979, %v2983
        %v2986 = vshll.u32 %v2703, 16
        %v2988 = vrot.slane %v2986, 1
        %v2989 = vsel %vm2713, %v2984, %v2988
        %v2991 = vshrl.u32 %v2608, 16
        %v2993 = vshll.u32 %v2608, 16
        %v2995 = vrot.slane %v2993, 1
        %v2996 = vor.u32 %v2991, %v2995
        %v2998 = vshll.u32 %v2704, 16
        %v3000 = vrot.slane %v2998, 1
        %v3001 = vsel %vm2713, %v2996, %v3000
        %v3003 = vshrl.u32 %v2609, 16
        %v3005 = vshll.u32 %v2609, 16
        %v3007 = vrot.slane %v3005, 1
        %v3008 = vor.u32 %v3003, %v3007
        %v3010 = vshll.u32 %v2705, 16
        %v3012 = vrot.slane %v3010, 1
        %v3013 = vsel %vm2713, %v3008, %v3012
        %v3015 = vshrl.u32 %v2610, 16
        %v3017 = vshll.u32 %v2610, 16
        %v3019 = vrot.slane %v3017, 1
        %v3020 = vor.u32 %v3015, %v3019
        %v3022 = vshll.u32 %v2706, 16
        %v3024 = vrot.slane %v3022, 1
        %v3025 = vsel %vm2713, %v3020, %v3024
        %v3027 = vshrl.u32 %v2611, 16
        %v3029 = vshll.u32 %v2611, 16
        %v3031 = vrot.slane %v3029, 1
        %v3032 = vor.u32 %v3027, %v3031
        %v3034 = vshll.u32 %v2707, 16
        %v3036 = vrot.slane %v3034, 1
        %v3037 = vsel %vm2713, %v3032, %v3036
        %v3039 = vshrl.u32 %v2612, 16
        %v3041 = vshll.u32 %v2612, 16
        %v3043 = vrot.slane %v3041, 1
        %v3044 = vor.u32 %v3039, %v3043
        %v3046 = vshll.u32 %v2708, 16
        %v3048 = vrot.slane %v3046, 1
        %v3049 = vsel %vm2713, %v3044, %v3048
        %v3051 = vshrl.u32 %v2613, 16
        %v3053 = vshll.u32 %v2613, 16
        %v3055 = vrot.slane %v3053, 1
        %v3056 = vor.u32 %v3051, %v3055
        %v3058 = vshll.u32 %v2709, 16
        %v3060 = vrot.slane %v3058, 1
        %v3061 = vsel %vm2713, %v3056, %v3060
        %v3063 = vshrl.u32 %v2614, 16
        %v3065 = vshll.u32 %v2614, 16
        %v3067 = vrot.slane %v3065, 1
        %v3068 = vor.u32 %v3063, %v3067
        %v3070 = vshll.u32 %v2710, 16
        %v3072 = vrot.slane %v3070, 1
        %v3073 = vsel %vm2713, %v3068, %v3072
        %v3075 = vshrl.u32 %v2615, 16
        %v3077 = vshll.u32 %v2615, 16
        %v3079 = vrot.slane %v3077, 1
        %v3080 = vor.u32 %v3075, %v3079
        %v3082 = vshll.u32 %v2711, 16
        %v3084 = vrot.slane %v3082, 1
        %v3085 = vsel %vm2713, %v3080, %v3084
        %v3087 = vshrl.u32 %v2616, 16
        %v3089 = vshll.u32 %v2616, 16
        %v3091 = vrot.slane %v3089, 1
        %v3092 = vor.u32 %v3087, %v3091
        %v3094 = vshll.u32 %v2712, 16
        %v3096 = vrot.slane %v3094, 1
        %v3097 = vsel %vm2713, %v3092, %v3096
        %3098 = vrot.lane.b32.xlu0 %v2725, 64
        %v3099 = vpop.permute.xlu0 %3098
        %3100 = vrot.lane.b32.xlu0 %v2737, 64
        %v3101 = vpop.permute.xlu0 %3100
        %3102 = vrot.lane.b32.xlu0 %v2749, 64
        %v3103 = vpop.permute.xlu0 %3102
        %3104 = vrot.lane.b32.xlu0 %v2761, 64
        %v3105 = vpop.permute.xlu0 %3104
        %3106 = vrot.lane.b32.xlu0 %v2773, 64
        %v3107 = vpop.permute.xlu0 %3106
        %3108 = vrot.lane.b32.xlu0 %v2785, 64
        %v3109 = vpop.permute.xlu0 %3108
        %3110 = vrot.lane.b32.xlu0 %v2797, 64
        %v3111 = vpop.permute.xlu0 %3110
        %3112 = vrot.lane.b32.xlu0 %v2809, 64
        %v3113 = vpop.permute.xlu0 %3112
        %3114 = vrot.lane.b32.xlu0 %v2821, 64
        %v3115 = vpop.permute.xlu0 %3114
        %3116 = vrot.lane.b32.xlu0 %v2833, 64
        %v3117 = vpop.permute.xlu0 %3116
        %3118 = vrot.lane.b32.xlu0 %v2845, 64
        %v3119 = vpop.permute.xlu0 %3118
        %3120 = vrot.lane.b32.xlu0 %v2857, 64
        %v3121 = vpop.permute.xlu0 %3120
        %3122 = vrot.lane.b32.xlu0 %v2869, 64
        %v3123 = vpop.permute.xlu0 %3122
        %3124 = vrot.lane.b32.xlu0 %v2881, 64
        %v3125 = vpop.permute.xlu0 %3124
        %3126 = vrot.lane.b32.xlu0 %v2893, 64
        %v3127 = vpop.permute.xlu0 %3126
        %3128 = vrot.lane.b32.xlu0 %v2905, 64
        %v3129 = vpop.permute.xlu0 %3128
        %3130 = vrot.lane.b32.xlu0 %v2917, 64
        %v3131 = vpop.permute.xlu0 %3130
        %3132 = vrot.lane.b32.xlu0 %v2929, 64
        %v3133 = vpop.permute.xlu0 %3132
        %3134 = vrot.lane.b32.xlu0 %v2941, 64
        %v3135 = vpop.permute.xlu0 %3134
        %3136 = vrot.lane.b32.xlu0 %v2953, 64
        %v3137 = vpop.permute.xlu0 %3136
        %3138 = vrot.lane.b32.xlu0 %v2965, 64
        %v3139 = vpop.permute.xlu0 %3138
        %3140 = vrot.lane.b32.xlu0 %v2977, 64
        %v3141 = vpop.permute.xlu0 %3140
        %3142 = vrot.lane.b32.xlu0 %v2989, 64
        %v3143 = vpop.permute.xlu0 %3142
        %3144 = vrot.lane.b32.xlu0 %v3001, 64
        %v3145 = vpop.permute.xlu0 %3144
        %3146 = vrot.lane.b32.xlu0 %v3013, 64
        %v3147 = vpop.permute.xlu0 %3146
        %3148 = vrot.lane.b32.xlu0 %v3025, 64
        %v3149 = vpop.permute.xlu0 %3148
        %3150 = vrot.lane.b32.xlu0 %v3037, 64
        %v3151 = vpop.permute.xlu0 %3150
        %3152 = vrot.lane.b32.xlu0 %v3049, 64
        %v3153 = vpop.permute.xlu0 %3152
        %3154 = vrot.lane.b32.xlu0 %v3061, 64
        %v3155 = vpop.permute.xlu0 %3154
        %3156 = vrot.lane.b32.xlu0 %v3073, 64
        %v3157 = vpop.permute.xlu0 %3156
        %3158 = vrot.lane.b32.xlu0 %v3085, 64
        %v3159 = vpop.permute.xlu0 %3158
        %3160 = vrot.lane.b32.xlu0 %v3097, 64
        %v3161 = vpop.permute.xlu0 %3160
        %v3194 = vunpack.c.l.b16 %v2168
        %v3195 = vunpack.c.l.b16 %v2169
        %v3196 = vunpack.c.l.b16 %v2170
        %v3197 = vunpack.c.l.b16 %v2171
        %v3198 = vunpack.c.l.b16 %v2172
        %v3199 = vunpack.c.l.b16 %v2173
        %v3200 = vunpack.c.l.b16 %v2174
        %v3201 = vunpack.c.l.b16 %v2175
        %v3202 = vunpack.c.l.b16 %v2176
        %v3203 = vunpack.c.l.b16 %v2177
        %v3204 = vunpack.c.l.b16 %v2178
        %v3205 = vunpack.c.l.b16 %v2179
        %v3206 = vunpack.c.l.b16 %v2180
        %v3207 = vunpack.c.l.b16 %v2181
        %v3208 = vunpack.c.l.b16 %v2182
        %v3209 = vunpack.c.l.b16 %v2183
        %v3210 = vunpack.c.l.b16 %v2184
        %v3211 = vunpack.c.l.b16 %v2185
        %v3212 = vunpack.c.l.b16 %v2186
        %v3213 = vunpack.c.l.b16 %v2187
        %v3214 = vunpack.c.l.b16 %v2188
        %v3215 = vunpack.c.l.b16 %v2189
        %v3216 = vunpack.c.l.b16 %v2190
        %v3217 = vunpack.c.l.b16 %v2191
        %v3218 = vunpack.c.l.b16 %v2192
        %v3219 = vunpack.c.l.b16 %v2193
        %v3220 = vunpack.c.l.b16 %v2194
        %v3221 = vunpack.c.l.b16 %v2195
        %v3222 = vunpack.c.l.b16 %v2196
        %v3223 = vunpack.c.l.b16 %v2197
        %v3224 = vunpack.c.l.b16 %v2198
        %v3225 = vunpack.c.l.b16 %v2199
        %v3226 = vpack.c.b16 %v2522, %v3194
        %v3227 = vpack.c.b16 %v2524, %v3195
        %v3228 = vpack.c.b16 %v2526, %v3196
        %v3229 = vpack.c.b16 %v2528, %v3197
        %v3230 = vpack.c.b16 %v2530, %v3198
        %v3231 = vpack.c.b16 %v2532, %v3199
        %v3232 = vpack.c.b16 %v2534, %v3200
        %v3233 = vpack.c.b16 %v2536, %v3201
        %v3234 = vpack.c.b16 %v2538, %v3202
        %v3235 = vpack.c.b16 %v2540, %v3203
        %v3236 = vpack.c.b16 %v2542, %v3204
        %v3237 = vpack.c.b16 %v2544, %v3205
        %v3238 = vpack.c.b16 %v2546, %v3206
        %v3239 = vpack.c.b16 %v2548, %v3207
        %v3240 = vpack.c.b16 %v2550, %v3208
        %v3241 = vpack.c.b16 %v2552, %v3209
        %v3242 = vpack.c.b16 %v2554, %v3210
        %v3243 = vpack.c.b16 %v2556, %v3211
        %v3244 = vpack.c.b16 %v2558, %v3212
        %v3245 = vpack.c.b16 %v2560, %v3213
        %v3246 = vpack.c.b16 %v2562, %v3214
        %v3247 = vpack.c.b16 %v2564, %v3215
        %v3248 = vpack.c.b16 %v2566, %v3216
        %v3249 = vpack.c.b16 %v2568, %v3217
        %v3250 = vpack.c.b16 %v2570, %v3218
        %v3251 = vpack.c.b16 %v2572, %v3219
        %v3252 = vpack.c.b16 %v2574, %v3220
        %v3253 = vpack.c.b16 %v2576, %v3221
        %v3254 = vpack.c.b16 %v2578, %v3222
        %v3255 = vpack.c.b16 %v2580, %v3223
        %v3256 = vpack.c.b16 %v2582, %v3224
        %v3257 = vpack.c.b16 %v2584, %v3225
        %vm3258 = vcmask 1046528
        %v3259 = vrot.slane %v3226, 1
        %v3260 = vrot.slane %v2681, 1
        %v3261 = vsel %vm3258, %v3259, %v3260
        %v3262 = vrot.slane %v3227, 1
        %v3263 = vrot.slane %v2682, 1
        %v3264 = vsel %vm3258, %v3262, %v3263
        %v3265 = vrot.slane %v3228, 1
        %v3266 = vrot.slane %v2683, 1
        %v3267 = vsel %vm3258, %v3265, %v3266
        %v3268 = vrot.slane %v3229, 1
        %v3269 = vrot.slane %v2684, 1
        %v3270 = vsel %vm3258, %v3268, %v3269
        %v3271 = vrot.slane %v3230, 1
        %v3272 = vrot.slane %v2685, 1
        %v3273 = vsel %vm3258, %v3271, %v3272
        %v3274 = vrot.slane %v3231, 1
        %v3275 = vrot.slane %v2686, 1
        %v3276 = vsel %vm3258, %v3274, %v3275
        %v3277 = vrot.slane %v3232, 1
        %v3278 = vrot.slane %v2687, 1
        %v3279 = vsel %vm3258, %v3277, %v3278
        %v3280 = vrot.slane %v3233, 1
        %v3281 = vrot.slane %v2688, 1
        %v3282 = vsel %vm3258, %v3280, %v3281
        %v3283 = vrot.slane %v3234, 1
        %v3284 = vrot.slane %v2689, 1
        %v3285 = vsel %vm3258, %v3283, %v3284
        %v3286 = vrot.slane %v3235, 1
        %v3287 = vrot.slane %v2690, 1
        %v3288 = vsel %vm3258, %v3286, %v3287
        %v3289 = vrot.slane %v3236, 1
        %v3290 = vrot.slane %v2691, 1
        %v3291 = vsel %vm3258, %v3289, %v3290
        %v3292 = vrot.slane %v3237, 1
        %v3293 = vrot.slane %v2692, 1
        %v3294 = vsel %vm3258, %v3292, %v3293
        %v3295 = vrot.slane %v3238, 1
        %v3296 = vrot.slane %v2693, 1
        %v3297 = vsel %vm3258, %v3295, %v3296
        %v3298 = vrot.slane %v3239, 1
        %v3299 = vrot.slane %v2694, 1
        %v3300 = vsel %vm3258, %v3298, %v3299
        %v3301 = vrot.slane %v3240, 1
        %v3302 = vrot.slane %v2695, 1
        %v3303 = vsel %vm3258, %v3301, %v3302
        %v3304 = vrot.slane %v3241, 1
        %v3305 = vrot.slane %v2696, 1
        %v3306 = vsel %vm3258, %v3304, %v3305
        %v3307 = vrot.slane %v3242, 1
        %v3308 = vrot.slane %v2697, 1
        %v3309 = vsel %vm3258, %v3307, %v3308
        %v3310 = vrot.slane %v3243, 1
        %v3311 = vrot.slane %v2698, 1
        %v3312 = vsel %vm3258, %v3310, %v3311
        %v3313 = vrot.slane %v3244, 1
        %v3314 = vrot.slane %v2699, 1
        %v3315 = vsel %vm3258, %v3313, %v3314
        %v3316 = vrot.slane %v3245, 1
        %v3317 = vrot.slane %v2700, 1
        %v3318 = vsel %vm3258, %v3316, %v3317
        %v3319 = vrot.slane %v3246, 1
        %v3320 = vrot.slane %v2701, 1
        %v3321 = vsel %vm3258, %v3319, %v3320
        %v3322 = vrot.slane %v3247, 1
        %v3323 = vrot.slane %v2702, 1
        %v3324 = vsel %vm3258, %v3322, %v3323
        %v3325 = vrot.slane %v3248, 1
        %v3326 = vrot.slane %v2703, 1
        %v3327 = vsel %vm3258, %v3325, %v3326
        %v3328 = vrot.slane %v3249, 1
        %v3329 = vrot.slane %v2704, 1
        %v3330 = vsel %vm3258, %v3328, %v3329
        %v3331 = vrot.slane %v3250, 1
        %v3332 = vrot.slane %v2705, 1
        %v3333 = vsel %vm3258, %v3331, %v3332
        %v3334 = vrot.slane %v3251, 1
        %v3335 = vrot.slane %v2706, 1
        %v3336 = vsel %vm3258, %v3334, %v3335
        %v3337 = vrot.slane %v3252, 1
        %v3338 = vrot.slane %v2707, 1
        %v3339 = vsel %vm3258, %v3337, %v3338
        %v3340 = vrot.slane %v3253, 1
        %v3341 = vrot.slane %v2708, 1
        %v3342 = vsel %vm3258, %v3340, %v3341
        %v3343 = vrot.slane %v3254, 1
        %v3344 = vrot.slane %v2709, 1
        %v3345 = vsel %vm3258, %v3343, %v3344
        %v3346 = vrot.slane %v3255, 1
        %v3347 = vrot.slane %v2710, 1
        %v3348 = vsel %vm3258, %v3346, %v3347
        %v3349 = vrot.slane %v3256, 1
        %v3350 = vrot.slane %v2711, 1
        %v3351 = vsel %vm3258, %v3349, %v3350
        %v3352 = vrot.slane %v3257, 1
        %v3353 = vrot.slane %v2712, 1
        %v3354 = vsel %vm3258, %v3352, %v3353
        %v3419 = vunpack.c.l.b16 %v2200
        %v3420 = vunpack.c.l.b16 %v2201
        %v3421 = vunpack.c.l.b16 %v2202
        %v3422 = vunpack.c.l.b16 %v2203
        %v3423 = vunpack.c.l.b16 %v2204
        %v3424 = vunpack.c.l.b16 %v2205
        %v3425 = vunpack.c.l.b16 %v2206
        %v3426 = vunpack.c.l.b16 %v2207
        %v3427 = vunpack.c.l.b16 %v2208
        %v3428 = vunpack.c.l.b16 %v2209
        %v3429 = vunpack.c.l.b16 %v2210
        %v3430 = vunpack.c.l.b16 %v2211
        %v3431 = vunpack.c.l.b16 %v2212
        %v3432 = vunpack.c.l.b16 %v2213
        %v3433 = vunpack.c.l.b16 %v2214
        %v3434 = vunpack.c.l.b16 %v2215
        %v3435 = vunpack.c.l.b16 %v2216
        %v3436 = vunpack.c.l.b16 %v2217
        %v3437 = vunpack.c.l.b16 %v2218
        %v3438 = vunpack.c.l.b16 %v2219
        %v3439 = vunpack.c.l.b16 %v2220
        %v3440 = vunpack.c.l.b16 %v2221
        %v3441 = vunpack.c.l.b16 %v2222
        %v3442 = vunpack.c.l.b16 %v2223
        %v3443 = vunpack.c.l.b16 %v2224
        %v3444 = vunpack.c.l.b16 %v2225
        %v3445 = vunpack.c.l.b16 %v2226
        %v3446 = vunpack.c.l.b16 %v2227
        %v3447 = vunpack.c.l.b16 %v2228
        %v3448 = vunpack.c.l.b16 %v2229
        %v3449 = vunpack.c.l.b16 %v2230
        %v3450 = vunpack.c.l.b16 %v2231
        %v3451 = vunpack.c.l.b16 %v2232
        %v3452 = vunpack.c.l.b16 %v2233
        %v3453 = vunpack.c.l.b16 %v2234
        %v3454 = vunpack.c.l.b16 %v2235
        %v3455 = vunpack.c.l.b16 %v2236
        %v3456 = vunpack.c.l.b16 %v2237
        %v3457 = vunpack.c.l.b16 %v2238
        %v3458 = vunpack.c.l.b16 %v2239
        %v3459 = vunpack.c.l.b16 %v2240
        %v3460 = vunpack.c.l.b16 %v2241
        %v3461 = vunpack.c.l.b16 %v2242
        %v3462 = vunpack.c.l.b16 %v2243
        %v3463 = vunpack.c.l.b16 %v2244
        %v3464 = vunpack.c.l.b16 %v2245
        %v3465 = vunpack.c.l.b16 %v2246
        %v3466 = vunpack.c.l.b16 %v2247
        %v3467 = vunpack.c.l.b16 %v2248
        %v3468 = vunpack.c.l.b16 %v2249
        %v3469 = vunpack.c.l.b16 %v2250
        %v3470 = vunpack.c.l.b16 %v2251
        %v3471 = vunpack.c.l.b16 %v2252
        %v3472 = vunpack.c.l.b16 %v2253
        %v3473 = vunpack.c.l.b16 %v2254
        %v3474 = vunpack.c.l.b16 %v2255
        %v3475 = vunpack.c.l.b16 %v2256
        %v3476 = vunpack.c.l.b16 %v2257
        %v3477 = vunpack.c.l.b16 %v2258
        %v3478 = vunpack.c.l.b16 %v2259
        %v3479 = vunpack.c.l.b16 %v2260
        %v3480 = vunpack.c.l.b16 %v2261
        %v3481 = vunpack.c.l.b16 %v2262
        %v3482 = vunpack.c.l.b16 %v2263
        %v3483 = vpack.c.b16 %v3420, %v3419
        %v3484 = vpack.c.b16 %v3422, %v3421
        %v3485 = vpack.c.b16 %v3424, %v3423
        %v3486 = vpack.c.b16 %v3426, %v3425
        %v3487 = vpack.c.b16 %v3428, %v3427
        %v3488 = vpack.c.b16 %v3430, %v3429
        %v3489 = vpack.c.b16 %v3432, %v3431
        %v3490 = vpack.c.b16 %v3434, %v3433
        %v3491 = vpack.c.b16 %v3436, %v3435
        %v3492 = vpack.c.b16 %v3438, %v3437
        %v3493 = vpack.c.b16 %v3440, %v3439
        %v3494 = vpack.c.b16 %v3442, %v3441
        %v3495 = vpack.c.b16 %v3444, %v3443
        %v3496 = vpack.c.b16 %v3446, %v3445
        %v3497 = vpack.c.b16 %v3448, %v3447
        %v3498 = vpack.c.b16 %v3450, %v3449
        %v3499 = vpack.c.b16 %v3452, %v3451
        %v3500 = vpack.c.b16 %v3454, %v3453
        %v3501 = vpack.c.b16 %v3456, %v3455
        %v3502 = vpack.c.b16 %v3458, %v3457
        %v3503 = vpack.c.b16 %v3460, %v3459
        %v3504 = vpack.c.b16 %v3462, %v3461
        %v3505 = vpack.c.b16 %v3464, %v3463
        %v3506 = vpack.c.b16 %v3466, %v3465
        %v3507 = vpack.c.b16 %v3468, %v3467
        %v3508 = vpack.c.b16 %v3470, %v3469
        %v3509 = vpack.c.b16 %v3472, %v3471
        %v3510 = vpack.c.b16 %v3474, %v3473
        %v3511 = vpack.c.b16 %v3476, %v3475
        %v3512 = vpack.c.b16 %v3478, %v3477
        %v3513 = vpack.c.b16 %v3480, %v3479
        %v3514 = vpack.c.b16 %v3482, %v3481
        %3515 = vrot.lane.b32.xlu0 %v3483, 64
        %v3516 = vpop.permute.xlu0 %3515
        %3517 = vrot.lane.b32.xlu0 %v3484, 64
        %v3518 = vpop.permute.xlu0 %3517
        %3519 = vrot.lane.b32.xlu0 %v3485, 64
        %v3520 = vpop.permute.xlu0 %3519
        %3521 = vrot.lane.b32.xlu0 %v3486, 64
        %v3522 = vpop.permute.xlu0 %3521
        %3523 = vrot.lane.b32.xlu0 %v3487, 64
        %v3524 = vpop.permute.xlu0 %3523
        %3525 = vrot.lane.b32.xlu0 %v3488, 64
        %v3526 = vpop.permute.xlu0 %3525
        %3527 = vrot.lane.b32.xlu0 %v3489, 64
        %v3528 = vpop.permute.xlu0 %3527
        %3529 = vrot.lane.b32.xlu0 %v3490, 64
        %v3530 = vpop.permute.xlu0 %3529
        %3531 = vrot.lane.b32.xlu0 %v3491, 64
        %v3532 = vpop.permute.xlu0 %3531
        %3533 = vrot.lane.b32.xlu0 %v3492, 64
        %v3534 = vpop.permute.xlu0 %3533
        %3535 = vrot.lane.b32.xlu0 %v3493, 64
        %v3536 = vpop.permute.xlu0 %3535
        %3537 = vrot.lane.b32.xlu0 %v3494, 64
        %v3538 = vpop.permute.xlu0 %3537
        %3539 = vrot.lane.b32.xlu0 %v3495, 64
        %v3540 = vpop.permute.xlu0 %3539
        %3541 = vrot.lane.b32.xlu0 %v3496, 64
        %v3542 = vpop.permute.xlu0 %3541
        %3543 = vrot.lane.b32.xlu0 %v3497, 64
        %v3544 = vpop.permute.xlu0 %3543
        %3545 = vrot.lane.b32.xlu0 %v3498, 64
        %v3546 = vpop.permute.xlu0 %3545
        %3547 = vrot.lane.b32.xlu0 %v3499, 64
        %v3548 = vpop.permute.xlu0 %3547
        %3549 = vrot.lane.b32.xlu0 %v3500, 64
        %v3550 = vpop.permute.xlu0 %3549
        %3551 = vrot.lane.b32.xlu0 %v3501, 64
        %v3552 = vpop.permute.xlu0 %3551
        %3553 = vrot.lane.b32.xlu0 %v3502, 64
        %v3554 = vpop.permute.xlu0 %3553
        %3555 = vrot.lane.b32.xlu0 %v3503, 64
        %v3556 = vpop.permute.xlu0 %3555
        %3557 = vrot.lane.b32.xlu0 %v3504, 64
        %v3558 = vpop.permute.xlu0 %3557
        %3559 = vrot.lane.b32.xlu0 %v3505, 64
        %v3560 = vpop.permute.xlu0 %3559
        %3561 = vrot.lane.b32.xlu0 %v3506, 64
        %v3562 = vpop.permute.xlu0 %3561
        %3563 = vrot.lane.b32.xlu0 %v3507, 64
        %v3564 = vpop.permute.xlu0 %3563
        %3565 = vrot.lane.b32.xlu0 %v3508, 64
        %v3566 = vpop.permute.xlu0 %3565
        %3567 = vrot.lane.b32.xlu0 %v3509, 64
        %v3568 = vpop.permute.xlu0 %3567
        %3569 = vrot.lane.b32.xlu0 %v3510, 64
        %v3570 = vpop.permute.xlu0 %3569
        %3571 = vrot.lane.b32.xlu0 %v3511, 64
        %v3572 = vpop.permute.xlu0 %3571
        %3573 = vrot.lane.b32.xlu0 %v3512, 64
        %v3574 = vpop.permute.xlu0 %3573
        %3575 = vrot.lane.b32.xlu0 %v3513, 64
        %v3576 = vpop.permute.xlu0 %3575
        %3577 = vrot.lane.b32.xlu0 %v3514, 64
        %v3578 = vpop.permute.xlu0 %3577
        %v3611 = vunpack.c.l.b16 %v2264
        %v3612 = vunpack.c.l.b16 %v2265
        %v3613 = vunpack.c.l.b16 %v2266
        %v3614 = vunpack.c.l.b16 %v2267
        %v3615 = vunpack.c.l.b16 %v2268
        %v3616 = vunpack.c.l.b16 %v2269
        %v3617 = vunpack.c.l.b16 %v2270
        %v3618 = vunpack.c.l.b16 %v2271
        %v3619 = vunpack.c.l.b16 %v2272
        %v3620 = vunpack.c.l.b16 %v2273
        %v3621 = vunpack.c.l.b16 %v2274
        %v3622 = vunpack.c.l.b16 %v2275
        %v3623 = vunpack.c.l.b16 %v2276
        %v3624 = vunpack.c.l.b16 %v2277
        %v3625 = vunpack.c.l.b16 %v2278
        %v3626 = vunpack.c.l.b16 %v2279
        %v3627 = vunpack.c.l.b16 %v2280
        %v3628 = vunpack.c.l.b16 %v2281
        %v3629 = vunpack.c.l.b16 %v2282
        %v3630 = vunpack.c.l.b16 %v2283
        %v3631 = vunpack.c.l.b16 %v2284
        %v3632 = vunpack.c.l.b16 %v2285
        %v3633 = vunpack.c.l.b16 %v2286
        %v3634 = vunpack.c.l.b16 %v2287
        %v3635 = vunpack.c.l.b16 %v2288
        %v3636 = vunpack.c.l.b16 %v2289
        %v3637 = vunpack.c.l.b16 %v2290
        %v3638 = vunpack.c.l.b16 %v2291
        %v3639 = vunpack.c.l.b16 %v2292
        %v3640 = vunpack.c.l.b16 %v2293
        %v3641 = vunpack.c.l.b16 %v2294
        %v3642 = vunpack.c.l.b16 %v2295
        %v3643 = vpack.c.b16 %v3611, %v3611
        %v3644 = vpack.c.b16 %v3612, %v3612
        %v3645 = vpack.c.b16 %v3613, %v3613
        %v3646 = vpack.c.b16 %v3614, %v3614
        %v3647 = vpack.c.b16 %v3615, %v3615
        %v3648 = vpack.c.b16 %v3616, %v3616
        %v3649 = vpack.c.b16 %v3617, %v3617
        %v3650 = vpack.c.b16 %v3618, %v3618
        %v3651 = vpack.c.b16 %v3619, %v3619
        %v3652 = vpack.c.b16 %v3620, %v3620
        %v3653 = vpack.c.b16 %v3621, %v3621
        %v3654 = vpack.c.b16 %v3622, %v3622
        %v3655 = vpack.c.b16 %v3623, %v3623
        %v3656 = vpack.c.b16 %v3624, %v3624
        %v3657 = vpack.c.b16 %v3625, %v3625
        %v3658 = vpack.c.b16 %v3626, %v3626
        %v3659 = vpack.c.b16 %v3627, %v3627
        %v3660 = vpack.c.b16 %v3628, %v3628
        %v3661 = vpack.c.b16 %v3629, %v3629
        %v3662 = vpack.c.b16 %v3630, %v3630
        %v3663 = vpack.c.b16 %v3631, %v3631
        %v3664 = vpack.c.b16 %v3632, %v3632
        %v3665 = vpack.c.b16 %v3633, %v3633
        %v3666 = vpack.c.b16 %v3634, %v3634
        %v3667 = vpack.c.b16 %v3635, %v3635
        %v3668 = vpack.c.b16 %v3636, %v3636
        %v3669 = vpack.c.b16 %v3637, %v3637
        %v3670 = vpack.c.b16 %v3638, %v3638
        %v3671 = vpack.c.b16 %v3639, %v3639
        %v3672 = vpack.c.b16 %v3640, %v3640
        %v3673 = vpack.c.b16 %v3641, %v3641
        %v3674 = vpack.c.b16 %v3642, %v3642
        %v3676 = vshrl.u32 %v3483, 16
        %v3678 = vshll.u32 %v3483, 16
        %v3680 = vrot.slane %v3678, 1
        %v3681 = vor.u32 %v3676, %v3680
        %v3683 = vshll.u32 %v3643, 16
        %v3685 = vrot.slane %v3683, 1
        %v3686 = vsel %vm2713, %v3681, %v3685
        %v3688 = vshrl.u32 %v3484, 16
        %v3690 = vshll.u32 %v3484, 16
        %v3692 = vrot.slane %v3690, 1
        %v3693 = vor.u32 %v3688, %v3692
        %v3695 = vshll.u32 %v3644, 16
        %v3697 = vrot.slane %v3695, 1
        %v3698 = vsel %vm2713, %v3693, %v3697
        %v3700 = vshrl.u32 %v3485, 16
        %v3702 = vshll.u32 %v3485, 16
        %v3704 = vrot.slane %v3702, 1
        %v3705 = vor.u32 %v3700, %v3704
        %v3707 = vshll.u32 %v3645, 16
        %v3709 = vrot.slane %v3707, 1
        %v3710 = vsel %vm2713, %v3705, %v3709
        %v3712 = vshrl.u32 %v3486, 16
        %v3714 = vshll.u32 %v3486, 16
        %v3716 = vrot.slane %v3714, 1
        %v3717 = vor.u32 %v3712, %v3716
        %v3719 = vshll.u32 %v3646, 16
        %v3721 = vrot.slane %v3719, 1
        %v3722 = vsel %vm2713, %v3717, %v3721
        %v3724 = vshrl.u32 %v3487, 16
        %v3726 = vshll.u32 %v3487, 16
        %v3728 = vrot.slane %v3726, 1
        %v3729 = vor.u32 %v3724, %v3728
        %v3731 = vshll.u32 %v3647, 16
        %v3733 = vrot.slane %v3731, 1
        %v3734 = vsel %vm2713, %v3729, %v3733
        %v3736 = vshrl.u32 %v3488, 16
        %v3738 = vshll.u32 %v3488, 16
        %v3740 = vrot.slane %v3738, 1
        %v3741 = vor.u32 %v3736, %v3740
        %v3743 = vshll.u32 %v3648, 16
        %v3745 = vrot.slane %v3743, 1
        %v3746 = vsel %vm2713, %v3741, %v3745
        %v3748 = vshrl.u32 %v3489, 16
        %v3750 = vshll.u32 %v3489, 16
        %v3752 = vrot.slane %v3750, 1
        %v3753 = vor.u32 %v3748, %v3752
        %v3755 = vshll.u32 %v3649, 16
        %v3757 = vrot.slane %v3755, 1
        %v3758 = vsel %vm2713, %v3753, %v3757
        %v3760 = vshrl.u32 %v3490, 16
        %v3762 = vshll.u32 %v3490, 16
        %v3764 = vrot.slane %v3762, 1
        %v3765 = vor.u32 %v3760, %v3764
        %v3767 = vshll.u32 %v3650, 16
        %v3769 = vrot.slane %v3767, 1
        %v3770 = vsel %vm2713, %v3765, %v3769
        %v3772 = vshrl.u32 %v3491, 16
        %v3774 = vshll.u32 %v3491, 16
        %v3776 = vrot.slane %v3774, 1
        %v3777 = vor.u32 %v3772, %v3776
        %v3779 = vshll.u32 %v3651, 16
        %v3781 = vrot.slane %v3779, 1
        %v3782 = vsel %vm2713, %v3777, %v3781
        %v3784 = vshrl.u32 %v3492, 16
        %v3786 = vshll.u32 %v3492, 16
        %v3788 = vrot.slane %v3786, 1
        %v3789 = vor.u32 %v3784, %v3788
        %v3791 = vshll.u32 %v3652, 16
        %v3793 = vrot.slane %v3791, 1
        %v3794 = vsel %vm2713, %v3789, %v3793
        %v3796 = vshrl.u32 %v3493, 16
        %v3798 = vshll.u32 %v3493, 16
        %v3800 = vrot.slane %v3798, 1
        %v3801 = vor.u32 %v3796, %v3800
        %v3803 = vshll.u32 %v3653, 16
        %v3805 = vrot.slane %v3803, 1
        %v3806 = vsel %vm2713, %v3801, %v3805
        %v3808 = vshrl.u32 %v3494, 16
        %v3810 = vshll.u32 %v3494, 16
        %v3812 = vrot.slane %v3810, 1
        %v3813 = vor.u32 %v3808, %v3812
        %v3815 = vshll.u32 %v3654, 16
        %v3817 = vrot.slane %v3815, 1
        %v3818 = vsel %vm2713, %v3813, %v3817
        %v3820 = vshrl.u32 %v3495, 16
        %v3822 = vshll.u32 %v3495, 16
        %v3824 = vrot.slane %v3822, 1
        %v3825 = vor.u32 %v3820, %v3824
        %v3827 = vshll.u32 %v3655, 16
        %v3829 = vrot.slane %v3827, 1
        %v3830 = vsel %vm2713, %v3825, %v3829
        %v3832 = vshrl.u32 %v3496, 16
        %v3834 = vshll.u32 %v3496, 16
        %v3836 = vrot.slane %v3834, 1
        %v3837 = vor.u32 %v3832, %v3836
        %v3839 = vshll.u32 %v3656, 16
        %v3841 = vrot.slane %v3839, 1
        %v3842 = vsel %vm2713, %v3837, %v3841
        %v3844 = vshrl.u32 %v3497, 16
        %v3846 = vshll.u32 %v3497, 16
        %v3848 = vrot.slane %v3846, 1
        %v3849 = vor.u32 %v3844, %v3848
        %v3851 = vshll.u32 %v3657, 16
        %v3853 = vrot.slane %v3851, 1
        %v3854 = vsel %vm2713, %v3849, %v3853
        %v3856 = vshrl.u32 %v3498, 16
        %v3858 = vshll.u32 %v3498, 16
        %v3860 = vrot.slane %v3858, 1
        %v3861 = vor.u32 %v3856, %v3860
        %v3863 = vshll.u32 %v3658, 16
        %v3865 = vrot.slane %v3863, 1
        %v3866 = vsel %vm2713, %v3861, %v3865
        %v3868 = vshrl.u32 %v3499, 16
        %v3870 = vshll.u32 %v3499, 16
        %v3872 = vrot.slane %v3870, 1
        %v3873 = vor.u32 %v3868, %v3872
        %v3875 = vshll.u32 %v3659, 16
        %v3877 = vrot.slane %v3875, 1
        %v3878 = vsel %vm2713, %v3873, %v3877
        %v3880 = vshrl.u32 %v3500, 16
        %v3882 = vshll.u32 %v3500, 16
        %v3884 = vrot.slane %v3882, 1
        %v3885 = vor.u32 %v3880, %v3884
        %v3887 = vshll.u32 %v3660, 16
        %v3889 = vrot.slane %v3887, 1
        %v3890 = vsel %vm2713, %v3885, %v3889
        %v3892 = vshrl.u32 %v3501, 16
        %v3894 = vshll.u32 %v3501, 16
        %v3896 = vrot.slane %v3894, 1
        %v3897 = vor.u32 %v3892, %v3896
        %v3899 = vshll.u32 %v3661, 16
        %v3901 = vrot.slane %v3899, 1
        %v3902 = vsel %vm2713, %v3897, %v3901
        %v3904 = vshrl.u32 %v3502, 16
        %v3906 = vshll.u32 %v3502, 16
        %v3908 = vrot.slane %v3906, 1
        %v3909 = vor.u32 %v3904, %v3908
        %v3911 = vshll.u32 %v3662, 16
        %v3913 = vrot.slane %v3911, 1
        %v3914 = vsel %vm2713, %v3909, %v3913
        %v3916 = vshrl.u32 %v3503, 16
        %v3918 = vshll.u32 %v3503, 16
        %v3920 = vrot.slane %v3918, 1
        %v3921 = vor.u32 %v3916, %v3920
        %v3923 = vshll.u32 %v3663, 16
        %v3925 = vrot.slane %v3923, 1
        %v3926 = vsel %vm2713, %v3921, %v3925
        %v3928 = vshrl.u32 %v3504, 16
        %v3930 = vshll.u32 %v3504, 16
        %v3932 = vrot.slane %v3930, 1
        %v3933 = vor.u32 %v3928, %v3932
        %v3935 = vshll.u32 %v3664, 16
        %v3937 = vrot.slane %v3935, 1
        %v3938 = vsel %vm2713, %v3933, %v3937
        %v3940 = vshrl.u32 %v3505, 16
        %v3942 = vshll.u32 %v3505, 16
        %v3944 = vrot.slane %v3942, 1
        %v3945 = vor.u32 %v3940, %v3944
        %v3947 = vshll.u32 %v3665, 16
        %v3949 = vrot.slane %v3947, 1
        %v3950 = vsel %vm2713, %v3945, %v3949
        %v3952 = vshrl.u32 %v3506, 16
        %v3954 = vshll.u32 %v3506, 16
        %v3956 = vrot.slane %v3954, 1
        %v3957 = vor.u32 %v3952, %v3956
        %v3959 = vshll.u32 %v3666, 16
        %v3961 = vrot.slane %v3959, 1
        %v3962 = vsel %vm2713, %v3957, %v3961
        %v3964 = vshrl.u32 %v3507, 16
        %v3966 = vshll.u32 %v3507, 16
        %v3968 = vrot.slane %v3966, 1
        %v3969 = vor.u32 %v3964, %v3968
        %v3971 = vshll.u32 %v3667, 16
        %v3973 = vrot.slane %v3971, 1
        %v3974 = vsel %vm2713, %v3969, %v3973
        %v3976 = vshrl.u32 %v3508, 16
        %v3978 = vshll.u32 %v3508, 16
        %v3980 = vrot.slane %v3978, 1
        %v3981 = vor.u32 %v3976, %v3980
        %v3983 = vshll.u32 %v3668, 16
        %v3985 = vrot.slane %v3983, 1
        %v3986 = vsel %vm2713, %v3981, %v3985
        %v3988 = vshrl.u32 %v3509, 16
        %v3990 = vshll.u32 %v3509, 16
        %v3992 = vrot.slane %v3990, 1
        %v3993 = vor.u32 %v3988, %v3992
        %v3995 = vshll.u32 %v3669, 16
        %v3997 = vrot.slane %v3995, 1
        %v3998 = vsel %vm2713, %v3993, %v3997
        %v4000 = vshrl.u32 %v3510, 16
        %v4002 = vshll.u32 %v3510, 16
        %v4004 = vrot.slane %v4002, 1
        %v4005 = vor.u32 %v4000, %v4004
        %v4007 = vshll.u32 %v3670, 16
        %v4009 = vrot.slane %v4007, 1
        %v4010 = vsel %vm2713, %v4005, %v4009
        %v4012 = vshrl.u32 %v3511, 16
        %v4014 = vshll.u32 %v3511, 16
        %v4016 = vrot.slane %v4014, 1
        %v4017 = vor.u32 %v4012, %v4016
        %v4019 = vshll.u32 %v3671, 16
        %v4021 = vrot.slane %v4019, 1
        %v4022 = vsel %vm2713, %v4017, %v4021
        %v4024 = vshrl.u32 %v3512, 16
        %v4026 = vshll.u32 %v3512, 16
        %v4028 = vrot.slane %v4026, 1
        %v4029 = vor.u32 %v4024, %v4028
        %v4031 = vshll.u32 %v3672, 16
        %v4033 = vrot.slane %v4031, 1
        %v4034 = vsel %vm2713, %v4029, %v4033
        %v4036 = vshrl.u32 %v3513, 16
        %v4038 = vshll.u32 %v3513, 16
        %v4040 = vrot.slane %v4038, 1
        %v4041 = vor.u32 %v4036, %v4040
        %v4043 = vshll.u32 %v3673, 16
        %v4045 = vrot.slane %v4043, 1
        %v4046 = vsel %vm2713, %v4041, %v4045
        %v4048 = vshrl.u32 %v3514, 16
        %v4050 = vshll.u32 %v3514, 16
        %v4052 = vrot.slane %v4050, 1
        %v4053 = vor.u32 %v4048, %v4052
        %v4055 = vshll.u32 %v3674, 16
        %v4057 = vrot.slane %v4055, 1
        %v4058 = vsel %vm2713, %v4053, %v4057
        %v4091 = vunpack.c.l.b16 %v2296
        %v4092 = vunpack.c.l.b16 %v2297
        %v4093 = vunpack.c.l.b16 %v2298
        %v4094 = vunpack.c.l.b16 %v2299
        %v4095 = vunpack.c.l.b16 %v2300
        %v4096 = vunpack.c.l.b16 %v2301
        %v4097 = vunpack.c.l.b16 %v2302
        %v4098 = vunpack.c.l.b16 %v2303
        %v4099 = vunpack.c.l.b16 %v2304
        %v4100 = vunpack.c.l.b16 %v2305
        %v4101 = vunpack.c.l.b16 %v2306
        %v4102 = vunpack.c.l.b16 %v2307
        %v4103 = vunpack.c.l.b16 %v2308
        %v4104 = vunpack.c.l.b16 %v2309
        %v4105 = vunpack.c.l.b16 %v2310
        %v4106 = vunpack.c.l.b16 %v2311
        %v4107 = vunpack.c.l.b16 %v2312
        %v4108 = vunpack.c.l.b16 %v2313
        %v4109 = vunpack.c.l.b16 %v2314
        %v4110 = vunpack.c.l.b16 %v2315
        %v4111 = vunpack.c.l.b16 %v2316
        %v4112 = vunpack.c.l.b16 %v2317
        %v4113 = vunpack.c.l.b16 %v2318
        %v4114 = vunpack.c.l.b16 %v2319
        %v4115 = vunpack.c.l.b16 %v2320
        %v4116 = vunpack.c.l.b16 %v2321
        %v4117 = vunpack.c.l.b16 %v2322
        %v4118 = vunpack.c.l.b16 %v2323
        %v4119 = vunpack.c.l.b16 %v2324
        %v4120 = vunpack.c.l.b16 %v2325
        %v4121 = vunpack.c.l.b16 %v2326
        %v4122 = vunpack.c.l.b16 %v2327
        %v4123 = vpack.c.b16 %v3420, %v4091
        %v4124 = vpack.c.b16 %v3422, %v4092
        %v4125 = vpack.c.b16 %v3424, %v4093
        %v4126 = vpack.c.b16 %v3426, %v4094
        %v4127 = vpack.c.b16 %v3428, %v4095
        %v4128 = vpack.c.b16 %v3430, %v4096
        %v4129 = vpack.c.b16 %v3432, %v4097
        %v4130 = vpack.c.b16 %v3434, %v4098
        %v4131 = vpack.c.b16 %v3436, %v4099
        %v4132 = vpack.c.b16 %v3438, %v4100
        %v4133 = vpack.c.b16 %v3440, %v4101
        %v4134 = vpack.c.b16 %v3442, %v4102
        %v4135 = vpack.c.b16 %v3444, %v4103
        %v4136 = vpack.c.b16 %v3446, %v4104
        %v4137 = vpack.c.b16 %v3448, %v4105
        %v4138 = vpack.c.b16 %v3450, %v4106
        %v4139 = vpack.c.b16 %v3452, %v4107
        %v4140 = vpack.c.b16 %v3454, %v4108
        %v4141 = vpack.c.b16 %v3456, %v4109
        %v4142 = vpack.c.b16 %v3458, %v4110
        %v4143 = vpack.c.b16 %v3460, %v4111
        %v4144 = vpack.c.b16 %v3462, %v4112
        %v4145 = vpack.c.b16 %v3464, %v4113
        %v4146 = vpack.c.b16 %v3466, %v4114
        %v4147 = vpack.c.b16 %v3468, %v4115
        %v4148 = vpack.c.b16 %v3470, %v4116
        %v4149 = vpack.c.b16 %v3472, %v4117
        %v4150 = vpack.c.b16 %v3474, %v4118
        %v4151 = vpack.c.b16 %v3476, %v4119
        %v4152 = vpack.c.b16 %v3478, %v4120
        %v4153 = vpack.c.b16 %v3480, %v4121
        %v4154 = vpack.c.b16 %v3482, %v4122
        %v4155 = vrot.slane %v4123, 1
        %v4156 = vrot.slane %v3643, 1
        %v4157 = vsel %vm3258, %v4155, %v4156
        %v4158 = vrot.slane %v4124, 1
        %v4159 = vrot.slane %v3644, 1
        %v4160 = vsel %vm3258, %v4158, %v4159
        %v4161 = vrot.slane %v4125, 1
        %v4162 = vrot.slane %v3645, 1
        %v4163 = vsel %vm3258, %v4161, %v4162
        %v4164 = vrot.slane %v4126, 1
        %v4165 = vrot.slane %v3646, 1
        %v4166 = vsel %vm3258, %v4164, %v4165
        %v4167 = vrot.slane %v4127, 1
        %v4168 = vrot.slane %v3647, 1
        %v4169 = vsel %vm3258, %v4167, %v4168
        %v4170 = vrot.slane %v4128, 1
        %v4171 = vrot.slane %v3648, 1
        %v4172 = vsel %vm3258, %v4170, %v4171
        %v4173 = vrot.slane %v4129, 1
        %v4174 = vrot.slane %v3649, 1
        %v4175 = vsel %vm3258, %v4173, %v4174
        %v4176 = vrot.slane %v4130, 1
        %v4177 = vrot.slane %v3650, 1
        %v4178 = vsel %vm3258, %v4176, %v4177
        %v4179 = vrot.slane %v4131, 1
        %v4180 = vrot.slane %v3651, 1
        %v4181 = vsel %vm3258, %v4179, %v4180
        %v4182 = vrot.slane %v4132, 1
        %v4183 = vrot.slane %v3652, 1
        %v4184 = vsel %vm3258, %v4182, %v4183
        %v4185 = vrot.slane %v4133, 1
        %v4186 = vrot.slane %v3653, 1
        %v4187 = vsel %vm3258, %v4185, %v4186
        %v4188 = vrot.slane %v4134, 1
        %v4189 = vrot.slane %v3654, 1
        %v4190 = vsel %vm3258, %v4188, %v4189
        %v4191 = vrot.slane %v4135, 1
        %v4192 = vrot.slane %v3655, 1
        %v4193 = vsel %vm3258, %v4191, %v4192
        %v4194 = vrot.slane %v4136, 1
        %v4195 = vrot.slane %v3656, 1
        %v4196 = vsel %vm3258, %v4194, %v4195
        %v4197 = vrot.slane %v4137, 1
        %v4198 = vrot.slane %v3657, 1
        %v4199 = vsel %vm3258, %v4197, %v4198
        %v4200 = vrot.slane %v4138, 1
        %v4201 = vrot.slane %v3658, 1
        %v4202 = vsel %vm3258, %v4200, %v4201
        %v4203 = vrot.slane %v4139, 1
        %v4204 = vrot.slane %v3659, 1
        %v4205 = vsel %vm3258, %v4203, %v4204
        %v4206 = vrot.slane %v4140, 1
        %v4207 = vrot.slane %v3660, 1
        %v4208 = vsel %vm3258, %v4206, %v4207
        %v4209 = vrot.slane %v4141, 1
        %v4210 = vrot.slane %v3661, 1
        %v4211 = vsel %vm3258, %v4209, %v4210
        %v4212 = vrot.slane %v4142, 1
        %v4213 = vrot.slane %v3662, 1
        %v4214 = vsel %vm3258, %v4212, %v4213
        %v4215 = vrot.slane %v4143, 1
        %v4216 = vrot.slane %v3663, 1
        %v4217 = vsel %vm3258, %v4215, %v4216
        %v4218 = vrot.slane %v4144, 1
        %v4219 = vrot.slane %v3664, 1
        %v4220 = vsel %vm3258, %v4218, %v4219
        %v4221 = vrot.slane %v4145, 1
        %v4222 = vrot.slane %v3665, 1
        %v4223 = vsel %vm3258, %v4221, %v4222
        %v4224 = vrot.slane %v4146, 1
        %v4225 = vrot.slane %v3666, 1
        %v4226 = vsel %vm3258, %v4224, %v4225
        %v4227 = vrot.slane %v4147, 1
        %v4228 = vrot.slane %v3667, 1
        %v4229 = vsel %vm3258, %v4227, %v4228
        %v4230 = vrot.slane %v4148, 1
        %v4231 = vrot.slane %v3668, 1
        %v4232 = vsel %vm3258, %v4230, %v4231
        %v4233 = vrot.slane %v4149, 1
        %v4234 = vrot.slane %v3669, 1
        %v4235 = vsel %vm3258, %v4233, %v4234
        %v4236 = vrot.slane %v4150, 1
        %v4237 = vrot.slane %v3670, 1
        %v4238 = vsel %vm3258, %v4236, %v4237
        %v4239 = vrot.slane %v4151, 1
        %v4240 = vrot.slane %v3671, 1
        %v4241 = vsel %vm3258, %v4239, %v4240
        %v4242 = vrot.slane %v4152, 1
        %v4243 = vrot.slane %v3672, 1
        %v4244 = vsel %vm3258, %v4242, %v4243
        %v4245 = vrot.slane %v4153, 1
        %v4246 = vrot.slane %v3673, 1
        %v4247 = vsel %vm3258, %v4245, %v4246
        %v4248 = vrot.slane %v4154, 1
        %v4249 = vrot.slane %v3674, 1
        %v4250 = vsel %vm3258, %v4248, %v4249
        %4251 = vrot.lane.b32.xlu0 %v4157, 64
        %v4252 = vpop.permute.xlu0 %4251
        %4253 = vrot.lane.b32.xlu0 %v4160, 64
        %v4254 = vpop.permute.xlu0 %4253
        %4255 = vrot.lane.b32.xlu0 %v4163, 64
        %v4256 = vpop.permute.xlu0 %4255
        %4257 = vrot.lane.b32.xlu0 %v4166, 64
        %v4258 = vpop.permute.xlu0 %4257
        %4259 = vrot.lane.b32.xlu0 %v4169, 64
        %v4260 = vpop.permute.xlu0 %4259
        %4261 = vrot.lane.b32.xlu0 %v4172, 64
        %v4262 = vpop.permute.xlu0 %4261
        %4263 = vrot.lane.b32.xlu0 %v4175, 64
        %v4264 = vpop.permute.xlu0 %4263
        %4265 = vrot.lane.b32.xlu0 %v4178, 64
        %v4266 = vpop.permute.xlu0 %4265
        %4267 = vrot.lane.b32.xlu0 %v4181, 64
        %v4268 = vpop.permute.xlu0 %4267
        %4269 = vrot.lane.b32.xlu0 %v4184, 64
        %v4270 = vpop.permute.xlu0 %4269
        %4271 = vrot.lane.b32.xlu0 %v4187, 64
        %v4272 = vpop.permute.xlu0 %4271
        %4273 = vrot.lane.b32.xlu0 %v4190, 64
        %v4274 = vpop.permute.xlu0 %4273
        %4275 = vrot.lane.b32.xlu0 %v4193, 64
        %v4276 = vpop.permute.xlu0 %4275
        %4277 = vrot.lane.b32.xlu0 %v4196, 64
        %v4278 = vpop.permute.xlu0 %4277
        %4279 = vrot.lane.b32.xlu0 %v4199, 64
        %v4280 = vpop.permute.xlu0 %4279
        %4281 = vrot.lane.b32.xlu0 %v4202, 64
        %v4282 = vpop.permute.xlu0 %4281
        %4283 = vrot.lane.b32.xlu0 %v4205, 64
        %v4284 = vpop.permute.xlu0 %4283
        %4285 = vrot.lane.b32.xlu0 %v4208, 64
        %v4286 = vpop.permute.xlu0 %4285
        %4287 = vrot.lane.b32.xlu0 %v4211, 64
        %v4288 = vpop.permute.xlu0 %4287
        %4289 = vrot.lane.b32.xlu0 %v4214, 64
        %v4290 = vpop.permute.xlu0 %4289
        %4291 = vrot.lane.b32.xlu0 %v4217, 64
        %v4292 = vpop.permute.xlu0 %4291
        %4293 = vrot.lane.b32.xlu0 %v4220, 64
        %v4294 = vpop.permute.xlu0 %4293
        %4295 = vrot.lane.b32.xlu0 %v4223, 64
        %v4296 = vpop.permute.xlu0 %4295
        %4297 = vrot.lane.b32.xlu0 %v4226, 64
        %v4298 = vpop.permute.xlu0 %4297
        %4299 = vrot.lane.b32.xlu0 %v4229, 64
        %v4300 = vpop.permute.xlu0 %4299
        %4301 = vrot.lane.b32.xlu0 %v4232, 64
        %v4302 = vpop.permute.xlu0 %4301
        %4303 = vrot.lane.b32.xlu0 %v4235, 64
        %v4304 = vpop.permute.xlu0 %4303
        %4305 = vrot.lane.b32.xlu0 %v4238, 64
        %v4306 = vpop.permute.xlu0 %4305
        %4307 = vrot.lane.b32.xlu0 %v4241, 64
        %v4308 = vpop.permute.xlu0 %4307
        %4309 = vrot.lane.b32.xlu0 %v4244, 64
        %v4310 = vpop.permute.xlu0 %4309
        %4311 = vrot.lane.b32.xlu0 %v4247, 64
        %v4312 = vpop.permute.xlu0 %4311
        %4313 = vrot.lane.b32.xlu0 %v4250, 64
        %v4314 = vpop.permute.xlu0 %4313
        %v4379 = vunpack.c.l.b16 %v2329
        %v4380 = vunpack.c.l.b16 %v2330
        %v4381 = vunpack.c.l.b16 %v2331
        %v4382 = vunpack.c.l.b16 %v2332
        %v4383 = vunpack.c.l.b16 %v2333
        %v4384 = vunpack.c.l.b16 %v2334
        %v4385 = vunpack.c.l.b16 %v2335
        %v4386 = vunpack.c.l.b16 %v2336
        %v4387 = vunpack.c.l.b16 %v2337
        %v4388 = vunpack.c.l.b16 %v2338
        %v4389 = vunpack.c.l.b16 %v2339
        %v4390 = vunpack.c.l.b16 %v2340
        %v4391 = vunpack.c.l.b16 %v2341
        %v4392 = vunpack.c.l.b16 %v2342
        %v4393 = vunpack.c.l.b16 %v2343
        %v4394 = vunpack.c.l.b16 %v2344
        %v4395 = vunpack.c.l.b16 %v2345
        %v4396 = vunpack.c.l.b16 %v2346
        %v4397 = vunpack.c.l.b16 %v2347
        %v4398 = vunpack.c.l.b16 %v2348
        %v4399 = vunpack.c.l.b16 %v2349
        %v4400 = vunpack.c.l.b16 %v2350
        %v4401 = vunpack.c.l.b16 %v2351
        %v4402 = vunpack.c.l.b16 %v2352
        %v4403 = vunpack.c.l.b16 %v2353
        %v4404 = vunpack.c.l.b16 %v2354
        %v4405 = vunpack.c.l.b16 %v2355
        %v4406 = vunpack.c.l.b16 %v2356
        %v4407 = vunpack.c.l.b16 %v2357
        %v4408 = vunpack.c.l.b16 %v2358
        %v4409 = vunpack.c.l.b16 %v2359
        %v4410 = vunpack.c.l.b16 %v2360
        %v4411 = vunpack.c.l.b16 %v2361
        %v4412 = vunpack.c.l.b16 %v2362
        %v4413 = vunpack.c.l.b16 %v2363
        %v4414 = vunpack.c.l.b16 %v2364
        %v4415 = vunpack.c.l.b16 %v2365
        %v4416 = vunpack.c.l.b16 %v2366
        %v4417 = vunpack.c.l.b16 %v2367
        %v4418 = vunpack.c.l.b16 %v2368
        %v4419 = vunpack.c.l.b16 %v2369
        %v4420 = vunpack.c.l.b16 %v2370
        %v4421 = vunpack.c.l.b16 %v2371
        %v4422 = vunpack.c.l.b16 %v2372
        %v4423 = vunpack.c.l.b16 %v2373
        %v4424 = vunpack.c.l.b16 %v2374
        %v4425 = vunpack.c.l.b16 %v2375
        %v4426 = vunpack.c.l.b16 %v2376
        %v4427 = vunpack.c.l.b16 %v2377
        %v4428 = vunpack.c.l.b16 %v2378
        %v4429 = vunpack.c.l.b16 %v2379
        %v4430 = vunpack.c.l.b16 %v2380
        %v4431 = vunpack.c.l.b16 %v2381
        %v4432 = vunpack.c.l.b16 %v2382
        %v4433 = vunpack.c.l.b16 %v2383
        %v4434 = vunpack.c.l.b16 %v2384
        %v4435 = vunpack.c.l.b16 %v2385
        %v4436 = vunpack.c.l.b16 %v2386
        %v4437 = vunpack.c.l.b16 %v2387
        %v4438 = vunpack.c.l.b16 %v2388
        %v4439 = vunpack.c.l.b16 %v2389
        %v4440 = vunpack.c.l.b16 %v2390
        %v4441 = vunpack.c.l.b16 %v2391
        %v4442 = vunpack.c.l.b16 %v2392
        %v4443 = vpack.c.b16 %v4380, %v4379
        %v4444 = vpack.c.b16 %v4382, %v4381
        %v4445 = vpack.c.b16 %v4384, %v4383
        %v4446 = vpack.c.b16 %v4386, %v4385
        %v4447 = vpack.c.b16 %v4388, %v4387
        %v4448 = vpack.c.b16 %v4390, %v4389
        %v4449 = vpack.c.b16 %v4392, %v4391
        %v4450 = vpack.c.b16 %v4394, %v4393
        %v4451 = vpack.c.b16 %v4396, %v4395
        %v4452 = vpack.c.b16 %v4398, %v4397
        %v4453 = vpack.c.b16 %v4400, %v4399
        %v4454 = vpack.c.b16 %v4402, %v4401
        %v4455 = vpack.c.b16 %v4404, %v4403
        %v4456 = vpack.c.b16 %v4406, %v4405
        %v4457 = vpack.c.b16 %v4408, %v4407
        %v4458 = vpack.c.b16 %v4410, %v4409
        %v4459 = vpack.c.b16 %v4412, %v4411
        %v4460 = vpack.c.b16 %v4414, %v4413
        %v4461 = vpack.c.b16 %v4416, %v4415
        %v4462 = vpack.c.b16 %v4418, %v4417
        %v4463 = vpack.c.b16 %v4420, %v4419
        %v4464 = vpack.c.b16 %v4422, %v4421
        %v4465 = vpack.c.b16 %v4424, %v4423
        %v4466 = vpack.c.b16 %v4426, %v4425
        %v4467 = vpack.c.b16 %v4428, %v4427
        %v4468 = vpack.c.b16 %v4430, %v4429
        %v4469 = vpack.c.b16 %v4432, %v4431
        %v4470 = vpack.c.b16 %v4434, %v4433
        %v4471 = vpack.c.b16 %v4436, %v4435
        %v4472 = vpack.c.b16 %v4438, %v4437
        %v4473 = vpack.c.b16 %v4440, %v4439
        %v4474 = vpack.c.b16 %v4442, %v4441
        %v4507 = vunpack.c.l.b16 %v2393
        %v4508 = vunpack.c.l.b16 %v2394
        %v4509 = vunpack.c.l.b16 %v2395
        %v4510 = vunpack.c.l.b16 %v2396
        %v4511 = vunpack.c.l.b16 %v2397
        %v4512 = vunpack.c.l.b16 %v2398
        %v4513 = vunpack.c.l.b16 %v2399
        %v4514 = vunpack.c.l.b16 %v2400
        %v4515 = vunpack.c.l.b16 %v2401
        %v4516 = vunpack.c.l.b16 %v2402
        %v4517 = vunpack.c.l.b16 %v2403
        %v4518 = vunpack.c.l.b16 %v2404
        %v4519 = vunpack.c.l.b16 %v2405
        %v4520 = vunpack.c.l.b16 %v2406
        %v4521 = vunpack.c.l.b16 %v2407
        %v4522 = vunpack.c.l.b16 %v2408
        %v4523 = vunpack.c.l.b16 %v2409
        %v4524 = vunpack.c.l.b16 %v2410
        %v4525 = vunpack.c.l.b16 %v2411
        %v4526 = vunpack.c.l.b16 %v2412
        %v4527 = vunpack.c.l.b16 %v2413
        %v4528 = vunpack.c.l.b16 %v2414
        %v4529 = vunpack.c.l.b16 %v2415
        %v4530 = vunpack.c.l.b16 %v2416
        %v4531 = vunpack.c.l.b16 %v2417
        %v4532 = vunpack.c.l.b16 %v2418
        %v4533 = vunpack.c.l.b16 %v2419
        %v4534 = vunpack.c.l.b16 %v2420
        %v4535 = vunpack.c.l.b16 %v2421
        %v4536 = vunpack.c.l.b16 %v2422
        %v4537 = vunpack.c.l.b16 %v2423
        %v4538 = vunpack.c.l.b16 %v2424
        %v4539 = vpack.c.b16 %v4507, %v4507
        %v4540 = vpack.c.b16 %v4508, %v4508
        %v4541 = vpack.c.b16 %v4509, %v4509
        %v4542 = vpack.c.b16 %v4510, %v4510
        %v4543 = vpack.c.b16 %v4511, %v4511
        %v4544 = vpack.c.b16 %v4512, %v4512
        %v4545 = vpack.c.b16 %v4513, %v4513
        %v4546 = vpack.c.b16 %v4514, %v4514
        %v4547 = vpack.c.b16 %v4515, %v4515
        %v4548 = vpack.c.b16 %v4516, %v4516
        %v4549 = vpack.c.b16 %v4517, %v4517
        %v4550 = vpack.c.b16 %v4518, %v4518
        %v4551 = vpack.c.b16 %v4519, %v4519
        %v4552 = vpack.c.b16 %v4520, %v4520
        %v4553 = vpack.c.b16 %v4521, %v4521
        %v4554 = vpack.c.b16 %v4522, %v4522
        %v4555 = vpack.c.b16 %v4523, %v4523
        %v4556 = vpack.c.b16 %v4524, %v4524
        %v4557 = vpack.c.b16 %v4525, %v4525
        %v4558 = vpack.c.b16 %v4526, %v4526
        %v4559 = vpack.c.b16 %v4527, %v4527
        %v4560 = vpack.c.b16 %v4528, %v4528
        %v4561 = vpack.c.b16 %v4529, %v4529
        %v4562 = vpack.c.b16 %v4530, %v4530
        %v4563 = vpack.c.b16 %v4531, %v4531
        %v4564 = vpack.c.b16 %v4532, %v4532
        %v4565 = vpack.c.b16 %v4533, %v4533
        %v4566 = vpack.c.b16 %v4534, %v4534
        %v4567 = vpack.c.b16 %v4535, %v4535
        %v4568 = vpack.c.b16 %v4536, %v4536
        %v4569 = vpack.c.b16 %v4537, %v4537
        %v4570 = vpack.c.b16 %v4538, %v4538
        %v4572 = vshrl.u32 %v4443, 16
        %v4574 = vshll.u32 %v4443, 16
        %v4576 = vrot.slane %v4574, 1
        %v4577 = vor.u32 %v4572, %v4576
        %v4579 = vshll.u32 %v4539, 16
        %v4581 = vrot.slane %v4579, 1
        %v4582 = vsel %vm2713, %v4577, %v4581
        %v4584 = vshrl.u32 %v4444, 16
        %v4586 = vshll.u32 %v4444, 16
        %v4588 = vrot.slane %v4586, 1
        %v4589 = vor.u32 %v4584, %v4588
        %v4591 = vshll.u32 %v4540, 16
        %v4593 = vrot.slane %v4591, 1
        %v4594 = vsel %vm2713, %v4589, %v4593
        %v4596 = vshrl.u32 %v4445, 16
        %v4598 = vshll.u32 %v4445, 16
        %v4600 = vrot.slane %v4598, 1
        %v4601 = vor.u32 %v4596, %v4600
        %v4603 = vshll.u32 %v4541, 16
        %v4605 = vrot.slane %v4603, 1
        %v4606 = vsel %vm2713, %v4601, %v4605
        %v4608 = vshrl.u32 %v4446, 16
        %v4610 = vshll.u32 %v4446, 16
        %v4612 = vrot.slane %v4610, 1
        %v4613 = vor.u32 %v4608, %v4612
        %v4615 = vshll.u32 %v4542, 16
        %v4617 = vrot.slane %v4615, 1
        %v4618 = vsel %vm2713, %v4613, %v4617
        %v4620 = vshrl.u32 %v4447, 16
        %v4622 = vshll.u32 %v4447, 16
        %v4624 = vrot.slane %v4622, 1
        %v4625 = vor.u32 %v4620, %v4624
        %v4627 = vshll.u32 %v4543, 16
        %v4629 = vrot.slane %v4627, 1
        %v4630 = vsel %vm2713, %v4625, %v4629
        %v4632 = vshrl.u32 %v4448, 16
        %v4634 = vshll.u32 %v4448, 16
        %v4636 = vrot.slane %v4634, 1
        %v4637 = vor.u32 %v4632, %v4636
        %v4639 = vshll.u32 %v4544, 16
        %v4641 = vrot.slane %v4639, 1
        %v4642 = vsel %vm2713, %v4637, %v4641
        %v4644 = vshrl.u32 %v4449, 16
        %v4646 = vshll.u32 %v4449, 16
        %v4648 = vrot.slane %v4646, 1
        %v4649 = vor.u32 %v4644, %v4648
        %v4651 = vshll.u32 %v4545, 16
        %v4653 = vrot.slane %v4651, 1
        %v4654 = vsel %vm2713, %v4649, %v4653
        %v4656 = vshrl.u32 %v4450, 16
        %v4658 = vshll.u32 %v4450, 16
        %v4660 = vrot.slane %v4658, 1
        %v4661 = vor.u32 %v4656, %v4660
        %v4663 = vshll.u32 %v4546, 16
        %v4665 = vrot.slane %v4663, 1
        %v4666 = vsel %vm2713, %v4661, %v4665
        %v4668 = vshrl.u32 %v4451, 16
        %v4670 = vshll.u32 %v4451, 16
        %v4672 = vrot.slane %v4670, 1
        %v4673 = vor.u32 %v4668, %v4672
        %v4675 = vshll.u32 %v4547, 16
        %v4677 = vrot.slane %v4675, 1
        %v4678 = vsel %vm2713, %v4673, %v4677
        %v4680 = vshrl.u32 %v4452, 16
        %v4682 = vshll.u32 %v4452, 16
        %v4684 = vrot.slane %v4682, 1
        %v4685 = vor.u32 %v4680, %v4684
        %v4687 = vshll.u32 %v4548, 16
        %v4689 = vrot.slane %v4687, 1
        %v4690 = vsel %vm2713, %v4685, %v4689
        %v4692 = vshrl.u32 %v4453, 16
        %v4694 = vshll.u32 %v4453, 16
        %v4696 = vrot.slane %v4694, 1
        %v4697 = vor.u32 %v4692, %v4696
        %v4699 = vshll.u32 %v4549, 16
        %v4701 = vrot.slane %v4699, 1
        %v4702 = vsel %vm2713, %v4697, %v4701
        %v4704 = vshrl.u32 %v4454, 16
        %v4706 = vshll.u32 %v4454, 16
        %v4708 = vrot.slane %v4706, 1
        %v4709 = vor.u32 %v4704, %v4708
        %v4711 = vshll.u32 %v4550, 16
        %v4713 = vrot.slane %v4711, 1
        %v4714 = vsel %vm2713, %v4709, %v4713
        %v4716 = vshrl.u32 %v4455, 16
        %v4718 = vshll.u32 %v4455, 16
        %v4720 = vrot.slane %v4718, 1
        %v4721 = vor.u32 %v4716, %v4720
        %v4723 = vshll.u32 %v4551, 16
        %v4725 = vrot.slane %v4723, 1
        %v4726 = vsel %vm2713, %v4721, %v4725
        %v4728 = vshrl.u32 %v4456, 16
        %v4730 = vshll.u32 %v4456, 16
        %v4732 = vrot.slane %v4730, 1
        %v4733 = vor.u32 %v4728, %v4732
        %v4735 = vshll.u32 %v4552, 16
        %v4737 = vrot.slane %v4735, 1
        %v4738 = vsel %vm2713, %v4733, %v4737
        %v4740 = vshrl.u32 %v4457, 16
        %v4742 = vshll.u32 %v4457, 16
        %v4744 = vrot.slane %v4742, 1
        %v4745 = vor.u32 %v4740, %v4744
        %v4747 = vshll.u32 %v4553, 16
        %v4749 = vrot.slane %v4747, 1
        %v4750 = vsel %vm2713, %v4745, %v4749
        %v4752 = vshrl.u32 %v4458, 16
        %v4754 = vshll.u32 %v4458, 16
        %v4756 = vrot.slane %v4754, 1
        %v4757 = vor.u32 %v4752, %v4756
        %v4759 = vshll.u32 %v4554, 16
        %v4761 = vrot.slane %v4759, 1
        %v4762 = vsel %vm2713, %v4757, %v4761
        %v4764 = vshrl.u32 %v4459, 16
        %v4766 = vshll.u32 %v4459, 16
        %v4768 = vrot.slane %v4766, 1
        %v4769 = vor.u32 %v4764, %v4768
        %v4771 = vshll.u32 %v4555, 16
        %v4773 = vrot.slane %v4771, 1
        %v4774 = vsel %vm2713, %v4769, %v4773
        %v4776 = vshrl.u32 %v4460, 16
        %v4778 = vshll.u32 %v4460, 16
        %v4780 = vrot.slane %v4778, 1
        %v4781 = vor.u32 %v4776, %v4780
        %v4783 = vshll.u32 %v4556, 16
        %v4785 = vrot.slane %v4783, 1
        %v4786 = vsel %vm2713, %v4781, %v4785
        %v4788 = vshrl.u32 %v4461, 16
        %v4790 = vshll.u32 %v4461, 16
        %v4792 = vrot.slane %v4790, 1
        %v4793 = vor.u32 %v4788, %v4792
        %v4795 = vshll.u32 %v4557, 16
        %v4797 = vrot.slane %v4795, 1
        %v4798 = vsel %vm2713, %v4793, %v4797
        %v4800 = vshrl.u32 %v4462, 16
        %v4802 = vshll.u32 %v4462, 16
        %v4804 = vrot.slane %v4802, 1
        %v4805 = vor.u32 %v4800, %v4804
        %v4807 = vshll.u32 %v4558, 16
        %v4809 = vrot.slane %v4807, 1
        %v4810 = vsel %vm2713, %v4805, %v4809
        %v4812 = vshrl.u32 %v4463, 16
        %v4814 = vshll.u32 %v4463, 16
        %v4816 = vrot.slane %v4814, 1
        %v4817 = vor.u32 %v4812, %v4816
        %v4819 = vshll.u32 %v4559, 16
        %v4821 = vrot.slane %v4819, 1
        %v4822 = vsel %vm2713, %v4817, %v4821
        %v4824 = vshrl.u32 %v4464, 16
        %v4826 = vshll.u32 %v4464, 16
        %v4828 = vrot.slane %v4826, 1
        %v4829 = vor.u32 %v4824, %v4828
        %v4831 = vshll.u32 %v4560, 16
        %v4833 = vrot.slane %v4831, 1
        %v4834 = vsel %vm2713, %v4829, %v4833
        %v4836 = vshrl.u32 %v4465, 16
        %v4838 = vshll.u32 %v4465, 16
        %v4840 = vrot.slane %v4838, 1
        %v4841 = vor.u32 %v4836, %v4840
        %v4843 = vshll.u32 %v4561, 16
        %v4845 = vrot.slane %v4843, 1
        %v4846 = vsel %vm2713, %v4841, %v4845
        %v4848 = vshrl.u32 %v4466, 16
        %v4850 = vshll.u32 %v4466, 16
        %v4852 = vrot.slane %v4850, 1
        %v4853 = vor.u32 %v4848, %v4852
        %v4855 = vshll.u32 %v4562, 16
        %v4857 = vrot.slane %v4855, 1
        %v4858 = vsel %vm2713, %v4853, %v4857
        %v4860 = vshrl.u32 %v4467, 16
        %v4862 = vshll.u32 %v4467, 16
        %v4864 = vrot.slane %v4862, 1
        %v4865 = vor.u32 %v4860, %v4864
        %v4867 = vshll.u32 %v4563, 16
        %v4869 = vrot.slane %v4867, 1
        %v4870 = vsel %vm2713, %v4865, %v4869
        %v4872 = vshrl.u32 %v4468, 16
        %v4874 = vshll.u32 %v4468, 16
        %v4876 = vrot.slane %v4874, 1
        %v4877 = vor.u32 %v4872, %v4876
        %v4879 = vshll.u32 %v4564, 16
        %v4881 = vrot.slane %v4879, 1
        %v4882 = vsel %vm2713, %v4877, %v4881
        %v4884 = vshrl.u32 %v4469, 16
        %v4886 = vshll.u32 %v4469, 16
        %v4888 = vrot.slane %v4886, 1
        %v4889 = vor.u32 %v4884, %v4888
        %v4891 = vshll.u32 %v4565, 16
        %v4893 = vrot.slane %v4891, 1
        %v4894 = vsel %vm2713, %v4889, %v4893
        %v4896 = vshrl.u32 %v4470, 16
        %v4898 = vshll.u32 %v4470, 16
        %v4900 = vrot.slane %v4898, 1
        %v4901 = vor.u32 %v4896, %v4900
        %v4903 = vshll.u32 %v4566, 16
        %v4905 = vrot.slane %v4903, 1
        %v4906 = vsel %vm2713, %v4901, %v4905
        %v4908 = vshrl.u32 %v4471, 16
        %v4910 = vshll.u32 %v4471, 16
        %v4912 = vrot.slane %v4910, 1
        %v4913 = vor.u32 %v4908, %v4912
        %v4915 = vshll.u32 %v4567, 16
        %v4917 = vrot.slane %v4915, 1
        %v4918 = vsel %vm2713, %v4913, %v4917
        %v4920 = vshrl.u32 %v4472, 16
        %v4922 = vshll.u32 %v4472, 16
        %v4924 = vrot.slane %v4922, 1
        %v4925 = vor.u32 %v4920, %v4924
        %v4927 = vshll.u32 %v4568, 16
        %v4929 = vrot.slane %v4927, 1
        %v4930 = vsel %vm2713, %v4925, %v4929
        %v4932 = vshrl.u32 %v4473, 16
        %v4934 = vshll.u32 %v4473, 16
        %v4936 = vrot.slane %v4934, 1
        %v4937 = vor.u32 %v4932, %v4936
        %v4939 = vshll.u32 %v4569, 16
        %v4941 = vrot.slane %v4939, 1
        %v4942 = vsel %vm2713, %v4937, %v4941
        %v4944 = vshrl.u32 %v4474, 16
        %v4946 = vshll.u32 %v4474, 16
        %v4948 = vrot.slane %v4946, 1
        %v4949 = vor.u32 %v4944, %v4948
        %v4951 = vshll.u32 %v4570, 16
        %v4953 = vrot.slane %v4951, 1
        %v4954 = vsel %vm2713, %v4949, %v4953
        %4955 = vrot.lane.b32.xlu0 %v4582, 64
        %v4956 = vpop.permute.xlu0 %4955
        %4957 = vrot.lane.b32.xlu0 %v4594, 64
        %v4958 = vpop.permute.xlu0 %4957
        %4959 = vrot.lane.b32.xlu0 %v4606, 64
        %v4960 = vpop.permute.xlu0 %4959
        %4961 = vrot.lane.b32.xlu0 %v4618, 64
        %v4962 = vpop.permute.xlu0 %4961
        %4963 = vrot.lane.b32.xlu0 %v4630, 64
        %v4964 = vpop.permute.xlu0 %4963
        %4965 = vrot.lane.b32.xlu0 %v4642, 64
        %v4966 = vpop.permute.xlu0 %4965
        %4967 = vrot.lane.b32.xlu0 %v4654, 64
        %v4968 = vpop.permute.xlu0 %4967
        %4969 = vrot.lane.b32.xlu0 %v4666, 64
        %v4970 = vpop.permute.xlu0 %4969
        %4971 = vrot.lane.b32.xlu0 %v4678, 64
        %v4972 = vpop.permute.xlu0 %4971
        %4973 = vrot.lane.b32.xlu0 %v4690, 64
        %v4974 = vpop.permute.xlu0 %4973
        %4975 = vrot.lane.b32.xlu0 %v4702, 64
        %v4976 = vpop.permute.xlu0 %4975
        %4977 = vrot.lane.b32.xlu0 %v4714, 64
        %v4978 = vpop.permute.xlu0 %4977
        %4979 = vrot.lane.b32.xlu0 %v4726, 64
        %v4980 = vpop.permute.xlu0 %4979
        %4981 = vrot.lane.b32.xlu0 %v4738, 64
        %v4982 = vpop.permute.xlu0 %4981
        %4983 = vrot.lane.b32.xlu0 %v4750, 64
        %v4984 = vpop.permute.xlu0 %4983
        %4985 = vrot.lane.b32.xlu0 %v4762, 64
        %v4986 = vpop.permute.xlu0 %4985
        %4987 = vrot.lane.b32.xlu0 %v4774, 64
        %v4988 = vpop.permute.xlu0 %4987
        %4989 = vrot.lane.b32.xlu0 %v4786, 64
        %v4990 = vpop.permute.xlu0 %4989
        %4991 = vrot.lane.b32.xlu0 %v4798, 64
        %v4992 = vpop.permute.xlu0 %4991
        %4993 = vrot.lane.b32.xlu0 %v4810, 64
        %v4994 = vpop.permute.xlu0 %4993
        %4995 = vrot.lane.b32.xlu0 %v4822, 64
        %v4996 = vpop.permute.xlu0 %4995
        %4997 = vrot.lane.b32.xlu0 %v4834, 64
        %v4998 = vpop.permute.xlu0 %4997
        %4999 = vrot.lane.b32.xlu0 %v4846, 64
        %v5000 = vpop.permute.xlu0 %4999
        %5001 = vrot.lane.b32.xlu0 %v4858, 64
        %v5002 = vpop.permute.xlu0 %5001
        %5003 = vrot.lane.b32.xlu0 %v4870, 64
        %v5004 = vpop.permute.xlu0 %5003
        %5005 = vrot.lane.b32.xlu0 %v4882, 64
        %v5006 = vpop.permute.xlu0 %5005
        %5007 = vrot.lane.b32.xlu0 %v4894, 64
        %v5008 = vpop.permute.xlu0 %5007
        %5009 = vrot.lane.b32.xlu0 %v4906, 64
        %v5010 = vpop.permute.xlu0 %5009
        %5011 = vrot.lane.b32.xlu0 %v4918, 64
        %v5012 = vpop.permute.xlu0 %5011
        %5013 = vrot.lane.b32.xlu0 %v4930, 64
        %v5014 = vpop.permute.xlu0 %5013
        %5015 = vrot.lane.b32.xlu0 %v4942, 64
        %v5016 = vpop.permute.xlu0 %5015
        %5017 = vrot.lane.b32.xlu0 %v4954, 64
        %v5018 = vpop.permute.xlu0 %5017
        %v5051 = vunpack.c.l.b16 %v2425
        %v5052 = vunpack.c.l.b16 %v2426
        %v5053 = vunpack.c.l.b16 %v2427
        %v5054 = vunpack.c.l.b16 %v2428
        %v5055 = vunpack.c.l.b16 %v2429
        %v5056 = vunpack.c.l.b16 %v2430
        %v5057 = vunpack.c.l.b16 %v2431
        %v5058 = vunpack.c.l.b16 %v2432
        %v5059 = vunpack.c.l.b16 %v2433
        %v5060 = vunpack.c.l.b16 %v2434
        %v5061 = vunpack.c.l.b16 %v2435
        %v5062 = vunpack.c.l.b16 %v2436
        %v5063 = vunpack.c.l.b16 %v2437
        %v5064 = vunpack.c.l.b16 %v2438
        %v5065 = vunpack.c.l.b16 %v2439
        %v5066 = vunpack.c.l.b16 %v2440
        %v5067 = vunpack.c.l.b16 %v2441
        %v5068 = vunpack.c.l.b16 %v2442
        %v5069 = vunpack.c.l.b16 %v2443
        %v5070 = vunpack.c.l.b16 %v2444
        %v5071 = vunpack.c.l.b16 %v2445
        %v5072 = vunpack.c.l.b16 %v2446
        %v5073 = vunpack.c.l.b16 %v2447
        %v5074 = vunpack.c.l.b16 %v2448
        %v5075 = vunpack.c.l.b16 %v2449
        %v5076 = vunpack.c.l.b16 %v2450
        %v5077 = vunpack.c.l.b16 %v2451
        %v5078 = vunpack.c.l.b16 %v2452
        %v5079 = vunpack.c.l.b16 %v2453
        %v5080 = vunpack.c.l.b16 %v2454
        %v5081 = vunpack.c.l.b16 %v2455
        %v5082 = vunpack.c.l.b16 %v2456
        %v5083 = vpack.c.b16 %v4380, %v5051
        %v5084 = vpack.c.b16 %v4382, %v5052
        %v5085 = vpack.c.b16 %v4384, %v5053
        %v5086 = vpack.c.b16 %v4386, %v5054
        %v5087 = vpack.c.b16 %v4388, %v5055
        %v5088 = vpack.c.b16 %v4390, %v5056
        %v5089 = vpack.c.b16 %v4392, %v5057
        %v5090 = vpack.c.b16 %v4394, %v5058
        %v5091 = vpack.c.b16 %v4396, %v5059
        %v5092 = vpack.c.b16 %v4398, %v5060
        %v5093 = vpack.c.b16 %v4400, %v5061
        %v5094 = vpack.c.b16 %v4402, %v5062
        %v5095 = vpack.c.b16 %v4404, %v5063
        %v5096 = vpack.c.b16 %v4406, %v5064
        %v5097 = vpack.c.b16 %v4408, %v5065
        %v5098 = vpack.c.b16 %v4410, %v5066
        %v5099 = vpack.c.b16 %v4412, %v5067
        %v5100 = vpack.c.b16 %v4414, %v5068
        %v5101 = vpack.c.b16 %v4416, %v5069
        %v5102 = vpack.c.b16 %v4418, %v5070
        %v5103 = vpack.c.b16 %v4420, %v5071
        %v5104 = vpack.c.b16 %v4422, %v5072
        %v5105 = vpack.c.b16 %v4424, %v5073
        %v5106 = vpack.c.b16 %v4426, %v5074
        %v5107 = vpack.c.b16 %v4428, %v5075
        %v5108 = vpack.c.b16 %v4430, %v5076
        %v5109 = vpack.c.b16 %v4432, %v5077
        %v5110 = vpack.c.b16 %v4434, %v5078
        %v5111 = vpack.c.b16 %v4436, %v5079
        %v5112 = vpack.c.b16 %v4438, %v5080
        %v5113 = vpack.c.b16 %v4440, %v5081
        %v5114 = vpack.c.b16 %v4442, %v5082
        %v5115 = vrot.slane %v5083, 1
        %v5116 = vrot.slane %v4539, 1
        %v5117 = vsel %vm3258, %v5115, %v5116
        %v5118 = vrot.slane %v5084, 1
        %v5119 = vrot.slane %v4540, 1
        %v5120 = vsel %vm3258, %v5118, %v5119
        %v5121 = vrot.slane %v5085, 1
        %v5122 = vrot.slane %v4541, 1
        %v5123 = vsel %vm3258, %v5121, %v5122
        %v5124 = vrot.slane %v5086, 1
        %v5125 = vrot.slane %v4542, 1
        %v5126 = vsel %vm3258, %v5124, %v5125
        %v5127 = vrot.slane %v5087, 1
        %v5128 = vrot.slane %v4543, 1
        %v5129 = vsel %vm3258, %v5127, %v5128
        %v5130 = vrot.slane %v5088, 1
        %v5131 = vrot.slane %v4544, 1
        %v5132 = vsel %vm3258, %v5130, %v5131
        %v5133 = vrot.slane %v5089, 1
        %v5134 = vrot.slane %v4545, 1
        %v5135 = vsel %vm3258, %v5133, %v5134
        %v5136 = vrot.slane %v5090, 1
        %v5137 = vrot.slane %v4546, 1
        %v5138 = vsel %vm3258, %v5136, %v5137
        %v5139 = vrot.slane %v5091, 1
        %v5140 = vrot.slane %v4547, 1
        %v5141 = vsel %vm3258, %v5139, %v5140
        %v5142 = vrot.slane %v5092, 1
        %v5143 = vrot.slane %v4548, 1
        %v5144 = vsel %vm3258, %v5142, %v5143
        %v5145 = vrot.slane %v5093, 1
        %v5146 = vrot.slane %v4549, 1
        %v5147 = vsel %vm3258, %v5145, %v5146
        %v5148 = vrot.slane %v5094, 1
        %v5149 = vrot.slane %v4550, 1
        %v5150 = vsel %vm3258, %v5148, %v5149
        %v5151 = vrot.slane %v5095, 1
        %v5152 = vrot.slane %v4551, 1
        %v5153 = vsel %vm3258, %v5151, %v5152
        %v5154 = vrot.slane %v5096, 1
        %v5155 = vrot.slane %v4552, 1
        %v5156 = vsel %vm3258, %v5154, %v5155
        %v5157 = vrot.slane %v5097, 1
        %v5158 = vrot.slane %v4553, 1
        %v5159 = vsel %vm3258, %v5157, %v5158
        %v5160 = vrot.slane %v5098, 1
        %v5161 = vrot.slane %v4554, 1
        %v5162 = vsel %vm3258, %v5160, %v5161
        %v5163 = vrot.slane %v5099, 1
        %v5164 = vrot.slane %v4555, 1
        %v5165 = vsel %vm3258, %v5163, %v5164
        %v5166 = vrot.slane %v5100, 1
        %v5167 = vrot.slane %v4556, 1
        %v5168 = vsel %vm3258, %v5166, %v5167
        %v5169 = vrot.slane %v5101, 1
        %v5170 = vrot.slane %v4557, 1
        %v5171 = vsel %vm3258, %v5169, %v5170
        %v5172 = vrot.slane %v5102, 1
        %v5173 = vrot.slane %v4558, 1
        %v5174 = vsel %vm3258, %v5172, %v5173
        %v5175 = vrot.slane %v5103, 1
        %v5176 = vrot.slane %v4559, 1
        %v5177 = vsel %vm3258, %v5175, %v5176
        %v5178 = vrot.slane %v5104, 1
        %v5179 = vrot.slane %v4560, 1
        %v5180 = vsel %vm3258, %v5178, %v5179
        %v5181 = vrot.slane %v5105, 1
        %v5182 = vrot.slane %v4561, 1
        %v5183 = vsel %vm3258, %v5181, %v5182
        %v5184 = vrot.slane %v5106, 1
        %v5185 = vrot.slane %v4562, 1
        %v5186 = vsel %vm3258, %v5184, %v5185
        %v5187 = vrot.slane %v5107, 1
        %v5188 = vrot.slane %v4563, 1
        %v5189 = vsel %vm3258, %v5187, %v5188
        %v5190 = vrot.slane %v5108, 1
        %v5191 = vrot.slane %v4564, 1
        %v5192 = vsel %vm3258, %v5190, %v5191
        %v5193 = vrot.slane %v5109, 1
        %v5194 = vrot.slane %v4565, 1
        %v5195 = vsel %vm3258, %v5193, %v5194
        %v5196 = vrot.slane %v5110, 1
        %v5197 = vrot.slane %v4566, 1
        %v5198 = vsel %vm3258, %v5196, %v5197
        %v5199 = vrot.slane %v5111, 1
        %v5200 = vrot.slane %v4567, 1
        %v5201 = vsel %vm3258, %v5199, %v5200
        %v5202 = vrot.slane %v5112, 1
        %v5203 = vrot.slane %v4568, 1
        %v5204 = vsel %vm3258, %v5202, %v5203
        %v5205 = vrot.slane %v5113, 1
        %v5206 = vrot.slane %v4569, 1
        %v5207 = vsel %vm3258, %v5205, %v5206
        %v5208 = vrot.slane %v5114, 1
        %v5209 = vrot.slane %v4570, 1
        %v5210 = vsel %vm3258, %v5208, %v5209
        %vm5211 = vcmask 523264
        %v5213 = vsel %vm5211, %v2585, %v3099
        %v5216 = vsel %vm5211, %v2586, %v3101
        %v5219 = vsel %vm5211, %v2587, %v3103
        %v5222 = vsel %vm5211, %v2588, %v3105
        %v5225 = vsel %vm5211, %v2589, %v3107
        %v5228 = vsel %vm5211, %v2590, %v3109
        %v5231 = vsel %vm5211, %v2591, %v3111
        %v5234 = vsel %vm5211, %v2592, %v3113
        %v5237 = vsel %vm5211, %v2593, %v3115
        %v5240 = vsel %vm5211, %v2594, %v3117
        %v5243 = vsel %vm5211, %v2595, %v3119
        %v5246 = vsel %vm5211, %v2596, %v3121
        %v5249 = vsel %vm5211, %v2597, %v3123
        %v5252 = vsel %vm5211, %v2598, %v3125
        %v5255 = vsel %vm5211, %v2599, %v3127
        %v5258 = vsel %vm5211, %v2600, %v3129
        %v5261 = vsel %vm5211, %v2601, %v3131
        %v5264 = vsel %vm5211, %v2602, %v3133
        %v5267 = vsel %vm5211, %v2603, %v3135
        %v5270 = vsel %vm5211, %v2604, %v3137
        %v5273 = vsel %vm5211, %v2605, %v3139
        %v5276 = vsel %vm5211, %v2606, %v3141
        %v5279 = vsel %vm5211, %v2607, %v3143
        %v5282 = vsel %vm5211, %v2608, %v3145
        %v5285 = vsel %vm5211, %v2609, %v3147
        %v5288 = vsel %vm5211, %v2610, %v3149
        %v5291 = vsel %vm5211, %v2611, %v3151
        %v5294 = vsel %vm5211, %v2612, %v3153
        %v5297 = vsel %vm5211, %v2613, %v3155
        %v5300 = vsel %vm5211, %v2614, %v3157
        %v5303 = vsel %vm5211, %v2615, %v3159
        %v5306 = vsel %vm5211, %v2616, %v3161
        %v5310 = vsel %vm5211, %v3261, %v3516
        %v5314 = vsel %vm5211, %v3264, %v3518
        %v5318 = vsel %vm5211, %v3267, %v3520
        %v5322 = vsel %vm5211, %v3270, %v3522
        %v5326 = vsel %vm5211, %v3273, %v3524
        %v5330 = vsel %vm5211, %v3276, %v3526
        %v5334 = vsel %vm5211, %v3279, %v3528
        %v5338 = vsel %vm5211, %v3282, %v3530
        %v5342 = vsel %vm5211, %v3285, %v3532
        %v5346 = vsel %vm5211, %v3288, %v3534
        %v5350 = vsel %vm5211, %v3291, %v3536
        %v5354 = vsel %vm5211, %v3294, %v3538
        %v5358 = vsel %vm5211, %v3297, %v3540
        %v5362 = vsel %vm5211, %v3300, %v3542
        %v5366 = vsel %vm5211, %v3303, %v3544
        %v5370 = vsel %vm5211, %v3306, %v3546
        %v5374 = vsel %vm5211, %v3309, %v3548
        %v5378 = vsel %vm5211, %v3312, %v3550
        %v5382 = vsel %vm5211, %v3315, %v3552
        %v5386 = vsel %vm5211, %v3318, %v3554
        %v5390 = vsel %vm5211, %v3321, %v3556
        %v5394 = vsel %vm5211, %v3324, %v3558
        %v5398 = vsel %vm5211, %v3327, %v3560
        %v5402 = vsel %vm5211, %v3330, %v3562
        %v5406 = vsel %vm5211, %v3333, %v3564
        %v5410 = vsel %vm5211, %v3336, %v3566
        %v5414 = vsel %vm5211, %v3339, %v3568
        %v5418 = vsel %vm5211, %v3342, %v3570
        %v5422 = vsel %vm5211, %v3345, %v3572
        %v5426 = vsel %vm5211, %v3348, %v3574
        %v5430 = vsel %vm5211, %v3351, %v3576
        %v5434 = vsel %vm5211, %v3354, %v3578
        %v5438 = vsel %vm5211, %v3686, %v4252
        %v5442 = vsel %vm5211, %v3698, %v4254
        %v5446 = vsel %vm5211, %v3710, %v4256
        %v5450 = vsel %vm5211, %v3722, %v4258
        %v5454 = vsel %vm5211, %v3734, %v4260
        %v5458 = vsel %vm5211, %v3746, %v4262
        %v5462 = vsel %vm5211, %v3758, %v4264
        %v5466 = vsel %vm5211, %v3770, %v4266
        %v5470 = vsel %vm5211, %v3782, %v4268
        %v5474 = vsel %vm5211, %v3794, %v4270
        %v5478 = vsel %vm5211, %v3806, %v4272
        %v5482 = vsel %vm5211, %v3818, %v4274
        %v5486 = vsel %vm5211, %v3830, %v4276
        %v5490 = vsel %vm5211, %v3842, %v4278
        %v5494 = vsel %vm5211, %v3854, %v4280
        %v5498 = vsel %vm5211, %v3866, %v4282
        %v5502 = vsel %vm5211, %v3878, %v4284
        %v5506 = vsel %vm5211, %v3890, %v4286
        %v5510 = vsel %vm5211, %v3902, %v4288
        %v5514 = vsel %vm5211, %v3914, %v4290
        %v5518 = vsel %vm5211, %v3926, %v4292
        %v5522 = vsel %vm5211, %v3938, %v4294
        %v5526 = vsel %vm5211, %v3950, %v4296
        %v5530 = vsel %vm5211, %v3962, %v4298
        %v5534 = vsel %vm5211, %v3974, %v4300
        %v5538 = vsel %vm5211, %v3986, %v4302
        %v5542 = vsel %vm5211, %v3998, %v4304
        %v5546 = vsel %vm5211, %v4010, %v4306
        %v5550 = vsel %vm5211, %v4022, %v4308
        %v5554 = vsel %vm5211, %v4034, %v4310
        %v5558 = vsel %vm5211, %v4046, %v4312
        %v5562 = vsel %vm5211, %v4058, %v4314
        %v5565 = vsel %vm5211, %v4443, %v4956
        %v5568 = vsel %vm5211, %v4444, %v4958
        %v5571 = vsel %vm5211, %v4445, %v4960
        %v5574 = vsel %vm5211, %v4446, %v4962
        %v5577 = vsel %vm5211, %v4447, %v4964
        %v5580 = vsel %vm5211, %v4448, %v4966
        %v5583 = vsel %vm5211, %v4449, %v4968
        %v5586 = vsel %vm5211, %v4450, %v4970
        %v5589 = vsel %vm5211, %v4451, %v4972
        %v5592 = vsel %vm5211, %v4452, %v4974
        %v5595 = vsel %vm5211, %v4453, %v4976
        %v5598 = vsel %vm5211, %v4454, %v4978
        %v5601 = vsel %vm5211, %v4455, %v4980
        %v5604 = vsel %vm5211, %v4456, %v4982
        %v5607 = vsel %vm5211, %v4457, %v4984
        %v5610 = vsel %vm5211, %v4458, %v4986
        %v5613 = vsel %vm5211, %v4459, %v4988
        %v5616 = vsel %vm5211, %v4460, %v4990
        %v5619 = vsel %vm5211, %v4461, %v4992
        %v5622 = vsel %vm5211, %v4462, %v4994
        %v5625 = vsel %vm5211, %v4463, %v4996
        %v5628 = vsel %vm5211, %v4464, %v4998
        %v5631 = vsel %vm5211, %v4465, %v5000
        %v5634 = vsel %vm5211, %v4466, %v5002
        %v5637 = vsel %vm5211, %v4467, %v5004
        %v5640 = vsel %vm5211, %v4468, %v5006
        %v5643 = vsel %vm5211, %v4469, %v5008
        %v5646 = vsel %vm5211, %v4470, %v5010
        %v5649 = vsel %vm5211, %v4471, %v5012
        %v5652 = vsel %vm5211, %v4472, %v5014
        %v5655 = vsel %vm5211, %v4473, %v5016
        %v5658 = vsel %vm5211, %v4474, %v5018
        %v5660 = vld [vmem:[%s3] sm:$0xf]
        %v5661 = vld [vmem:[%s3 + $0x4] sm:$0xf]
        %v5662 = vld [vmem:[%s3 + $0x8] sm:$0xf]
        %v5663 = vld [vmem:[%s3 + $0xc] sm:$0xf]
        %v5664 = vld [vmem:[%s3 + $0x10] sm:$0xf]
        %v5665 = vld [vmem:[%s3 + $0x14] sm:$0xf]
        %v5666 = vld [vmem:[%s3 + $0x18] sm:$0xf]
        %v5667 = vld [vmem:[%s3 + $0x1c] sm:$0xf]
        %v5668 = vld [vmem:[%s3 + $0x20] sm:$0xf]
        %v5669 = vld [vmem:[%s3 + $0x24] sm:$0xf]
        %v5670 = vld [vmem:[%s3 + $0x28] sm:$0xf]
        %v5671 = vld [vmem:[%s3 + $0x2c] sm:$0xf]
        %v5672 = vld [vmem:[%s3 + $0x30] sm:$0xf]
        %v5673 = vld [vmem:[%s3 + $0x34] sm:$0xf]
        %v5674 = vld [vmem:[%s3 + $0x38] sm:$0xf]
        %v5675 = vld [vmem:[%s3 + $0x3c] sm:$0xf]
        %v5676 = vld [vmem:[%s3 + $0x40] sm:$0xf]
        %v5677 = vld [vmem:[%s3 + $0x44] sm:$0xf]
        %v5678 = vld [vmem:[%s3 + $0x48] sm:$0xf]
        %v5679 = vld [vmem:[%s3 + $0x4c] sm:$0xf]
        %v5680 = vld [vmem:[%s3 + $0x50] sm:$0xf]
        %v5681 = vld [vmem:[%s3 + $0x54] sm:$0xf]
        %v5682 = vld [vmem:[%s3 + $0x58] sm:$0xf]
        %v5683 = vld [vmem:[%s3 + $0x5c] sm:$0xf]
        %v5684 = vld [vmem:[%s3 + $0x60] sm:$0xf]
        %v5685 = vld [vmem:[%s3 + $0x64] sm:$0xf]
        %v5686 = vld [vmem:[%s3 + $0x68] sm:$0xf]
        %v5687 = vld [vmem:[%s3 + $0x6c] sm:$0xf]
        %v5688 = vld [vmem:[%s3 + $0x70] sm:$0xf]
        %v5689 = vld [vmem:[%s3 + $0x74] sm:$0xf]
        %v5690 = vld [vmem:[%s3 + $0x78] sm:$0xf]
        %v5691 = vld [vmem:[%s3 + $0x7c] sm:$0xf]
        %v5692 = vld [vmem:[%s3 + $0x80] sm:$0xf]
        %v5693 = vld [vmem:[%s3 + $0x84] sm:$0xf]
        %v5694 = vld [vmem:[%s3 + $0x88] sm:$0xf]
        %v5695 = vld [vmem:[%s3 + $0x8c] sm:$0xf]
        %v5696 = vld [vmem:[%s3 + $0x90] sm:$0xf]
        %v5697 = vld [vmem:[%s3 + $0x94] sm:$0xf]
        %v5698 = vld [vmem:[%s3 + $0x98] sm:$0xf]
        %v5699 = vld [vmem:[%s3 + $0x9c] sm:$0xf]
        %v5700 = vld [vmem:[%s3 + $0xa0] sm:$0xf]
        %v5701 = vld [vmem:[%s3 + $0xa4] sm:$0xf]
        %v5702 = vld [vmem:[%s3 + $0xa8] sm:$0xf]
        %v5703 = vld [vmem:[%s3 + $0xac] sm:$0xf]
        %v5704 = vld [vmem:[%s3 + $0xb0] sm:$0xf]
        %v5705 = vld [vmem:[%s3 + $0xb4] sm:$0xf]
        %v5706 = vld [vmem:[%s3 + $0xb8] sm:$0xf]
        %v5707 = vld [vmem:[%s3 + $0xbc] sm:$0xf]
        %v5708 = vld [vmem:[%s3 + $0xc0] sm:$0xf]
        %v5709 = vld [vmem:[%s3 + $0xc4] sm:$0xf]
        %v5710 = vld [vmem:[%s3 + $0xc8] sm:$0xf]
        %v5711 = vld [vmem:[%s3 + $0xcc] sm:$0xf]
        %v5712 = vld [vmem:[%s3 + $0xd0] sm:$0xf]
        %v5713 = vld [vmem:[%s3 + $0xd4] sm:$0xf]
        %v5714 = vld [vmem:[%s3 + $0xd8] sm:$0xf]
        %v5715 = vld [vmem:[%s3 + $0xdc] sm:$0xf]
        %v5716 = vld [vmem:[%s3 + $0xe0] sm:$0xf]
        %v5717 = vld [vmem:[%s3 + $0xe4] sm:$0xf]
        %v5718 = vld [vmem:[%s3 + $0xe8] sm:$0xf]
        %v5719 = vld [vmem:[%s3 + $0xec] sm:$0xf]
        %v5720 = vld [vmem:[%s3 + $0xf0] sm:$0xf]
        %v5721 = vld [vmem:[%s3 + $0xf4] sm:$0xf]
        %v5722 = vld [vmem:[%s3 + $0xf8] sm:$0xf]
        %v5723 = vld [vmem:[%s3 + $0xfc] sm:$0xf]
        %v5724 = vld [vmem:[%s3 + $0x100] sm:$0xf]
        %v5725 = vld [vmem:[%s3 + $0x104] sm:$0xf]
        %v5726 = vld [vmem:[%s3 + $0x108] sm:$0xf]
        %v5727 = vld [vmem:[%s3 + $0x10c] sm:$0xf]
        %v5728 = vld [vmem:[%s3 + $0x110] sm:$0xf]
        %v5729 = vld [vmem:[%s3 + $0x114] sm:$0xf]
        %v5730 = vld [vmem:[%s3 + $0x118] sm:$0xf]
        %v5731 = vld [vmem:[%s3 + $0x11c] sm:$0xf]
        %v5732 = vld [vmem:[%s4] sm:$0x1]
        %v5734 = vperm.slane %v5732, 0
        %v5808 = vunpack.c.l.b16 %v5660
        %v5809 = vunpack.c.l.b16 %v5661
        %v5810 = vunpack.c.l.b16 %v5662
        %v5811 = vunpack.c.l.b16 %v5663
        %v5812 = vunpack.c.l.b16 %v5664
        %v5813 = vunpack.c.l.b16 %v5665
        %v5814 = vunpack.c.l.b16 %v5666
        %v5815 = vunpack.c.l.b16 %v5667
        %v5816 = vunpack.c.l.b16 %v5668
        %v5817 = vunpack.c.l.b16 %v5669
        %v5818 = vunpack.c.l.b16 %v5670
        %v5819 = vunpack.c.l.b16 %v5671
        %v5820 = vunpack.c.l.b16 %v5672
        %v5821 = vunpack.c.l.b16 %v5673
        %v5822 = vunpack.c.l.b16 %v5674
        %v5823 = vunpack.c.l.b16 %v5675
        %v5824 = vunpack.c.l.b16 %v5676
        %v5825 = vunpack.c.l.b16 %v5677
        %v5826 = vunpack.c.l.b16 %v5678
        %v5827 = vunpack.c.l.b16 %v5679
        %v5828 = vunpack.c.l.b16 %v5680
        %v5829 = vunpack.c.l.b16 %v5681
        %v5830 = vunpack.c.l.b16 %v5682
        %v5831 = vunpack.c.l.b16 %v5683
        %v5832 = vunpack.c.l.b16 %v5684
        %v5833 = vunpack.c.l.b16 %v5685
        %v5834 = vunpack.c.l.b16 %v5686
        %v5835 = vunpack.c.l.b16 %v5687
        %v5836 = vunpack.c.l.b16 %v5688
        %v5837 = vunpack.c.l.b16 %v5689
        %v5838 = vunpack.c.l.b16 %v5690
        %v5839 = vunpack.c.l.b16 %v5691
        %v5840 = vunpack.c.l.b16 %v5692
        %v5841 = vunpack.c.l.b16 %v5693
        %v5842 = vunpack.c.l.b16 %v5694
        %v5843 = vunpack.c.l.b16 %v5695
        %v5844 = vunpack.c.l.b16 %v5696
        %v5845 = vunpack.c.l.b16 %v5697
        %v5846 = vunpack.c.l.b16 %v5698
        %v5847 = vunpack.c.l.b16 %v5699
        %v5848 = vunpack.c.l.b16 %v5700
        %v5849 = vunpack.c.l.b16 %v5701
        %v5850 = vunpack.c.l.b16 %v5702
        %v5851 = vunpack.c.l.b16 %v5703
        %v5852 = vunpack.c.l.b16 %v5704
        %v5853 = vunpack.c.l.b16 %v5705
        %v5854 = vunpack.c.l.b16 %v5706
        %v5855 = vunpack.c.l.b16 %v5707
        %v5856 = vunpack.c.l.b16 %v5708
        %v5857 = vunpack.c.l.b16 %v5709
        %v5858 = vunpack.c.l.b16 %v5710
        %v5859 = vunpack.c.l.b16 %v5711
        %v5860 = vunpack.c.l.b16 %v5712
        %v5861 = vunpack.c.l.b16 %v5713
        %v5862 = vunpack.c.l.b16 %v5714
        %v5863 = vunpack.c.l.b16 %v5715
        %v5864 = vunpack.c.l.b16 %v5716
        %v5865 = vunpack.c.l.b16 %v5717
        %v5866 = vunpack.c.l.b16 %v5718
        %v5867 = vunpack.c.l.b16 %v5719
        %v5868 = vunpack.c.l.b16 %v5720
        %v5869 = vunpack.c.l.b16 %v5721
        %v5870 = vunpack.c.l.b16 %v5722
        %v5871 = vunpack.c.l.b16 %v5723
        %v5872 = vunpack.c.l.b16 %v5724
        %v5873 = vunpack.c.l.b16 %v5725
        %v5874 = vunpack.c.l.b16 %v5726
        %v5875 = vunpack.c.l.b16 %v5727
        %v5876 = vunpack.c.l.b16 %v5728
        %v5877 = vunpack.c.l.b16 %v5729
        %v5878 = vunpack.c.l.b16 %v5730
        %v5879 = vunpack.c.l.b16 %v5731
        %v5880 = vpack.c.b16 %v5809, %v5808
        %v5881 = vpack.c.b16 %v5811, %v5810
        %v5882 = vpack.c.b16 %v5813, %v5812
        %v5883 = vpack.c.b16 %v5815, %v5814
        %v5884 = vpack.c.b16 %v5817, %v5816
        %v5885 = vpack.c.b16 %v5819, %v5818
        %v5886 = vpack.c.b16 %v5821, %v5820
        %v5887 = vpack.c.b16 %v5823, %v5822
        %v5888 = vpack.c.b16 %v5825, %v5824
        %v5889 = vpack.c.b16 %v5827, %v5826
        %v5890 = vpack.c.b16 %v5829, %v5828
        %v5891 = vpack.c.b16 %v5831, %v5830
        %v5892 = vpack.c.b16 %v5833, %v5832
        %v5893 = vpack.c.b16 %v5835, %v5834
        %v5894 = vpack.c.b16 %v5837, %v5836
        %v5895 = vpack.c.b16 %v5839, %v5838
        %v5896 = vpack.c.b16 %v5841, %v5840
        %v5897 = vpack.c.b16 %v5843, %v5842
        %v5898 = vpack.c.b16 %v5845, %v5844
        %v5899 = vpack.c.b16 %v5847, %v5846
        %v5900 = vpack.c.b16 %v5849, %v5848
        %v5901 = vpack.c.b16 %v5851, %v5850
        %v5902 = vpack.c.b16 %v5853, %v5852
        %v5903 = vpack.c.b16 %v5855, %v5854
        %v5904 = vpack.c.b16 %v5857, %v5856
        %v5905 = vpack.c.b16 %v5859, %v5858
        %v5906 = vpack.c.b16 %v5861, %v5860
        %v5907 = vpack.c.b16 %v5863, %v5862
        %v5908 = vpack.c.b16 %v5865, %v5864
        %v5909 = vpack.c.b16 %v5867, %v5866
        %v5910 = vpack.c.b16 %v5869, %v5868
        %v5911 = vpack.c.b16 %v5871, %v5870
        %v5912 = vpack.c.b16 %v5873, %v5872
        %v5913 = vpack.c.b16 %v5875, %v5874
        %v5914 = vpack.c.b16 %v5877, %v5876
        %v5915 = vpack.c.b16 %v5879, %v5878
        %v5953 = vsel %vm5211, %v5117, 0
        %v5956 = vsel %vm5211, %v5120, 0
        %v5959 = vsel %vm5211, %v5123, 0
        %v5962 = vsel %vm5211, %v5126, 0
        %v5965 = vsel %vm5211, %v5129, 0
        %v5968 = vsel %vm5211, %v5132, 0
        %v5971 = vsel %vm5211, %v5135, 0
        %v5974 = vsel %vm5211, %v5138, 0
        %v5977 = vsel %vm5211, %v5141, 0
        %v5980 = vsel %vm5211, %v5144, 0
        %v5983 = vsel %vm5211, %v5147, 0
        %v5986 = vsel %vm5211, %v5150, 0
        %v5989 = vsel %vm5211, %v5153, 0
        %v5992 = vsel %vm5211, %v5156, 0
        %v5995 = vsel %vm5211, %v5159, 0
        %v5998 = vsel %vm5211, %v5162, 0
        %v6001 = vsel %vm5211, %v5165, 0
        %v6004 = vsel %vm5211, %v5168, 0
        %v6007 = vsel %vm5211, %v5171, 0
        %v6010 = vsel %vm5211, %v5174, 0
        %v6013 = vsel %vm5211, %v5177, 0
        %v6016 = vsel %vm5211, %v5180, 0
        %v6019 = vsel %vm5211, %v5183, 0
        %v6022 = vsel %vm5211, %v5186, 0
        %v6025 = vsel %vm5211, %v5189, 0
        %v6028 = vsel %vm5211, %v5192, 0
        %v6031 = vsel %vm5211, %v5195, 0
        %v6034 = vsel %vm5211, %v5198, 0
        %v6037 = vsel %vm5211, %v5201, 0
        %v6040 = vsel %vm5211, %v5204, 0
        %v6043 = vsel %vm5211, %v5207, 0
        %v6046 = vsel %vm5211, %v5210, 0
        %6048 = vmatpush.bf16.msra.mxu0 %v5887
        %6049 = vmatpush.bf16.msra.mxu0 %v5886
        %6050 = vmatpush.bf16.msra.mxu0 %v5885
        %6051 = vmatpush.bf16.msra.mxu0 %v5884
        %6052 = vmatpush.bf16.msra.mxu0 %v5883
        %6053 = vmatpush.bf16.msra.mxu0 %v5882
        %6054 = vmatpush.bf16.msra.mxu0 %v5881
        %6055 = vmatpush.bf16.msra.mxu0 %v5880
        %6056 = vmatmul.bf16.gmra.mxu0 %v5213
        %v6057 = vpop.f32.mrf.mxu0
        %v6058 = vadd.f32 %v5734, %v6057
        %v6059 = vpop.f32.mrf.mxu0
        %v6060 = vadd.f32 %v5734, %v6059
        %6061 = vmatmul.bf16.gmra.mxu0 %v5216
        %v6062 = vpop.f32.mrf.mxu0
        %v6063 = vadd.f32 %v5734, %v6062
        %v6064 = vpop.f32.mrf.mxu0
        %v6065 = vadd.f32 %v5734, %v6064
        %6066 = vmatmul.bf16.gmra.mxu0 %v5219
        %v6067 = vpop.f32.mrf.mxu0
        %v6068 = vadd.f32 %v5734, %v6067
        %v6069 = vpop.f32.mrf.mxu0
        %v6070 = vadd.f32 %v5734, %v6069
        %6071 = vmatmul.bf16.gmra.mxu0 %v5222
        %v6072 = vpop.f32.mrf.mxu0
        %v6073 = vadd.f32 %v5734, %v6072
        %v6074 = vpop.f32.mrf.mxu0
        %v6075 = vadd.f32 %v5734, %v6074
        %6076 = vmatmul.bf16.gmra.mxu0 %v5225
        %v6077 = vpop.f32.mrf.mxu0
        %v6078 = vadd.f32 %v5734, %v6077
        %v6079 = vpop.f32.mrf.mxu0
        %v6080 = vadd.f32 %v5734, %v6079
        %6081 = vmatmul.bf16.gmra.mxu0 %v5228
        %v6082 = vpop.f32.mrf.mxu0
        %v6083 = vadd.f32 %v5734, %v6082
        %v6084 = vpop.f32.mrf.mxu0
        %v6085 = vadd.f32 %v5734, %v6084
        %6086 = vmatmul.bf16.gmra.mxu0 %v5231
        %v6087 = vpop.f32.mrf.mxu0
        %v6088 = vadd.f32 %v5734, %v6087
        %v6089 = vpop.f32.mrf.mxu0
        %v6090 = vadd.f32 %v5734, %v6089
        %6091 = vmatmul.bf16.gmra.mxu0 %v5234
        %v6092 = vpop.f32.mrf.mxu0
        %v6093 = vadd.f32 %v5734, %v6092
        %v6094 = vpop.f32.mrf.mxu0
        %v6095 = vadd.f32 %v5734, %v6094
        %6096 = vmatmul.bf16.gmra.mxu0 %v5237
        %v6097 = vpop.f32.mrf.mxu0
        %v6098 = vadd.f32 %v5734, %v6097
        %v6099 = vpop.f32.mrf.mxu0
        %v6100 = vadd.f32 %v5734, %v6099
        %6101 = vmatmul.bf16.gmra.mxu0 %v5240
        %v6102 = vpop.f32.mrf.mxu0
        %v6103 = vadd.f32 %v5734, %v6102
        %v6104 = vpop.f32.mrf.mxu0
        %v6105 = vadd.f32 %v5734, %v6104
        %6106 = vmatmul.bf16.gmra.mxu0 %v5243
        %v6107 = vpop.f32.mrf.mxu0
        %v6108 = vadd.f32 %v5734, %v6107
        %v6109 = vpop.f32.mrf.mxu0
        %v6110 = vadd.f32 %v5734, %v6109
        %6111 = vmatmul.bf16.gmra.mxu0 %v5246
        %v6112 = vpop.f32.mrf.mxu0
        %v6113 = vadd.f32 %v5734, %v6112
        %v6114 = vpop.f32.mrf.mxu0
        %v6115 = vadd.f32 %v5734, %v6114
        %6116 = vmatmul.bf16.gmra.mxu0 %v5249
        %v6117 = vpop.f32.mrf.mxu0
        %v6118 = vadd.f32 %v5734, %v6117
        %v6119 = vpop.f32.mrf.mxu0
        %v6120 = vadd.f32 %v5734, %v6119
        %6121 = vmatmul.bf16.gmra.mxu0 %v5252
        %v6122 = vpop.f32.mrf.mxu0
        %v6123 = vadd.f32 %v5734, %v6122
        %v6124 = vpop.f32.mrf.mxu0
        %v6125 = vadd.f32 %v5734, %v6124
        %6126 = vmatmul.bf16.gmra.mxu0 %v5255
        %v6127 = vpop.f32.mrf.mxu0
        %v6128 = vadd.f32 %v5734, %v6127
        %v6129 = vpop.f32.mrf.mxu0
        %v6130 = vadd.f32 %v5734, %v6129
        %6131 = vmatmul.bf16.gmra.mxu0 %v5258
        %v6132 = vpop.f32.mrf.mxu0
        %v6133 = vadd.f32 %v5734, %v6132
        %v6134 = vpop.f32.mrf.mxu0
        %v6135 = vadd.f32 %v5734, %v6134
        %6136 = vmatmul.bf16.gmra.mxu0 %v5261
        %v6137 = vpop.f32.mrf.mxu0
        %v6138 = vadd.f32 %v5734, %v6137
        %v6139 = vpop.f32.mrf.mxu0
        %v6140 = vadd.f32 %v5734, %v6139
        %6141 = vmatmul.bf16.gmra.mxu0 %v5264
        %v6142 = vpop.f32.mrf.mxu0
        %v6143 = vadd.f32 %v5734, %v6142
        %v6144 = vpop.f32.mrf.mxu0
        %v6145 = vadd.f32 %v5734, %v6144
        %6146 = vmatmul.bf16.gmra.mxu0 %v5267
        %v6147 = vpop.f32.mrf.mxu0
        %v6148 = vadd.f32 %v5734, %v6147
        %v6149 = vpop.f32.mrf.mxu0
        %v6150 = vadd.f32 %v5734, %v6149
        %6151 = vmatmul.bf16.gmra.mxu0 %v5270
        %v6152 = vpop.f32.mrf.mxu0
        %v6153 = vadd.f32 %v5734, %v6152
        %v6154 = vpop.f32.mrf.mxu0
        %v6155 = vadd.f32 %v5734, %v6154
        %6156 = vmatmul.bf16.gmra.mxu0 %v5273
        %v6157 = vpop.f32.mrf.mxu0
        %v6158 = vadd.f32 %v5734, %v6157
        %v6159 = vpop.f32.mrf.mxu0
        %v6160 = vadd.f32 %v5734, %v6159
        %6161 = vmatmul.bf16.gmra.mxu0 %v5276
        %v6162 = vpop.f32.mrf.mxu0
        %v6163 = vadd.f32 %v5734, %v6162
        %v6164 = vpop.f32.mrf.mxu0
        %v6165 = vadd.f32 %v5734, %v6164
        %6166 = vmatmul.bf16.gmra.mxu0 %v5279
        %v6167 = vpop.f32.mrf.mxu0
        %v6168 = vadd.f32 %v5734, %v6167
        %v6169 = vpop.f32.mrf.mxu0
        %v6170 = vadd.f32 %v5734, %v6169
        %6171 = vmatmul.bf16.gmra.mxu0 %v5282
        %v6172 = vpop.f32.mrf.mxu0
        %v6173 = vadd.f32 %v5734, %v6172
        %v6174 = vpop.f32.mrf.mxu0
        %v6175 = vadd.f32 %v5734, %v6174
        %6176 = vmatmul.bf16.gmra.mxu0 %v5285
        %v6177 = vpop.f32.mrf.mxu0
        %v6178 = vadd.f32 %v5734, %v6177
        %v6179 = vpop.f32.mrf.mxu0
        %v6180 = vadd.f32 %v5734, %v6179
        %6181 = vmatmul.bf16.gmra.mxu0 %v5288
        %v6182 = vpop.f32.mrf.mxu0
        %v6183 = vadd.f32 %v5734, %v6182
        %v6184 = vpop.f32.mrf.mxu0
        %v6185 = vadd.f32 %v5734, %v6184
        %6186 = vmatmul.bf16.gmra.mxu0 %v5291
        %v6187 = vpop.f32.mrf.mxu0
        %v6188 = vadd.f32 %v5734, %v6187
        %v6189 = vpop.f32.mrf.mxu0
        %v6190 = vadd.f32 %v5734, %v6189
        %6191 = vmatmul.bf16.gmra.mxu0 %v5294
        %v6192 = vpop.f32.mrf.mxu0
        %v6193 = vadd.f32 %v5734, %v6192
        %v6194 = vpop.f32.mrf.mxu0
        %v6195 = vadd.f32 %v5734, %v6194
        %6196 = vmatmul.bf16.gmra.mxu0 %v5297
        %v6197 = vpop.f32.mrf.mxu0
        %v6198 = vadd.f32 %v5734, %v6197
        %v6199 = vpop.f32.mrf.mxu0
        %v6200 = vadd.f32 %v5734, %v6199
        %6201 = vmatmul.bf16.gmra.mxu0 %v5300
        %v6202 = vpop.f32.mrf.mxu0
        %v6203 = vadd.f32 %v5734, %v6202
        %v6204 = vpop.f32.mrf.mxu0
        %v6205 = vadd.f32 %v5734, %v6204
        %6206 = vmatmul.bf16.gmra.mxu0 %v5303
        %v6207 = vpop.f32.mrf.mxu0
        %v6208 = vadd.f32 %v5734, %v6207
        %v6209 = vpop.f32.mrf.mxu0
        %v6210 = vadd.f32 %v5734, %v6209
        %6211 = vmatmul.bf16.gmra.mxu0 %v5306
        %v6212 = vpop.f32.mrf.mxu0
        %v6213 = vadd.f32 %v5734, %v6212
        %v6214 = vpop.f32.mrf.mxu0
        %v6215 = vadd.f32 %v5734, %v6214
        %6216 = vdwg.mxu0
        %6217 = vmatpush.bf16.msra.mxu0 %v5895
        %6218 = vmatpush.bf16.msra.mxu0 %v5894
        %6219 = vmatpush.bf16.msra.mxu0 %v5893
        %6220 = vmatpush.bf16.msra.mxu0 %v5892
        %6221 = vmatpush.bf16.msra.mxu0 %v5891
        %6222 = vmatpush.bf16.msra.mxu0 %v5890
        %6223 = vmatpush.bf16.msra.mxu0 %v5889
        %6224 = vmatpush.bf16.msra.mxu0 %v5888
        %6225 = vmatmul.bf16.gmra.mxu0 %v5310
        %v6226 = vpop.f32.mrf.mxu0
        %v6227 = vadd.f32 %v6058, %v6226
        %v6228 = vpop.f32.mrf.mxu0
        %v6229 = vadd.f32 %v6060, %v6228
        %6230 = vmatmul.bf16.gmra.mxu0 %v5314
        %v6231 = vpop.f32.mrf.mxu0
        %v6232 = vadd.f32 %v6063, %v6231
        %v6233 = vpop.f32.mrf.mxu0
        %v6234 = vadd.f32 %v6065, %v6233
        %6235 = vmatmul.bf16.gmra.mxu0 %v5318
        %v6236 = vpop.f32.mrf.mxu0
        %v6237 = vadd.f32 %v6068, %v6236
        %v6238 = vpop.f32.mrf.mxu0
        %v6239 = vadd.f32 %v6070, %v6238
        %6240 = vmatmul.bf16.gmra.mxu0 %v5322
        %v6241 = vpop.f32.mrf.mxu0
        %v6242 = vadd.f32 %v6073, %v6241
        %v6243 = vpop.f32.mrf.mxu0
        %v6244 = vadd.f32 %v6075, %v6243
        %6245 = vmatmul.bf16.gmra.mxu0 %v5326
        %v6246 = vpop.f32.mrf.mxu0
        %v6247 = vadd.f32 %v6078, %v6246
        %v6248 = vpop.f32.mrf.mxu0
        %v6249 = vadd.f32 %v6080, %v6248
        %6250 = vmatmul.bf16.gmra.mxu0 %v5330
        %v6251 = vpop.f32.mrf.mxu0
        %v6252 = vadd.f32 %v6083, %v6251
        %v6253 = vpop.f32.mrf.mxu0
        %v6254 = vadd.f32 %v6085, %v6253
        %6255 = vmatmul.bf16.gmra.mxu0 %v5334
        %v6256 = vpop.f32.mrf.mxu0
        %v6257 = vadd.f32 %v6088, %v6256
        %v6258 = vpop.f32.mrf.mxu0
        %v6259 = vadd.f32 %v6090, %v6258
        %6260 = vmatmul.bf16.gmra.mxu0 %v5338
        %v6261 = vpop.f32.mrf.mxu0
        %v6262 = vadd.f32 %v6093, %v6261
        %v6263 = vpop.f32.mrf.mxu0
        %v6264 = vadd.f32 %v6095, %v6263
        %6265 = vmatmul.bf16.gmra.mxu0 %v5342
        %v6266 = vpop.f32.mrf.mxu0
        %v6267 = vadd.f32 %v6098, %v6266
        %v6268 = vpop.f32.mrf.mxu0
        %v6269 = vadd.f32 %v6100, %v6268
        %6270 = vmatmul.bf16.gmra.mxu0 %v5346
        %v6271 = vpop.f32.mrf.mxu0
        %v6272 = vadd.f32 %v6103, %v6271
        %v6273 = vpop.f32.mrf.mxu0
        %v6274 = vadd.f32 %v6105, %v6273
        %6275 = vmatmul.bf16.gmra.mxu0 %v5350
        %v6276 = vpop.f32.mrf.mxu0
        %v6277 = vadd.f32 %v6108, %v6276
        %v6278 = vpop.f32.mrf.mxu0
        %v6279 = vadd.f32 %v6110, %v6278
        %6280 = vmatmul.bf16.gmra.mxu0 %v5354
        %v6281 = vpop.f32.mrf.mxu0
        %v6282 = vadd.f32 %v6113, %v6281
        %v6283 = vpop.f32.mrf.mxu0
        %v6284 = vadd.f32 %v6115, %v6283
        %6285 = vmatmul.bf16.gmra.mxu0 %v5358
        %v6286 = vpop.f32.mrf.mxu0
        %v6287 = vadd.f32 %v6118, %v6286
        %v6288 = vpop.f32.mrf.mxu0
        %v6289 = vadd.f32 %v6120, %v6288
        %6290 = vmatmul.bf16.gmra.mxu0 %v5362
        %v6291 = vpop.f32.mrf.mxu0
        %v6292 = vadd.f32 %v6123, %v6291
        %v6293 = vpop.f32.mrf.mxu0
        %v6294 = vadd.f32 %v6125, %v6293
        %6295 = vmatmul.bf16.gmra.mxu0 %v5366
        %v6296 = vpop.f32.mrf.mxu0
        %v6297 = vadd.f32 %v6128, %v6296
        %v6298 = vpop.f32.mrf.mxu0
        %v6299 = vadd.f32 %v6130, %v6298
        %6300 = vmatmul.bf16.gmra.mxu0 %v5370
        %v6301 = vpop.f32.mrf.mxu0
        %v6302 = vadd.f32 %v6133, %v6301
        %v6303 = vpop.f32.mrf.mxu0
        %v6304 = vadd.f32 %v6135, %v6303
        %6305 = vmatmul.bf16.gmra.mxu0 %v5374
        %v6306 = vpop.f32.mrf.mxu0
        %v6307 = vadd.f32 %v6138, %v6306
        %v6308 = vpop.f32.mrf.mxu0
        %v6309 = vadd.f32 %v6140, %v6308
        %6310 = vmatmul.bf16.gmra.mxu0 %v5378
        %v6311 = vpop.f32.mrf.mxu0
        %v6312 = vadd.f32 %v6143, %v6311
        %v6313 = vpop.f32.mrf.mxu0
        %v6314 = vadd.f32 %v6145, %v6313
        %6315 = vmatmul.bf16.gmra.mxu0 %v5382
        %v6316 = vpop.f32.mrf.mxu0
        %v6317 = vadd.f32 %v6148, %v6316
        %v6318 = vpop.f32.mrf.mxu0
        %v6319 = vadd.f32 %v6150, %v6318
        %6320 = vmatmul.bf16.gmra.mxu0 %v5386
        %v6321 = vpop.f32.mrf.mxu0
        %v6322 = vadd.f32 %v6153, %v6321
        %v6323 = vpop.f32.mrf.mxu0
        %v6324 = vadd.f32 %v6155, %v6323
        %6325 = vmatmul.bf16.gmra.mxu0 %v5390
        %v6326 = vpop.f32.mrf.mxu0
        %v6327 = vadd.f32 %v6158, %v6326
        %v6328 = vpop.f32.mrf.mxu0
        %v6329 = vadd.f32 %v6160, %v6328
        %6330 = vmatmul.bf16.gmra.mxu0 %v5394
        %v6331 = vpop.f32.mrf.mxu0
        %v6332 = vadd.f32 %v6163, %v6331
        %v6333 = vpop.f32.mrf.mxu0
        %v6334 = vadd.f32 %v6165, %v6333
        %6335 = vmatmul.bf16.gmra.mxu0 %v5398
        %v6336 = vpop.f32.mrf.mxu0
        %v6337 = vadd.f32 %v6168, %v6336
        %v6338 = vpop.f32.mrf.mxu0
        %v6339 = vadd.f32 %v6170, %v6338
        %6340 = vmatmul.bf16.gmra.mxu0 %v5402
        %v6341 = vpop.f32.mrf.mxu0
        %v6342 = vadd.f32 %v6173, %v6341
        %v6343 = vpop.f32.mrf.mxu0
        %v6344 = vadd.f32 %v6175, %v6343
        %6345 = vmatmul.bf16.gmra.mxu0 %v5406
        %v6346 = vpop.f32.mrf.mxu0
        %v6347 = vadd.f32 %v6178, %v6346
        %v6348 = vpop.f32.mrf.mxu0
        %v6349 = vadd.f32 %v6180, %v6348
        %6350 = vmatmul.bf16.gmra.mxu0 %v5410
        %v6351 = vpop.f32.mrf.mxu0
        %v6352 = vadd.f32 %v6183, %v6351
        %v6353 = vpop.f32.mrf.mxu0
        %v6354 = vadd.f32 %v6185, %v6353
        %6355 = vmatmul.bf16.gmra.mxu0 %v5414
        %v6356 = vpop.f32.mrf.mxu0
        %v6357 = vadd.f32 %v6188, %v6356
        %v6358 = vpop.f32.mrf.mxu0
        %v6359 = vadd.f32 %v6190, %v6358
        %6360 = vmatmul.bf16.gmra.mxu0 %v5418
        %v6361 = vpop.f32.mrf.mxu0
        %v6362 = vadd.f32 %v6193, %v6361
        %v6363 = vpop.f32.mrf.mxu0
        %v6364 = vadd.f32 %v6195, %v6363
        %6365 = vmatmul.bf16.gmra.mxu0 %v5422
        %v6366 = vpop.f32.mrf.mxu0
        %v6367 = vadd.f32 %v6198, %v6366
        %v6368 = vpop.f32.mrf.mxu0
        %v6369 = vadd.f32 %v6200, %v6368
        %6370 = vmatmul.bf16.gmra.mxu0 %v5426
        %v6371 = vpop.f32.mrf.mxu0
        %v6372 = vadd.f32 %v6203, %v6371
        %v6373 = vpop.f32.mrf.mxu0
        %v6374 = vadd.f32 %v6205, %v6373
        %6375 = vmatmul.bf16.gmra.mxu0 %v5430
        %v6376 = vpop.f32.mrf.mxu0
        %v6377 = vadd.f32 %v6208, %v6376
        %v6378 = vpop.f32.mrf.mxu0
        %v6379 = vadd.f32 %v6210, %v6378
        %6380 = vmatmul.bf16.gmra.mxu0 %v5434
        %v6381 = vpop.f32.mrf.mxu0
        %v6382 = vadd.f32 %v6213, %v6381
        %v6383 = vpop.f32.mrf.mxu0
        %v6384 = vadd.f32 %v6215, %v6383
        %6385 = vdwg.mxu0
        %6386 = vmatpush.bf16.msra.mxu0 %v5903
        %6387 = vmatpush.bf16.msra.mxu0 %v5902
        %6388 = vmatpush.bf16.msra.mxu0 %v5901
        %6389 = vmatpush.bf16.msra.mxu0 %v5900
        %6390 = vmatpush.bf16.msra.mxu0 %v5899
        %6391 = vmatpush.bf16.msra.mxu0 %v5898
        %6392 = vmatpush.bf16.msra.mxu0 %v5897
        %6393 = vmatpush.bf16.msra.mxu0 %v5896
        %6394 = vmatmul.bf16.gmra.mxu0 %v5438
        %v6395 = vpop.f32.mrf.mxu0
        %v6396 = vadd.f32 %v6227, %v6395
        %v6397 = vpop.f32.mrf.mxu0
        %v6398 = vadd.f32 %v6229, %v6397
        %6399 = vmatmul.bf16.gmra.mxu0 %v5442
        %v6400 = vpop.f32.mrf.mxu0
        %v6401 = vadd.f32 %v6232, %v6400
        %v6402 = vpop.f32.mrf.mxu0
        %v6403 = vadd.f32 %v6234, %v6402
        %6404 = vmatmul.bf16.gmra.mxu0 %v5446
        %v6405 = vpop.f32.mrf.mxu0
        %v6406 = vadd.f32 %v6237, %v6405
        %v6407 = vpop.f32.mrf.mxu0
        %v6408 = vadd.f32 %v6239, %v6407
        %6409 = vmatmul.bf16.gmra.mxu0 %v5450
        %v6410 = vpop.f32.mrf.mxu0
        %v6411 = vadd.f32 %v6242, %v6410
        %v6412 = vpop.f32.mrf.mxu0
        %v6413 = vadd.f32 %v6244, %v6412
        %6414 = vmatmul.bf16.gmra.mxu0 %v5454
        %v6415 = vpop.f32.mrf.mxu0
        %v6416 = vadd.f32 %v6247, %v6415
        %v6417 = vpop.f32.mrf.mxu0
        %v6418 = vadd.f32 %v6249, %v6417
        %6419 = vmatmul.bf16.gmra.mxu0 %v5458
        %v6420 = vpop.f32.mrf.mxu0
        %v6421 = vadd.f32 %v6252, %v6420
        %v6422 = vpop.f32.mrf.mxu0
        %v6423 = vadd.f32 %v6254, %v6422
        %6424 = vmatmul.bf16.gmra.mxu0 %v5462
        %v6425 = vpop.f32.mrf.mxu0
        %v6426 = vadd.f32 %v6257, %v6425
        %v6427 = vpop.f32.mrf.mxu0
        %v6428 = vadd.f32 %v6259, %v6427
        %6429 = vmatmul.bf16.gmra.mxu0 %v5466
        %v6430 = vpop.f32.mrf.mxu0
        %v6431 = vadd.f32 %v6262, %v6430
        %v6432 = vpop.f32.mrf.mxu0
        %v6433 = vadd.f32 %v6264, %v6432
        %6434 = vmatmul.bf16.gmra.mxu0 %v5470
        %v6435 = vpop.f32.mrf.mxu0
        %v6436 = vadd.f32 %v6267, %v6435
        %v6437 = vpop.f32.mrf.mxu0
        %v6438 = vadd.f32 %v6269, %v6437
        %6439 = vmatmul.bf16.gmra.mxu0 %v5474
        %v6440 = vpop.f32.mrf.mxu0
        %v6441 = vadd.f32 %v6272, %v6440
        %v6442 = vpop.f32.mrf.mxu0
        %v6443 = vadd.f32 %v6274, %v6442
        %6444 = vmatmul.bf16.gmra.mxu0 %v5478
        %v6445 = vpop.f32.mrf.mxu0
        %v6446 = vadd.f32 %v6277, %v6445
        %v6447 = vpop.f32.mrf.mxu0
        %v6448 = vadd.f32 %v6279, %v6447
        %6449 = vmatmul.bf16.gmra.mxu0 %v5482
        %v6450 = vpop.f32.mrf.mxu0
        %v6451 = vadd.f32 %v6282, %v6450
        %v6452 = vpop.f32.mrf.mxu0
        %v6453 = vadd.f32 %v6284, %v6452
        %6454 = vmatmul.bf16.gmra.mxu0 %v5486
        %v6455 = vpop.f32.mrf.mxu0
        %v6456 = vadd.f32 %v6287, %v6455
        %v6457 = vpop.f32.mrf.mxu0
        %v6458 = vadd.f32 %v6289, %v6457
        %6459 = vmatmul.bf16.gmra.mxu0 %v5490
        %v6460 = vpop.f32.mrf.mxu0
        %v6461 = vadd.f32 %v6292, %v6460
        %v6462 = vpop.f32.mrf.mxu0
        %v6463 = vadd.f32 %v6294, %v6462
        %6464 = vmatmul.bf16.gmra.mxu0 %v5494
        %v6465 = vpop.f32.mrf.mxu0
        %v6466 = vadd.f32 %v6297, %v6465
        %v6467 = vpop.f32.mrf.mxu0
        %v6468 = vadd.f32 %v6299, %v6467
        %6469 = vmatmul.bf16.gmra.mxu0 %v5498
        %v6470 = vpop.f32.mrf.mxu0
        %v6471 = vadd.f32 %v6302, %v6470
        %v6472 = vpop.f32.mrf.mxu0
        %v6473 = vadd.f32 %v6304, %v6472
        %6474 = vmatmul.bf16.gmra.mxu0 %v5502
        %v6475 = vpop.f32.mrf.mxu0
        %v6476 = vadd.f32 %v6307, %v6475
        %v6477 = vpop.f32.mrf.mxu0
        %v6478 = vadd.f32 %v6309, %v6477
        %6479 = vmatmul.bf16.gmra.mxu0 %v5506
        %v6480 = vpop.f32.mrf.mxu0
        %v6481 = vadd.f32 %v6312, %v6480
        %v6482 = vpop.f32.mrf.mxu0
        %v6483 = vadd.f32 %v6314, %v6482
        %6484 = vmatmul.bf16.gmra.mxu0 %v5510
        %v6485 = vpop.f32.mrf.mxu0
        %v6486 = vadd.f32 %v6317, %v6485
        %v6487 = vpop.f32.mrf.mxu0
        %v6488 = vadd.f32 %v6319, %v6487
        %6489 = vmatmul.bf16.gmra.mxu0 %v5514
        %v6490 = vpop.f32.mrf.mxu0
        %v6491 = vadd.f32 %v6322, %v6490
        %v6492 = vpop.f32.mrf.mxu0
        %v6493 = vadd.f32 %v6324, %v6492
        %6494 = vmatmul.bf16.gmra.mxu0 %v5518
        %v6495 = vpop.f32.mrf.mxu0
        %v6496 = vadd.f32 %v6327, %v6495
        %v6497 = vpop.f32.mrf.mxu0
        %v6498 = vadd.f32 %v6329, %v6497
        %6499 = vmatmul.bf16.gmra.mxu0 %v5522
        %v6500 = vpop.f32.mrf.mxu0
        %v6501 = vadd.f32 %v6332, %v6500
        %v6502 = vpop.f32.mrf.mxu0
        %v6503 = vadd.f32 %v6334, %v6502
        %6504 = vmatmul.bf16.gmra.mxu0 %v5526
        %v6505 = vpop.f32.mrf.mxu0
        %v6506 = vadd.f32 %v6337, %v6505
        %v6507 = vpop.f32.mrf.mxu0
        %v6508 = vadd.f32 %v6339, %v6507
        %6509 = vmatmul.bf16.gmra.mxu0 %v5530
        %v6510 = vpop.f32.mrf.mxu0
        %v6511 = vadd.f32 %v6342, %v6510
        %v6512 = vpop.f32.mrf.mxu0
        %v6513 = vadd.f32 %v6344, %v6512
        %6514 = vmatmul.bf16.gmra.mxu0 %v5534
        %v6515 = vpop.f32.mrf.mxu0
        %v6516 = vadd.f32 %v6347, %v6515
        %v6517 = vpop.f32.mrf.mxu0
        %v6518 = vadd.f32 %v6349, %v6517
        %6519 = vmatmul.bf16.gmra.mxu0 %v5538
        %v6520 = vpop.f32.mrf.mxu0
        %v6521 = vadd.f32 %v6352, %v6520
        %v6522 = vpop.f32.mrf.mxu0
        %v6523 = vadd.f32 %v6354, %v6522
        %6524 = vmatmul.bf16.gmra.mxu0 %v5542
        %v6525 = vpop.f32.mrf.mxu0
        %v6526 = vadd.f32 %v6357, %v6525
        %v6527 = vpop.f32.mrf.mxu0
        %v6528 = vadd.f32 %v6359, %v6527
        %6529 = vmatmul.bf16.gmra.mxu0 %v5546
        %v6530 = vpop.f32.mrf.mxu0
        %v6531 = vadd.f32 %v6362, %v6530
        %v6532 = vpop.f32.mrf.mxu0
        %v6533 = vadd.f32 %v6364, %v6532
        %6534 = vmatmul.bf16.gmra.mxu0 %v5550
        %v6535 = vpop.f32.mrf.mxu0
        %v6536 = vadd.f32 %v6367, %v6535
        %v6537 = vpop.f32.mrf.mxu0
        %v6538 = vadd.f32 %v6369, %v6537
        %6539 = vmatmul.bf16.gmra.mxu0 %v5554
        %v6540 = vpop.f32.mrf.mxu0
        %v6541 = vadd.f32 %v6372, %v6540
        %v6542 = vpop.f32.mrf.mxu0
        %v6543 = vadd.f32 %v6374, %v6542
        %6544 = vmatmul.bf16.gmra.mxu0 %v5558
        %v6545 = vpop.f32.mrf.mxu0
        %v6546 = vadd.f32 %v6377, %v6545
        %v6547 = vpop.f32.mrf.mxu0
        %v6548 = vadd.f32 %v6379, %v6547
        %6549 = vmatmul.bf16.gmra.mxu0 %v5562
        %v6550 = vpop.f32.mrf.mxu0
        %v6551 = vadd.f32 %v6382, %v6550
        %v6552 = vpop.f32.mrf.mxu0
        %v6553 = vadd.f32 %v6384, %v6552
        %6554 = vdwg.mxu0
        %6555 = vmatpush.bf16.msra.mxu0 %v5911
        %6556 = vmatpush.bf16.msra.mxu0 %v5910
        %6557 = vmatpush.bf16.msra.mxu0 %v5909
        %6558 = vmatpush.bf16.msra.mxu0 %v5908
        %6559 = vmatpush.bf16.msra.mxu0 %v5907
        %6560 = vmatpush.bf16.msra.mxu0 %v5906
        %6561 = vmatpush.bf16.msra.mxu0 %v5905
        %6562 = vmatpush.bf16.msra.mxu0 %v5904
        %6563 = vmatmul.bf16.gmra.mxu0 %v5565
        %v6564 = vpop.f32.mrf.mxu0
        %v6565 = vadd.f32 %v6396, %v6564
        %v6566 = vpop.f32.mrf.mxu0
        %v6567 = vadd.f32 %v6398, %v6566
        %6568 = vmatmul.bf16.gmra.mxu0 %v5568
        %v6569 = vpop.f32.mrf.mxu0
        %v6570 = vadd.f32 %v6401, %v6569
        %v6571 = vpop.f32.mrf.mxu0
        %v6572 = vadd.f32 %v6403, %v6571
        %6573 = vmatmul.bf16.gmra.mxu0 %v5571
        %v6574 = vpop.f32.mrf.mxu0
        %v6575 = vadd.f32 %v6406, %v6574
        %v6576 = vpop.f32.mrf.mxu0
        %v6577 = vadd.f32 %v6408, %v6576
        %6578 = vmatmul.bf16.gmra.mxu0 %v5574
        %v6579 = vpop.f32.mrf.mxu0
        %v6580 = vadd.f32 %v6411, %v6579
        %v6581 = vpop.f32.mrf.mxu0
        %v6582 = vadd.f32 %v6413, %v6581
        %6583 = vmatmul.bf16.gmra.mxu0 %v5577
        %v6584 = vpop.f32.mrf.mxu0
        %v6585 = vadd.f32 %v6416, %v6584
        %v6586 = vpop.f32.mrf.mxu0
        %v6587 = vadd.f32 %v6418, %v6586
        %6588 = vmatmul.bf16.gmra.mxu0 %v5580
        %v6589 = vpop.f32.mrf.mxu0
        %v6590 = vadd.f32 %v6421, %v6589
        %v6591 = vpop.f32.mrf.mxu0
        %v6592 = vadd.f32 %v6423, %v6591
        %6593 = vmatmul.bf16.gmra.mxu0 %v5583
        %v6594 = vpop.f32.mrf.mxu0
        %v6595 = vadd.f32 %v6426, %v6594
        %v6596 = vpop.f32.mrf.mxu0
        %v6597 = vadd.f32 %v6428, %v6596
        %6598 = vmatmul.bf16.gmra.mxu0 %v5586
        %v6599 = vpop.f32.mrf.mxu0
        %v6600 = vadd.f32 %v6431, %v6599
        %v6601 = vpop.f32.mrf.mxu0
        %v6602 = vadd.f32 %v6433, %v6601
        %6603 = vmatmul.bf16.gmra.mxu0 %v5589
        %v6604 = vpop.f32.mrf.mxu0
        %v6605 = vadd.f32 %v6436, %v6604
        %v6606 = vpop.f32.mrf.mxu0
        %v6607 = vadd.f32 %v6438, %v6606
        %6608 = vmatmul.bf16.gmra.mxu0 %v5592
        %v6609 = vpop.f32.mrf.mxu0
        %v6610 = vadd.f32 %v6441, %v6609
        %v6611 = vpop.f32.mrf.mxu0
        %v6612 = vadd.f32 %v6443, %v6611
        %6613 = vmatmul.bf16.gmra.mxu0 %v5595
        %v6614 = vpop.f32.mrf.mxu0
        %v6615 = vadd.f32 %v6446, %v6614
        %v6616 = vpop.f32.mrf.mxu0
        %v6617 = vadd.f32 %v6448, %v6616
        %6618 = vmatmul.bf16.gmra.mxu0 %v5598
        %v6619 = vpop.f32.mrf.mxu0
        %v6620 = vadd.f32 %v6451, %v6619
        %v6621 = vpop.f32.mrf.mxu0
        %v6622 = vadd.f32 %v6453, %v6621
        %6623 = vmatmul.bf16.gmra.mxu0 %v5601
        %v6624 = vpop.f32.mrf.mxu0
        %v6625 = vadd.f32 %v6456, %v6624
        %v6626 = vpop.f32.mrf.mxu0
        %v6627 = vadd.f32 %v6458, %v6626
        %6628 = vmatmul.bf16.gmra.mxu0 %v5604
        %v6629 = vpop.f32.mrf.mxu0
        %v6630 = vadd.f32 %v6461, %v6629
        %v6631 = vpop.f32.mrf.mxu0
        %v6632 = vadd.f32 %v6463, %v6631
        %6633 = vmatmul.bf16.gmra.mxu0 %v5607
        %v6634 = vpop.f32.mrf.mxu0
        %v6635 = vadd.f32 %v6466, %v6634
        %v6636 = vpop.f32.mrf.mxu0
        %v6637 = vadd.f32 %v6468, %v6636
        %6638 = vmatmul.bf16.gmra.mxu0 %v5610
        %v6639 = vpop.f32.mrf.mxu0
        %v6640 = vadd.f32 %v6471, %v6639
        %v6641 = vpop.f32.mrf.mxu0
        %v6642 = vadd.f32 %v6473, %v6641
        %6643 = vmatmul.bf16.gmra.mxu0 %v5613
        %v6644 = vpop.f32.mrf.mxu0
        %v6645 = vadd.f32 %v6476, %v6644
        %v6646 = vpop.f32.mrf.mxu0
        %v6647 = vadd.f32 %v6478, %v6646
        %6648 = vmatmul.bf16.gmra.mxu0 %v5616
        %v6649 = vpop.f32.mrf.mxu0
        %v6650 = vadd.f32 %v6481, %v6649
        %v6651 = vpop.f32.mrf.mxu0
        %v6652 = vadd.f32 %v6483, %v6651
        %6653 = vmatmul.bf16.gmra.mxu0 %v5619
        %v6654 = vpop.f32.mrf.mxu0
        %v6655 = vadd.f32 %v6486, %v6654
        %v6656 = vpop.f32.mrf.mxu0
        %v6657 = vadd.f32 %v6488, %v6656
        %6658 = vmatmul.bf16.gmra.mxu0 %v5622
        %v6659 = vpop.f32.mrf.mxu0
        %v6660 = vadd.f32 %v6491, %v6659
        %v6661 = vpop.f32.mrf.mxu0
        %v6662 = vadd.f32 %v6493, %v6661
        %6663 = vmatmul.bf16.gmra.mxu0 %v5625
        %v6664 = vpop.f32.mrf.mxu0
        %v6665 = vadd.f32 %v6496, %v6664
        %v6666 = vpop.f32.mrf.mxu0
        %v6667 = vadd.f32 %v6498, %v6666
        %6668 = vmatmul.bf16.gmra.mxu0 %v5628
        %v6669 = vpop.f32.mrf.mxu0
        %v6670 = vadd.f32 %v6501, %v6669
        %v6671 = vpop.f32.mrf.mxu0
        %v6672 = vadd.f32 %v6503, %v6671
        %6673 = vmatmul.bf16.gmra.mxu0 %v5631
        %v6674 = vpop.f32.mrf.mxu0
        %v6675 = vadd.f32 %v6506, %v6674
        %v6676 = vpop.f32.mrf.mxu0
        %v6677 = vadd.f32 %v6508, %v6676
        %6678 = vmatmul.bf16.gmra.mxu0 %v5634
        %v6679 = vpop.f32.mrf.mxu0
        %v6680 = vadd.f32 %v6511, %v6679
        %v6681 = vpop.f32.mrf.mxu0
        %v6682 = vadd.f32 %v6513, %v6681
        %6683 = vmatmul.bf16.gmra.mxu0 %v5637
        %v6684 = vpop.f32.mrf.mxu0
        %v6685 = vadd.f32 %v6516, %v6684
        %v6686 = vpop.f32.mrf.mxu0
        %v6687 = vadd.f32 %v6518, %v6686
        %6688 = vmatmul.bf16.gmra.mxu0 %v5640
        %v6689 = vpop.f32.mrf.mxu0
        %v6690 = vadd.f32 %v6521, %v6689
        %v6691 = vpop.f32.mrf.mxu0
        %v6692 = vadd.f32 %v6523, %v6691
        %6693 = vmatmul.bf16.gmra.mxu0 %v5643
        %v6694 = vpop.f32.mrf.mxu0
        %v6695 = vadd.f32 %v6526, %v6694
        %v6696 = vpop.f32.mrf.mxu0
        %v6697 = vadd.f32 %v6528, %v6696
        %6698 = vmatmul.bf16.gmra.mxu0 %v5646
        %v6699 = vpop.f32.mrf.mxu0
        %v6700 = vadd.f32 %v6531, %v6699
        %v6701 = vpop.f32.mrf.mxu0
        %v6702 = vadd.f32 %v6533, %v6701
        %6703 = vmatmul.bf16.gmra.mxu0 %v5649
        %v6704 = vpop.f32.mrf.mxu0
        %v6705 = vadd.f32 %v6536, %v6704
        %v6706 = vpop.f32.mrf.mxu0
        %v6707 = vadd.f32 %v6538, %v6706
        %6708 = vmatmul.bf16.gmra.mxu0 %v5652
        %v6709 = vpop.f32.mrf.mxu0
        %v6710 = vadd.f32 %v6541, %v6709
        %v6711 = vpop.f32.mrf.mxu0
        %v6712 = vadd.f32 %v6543, %v6711
        %6713 = vmatmul.bf16.gmra.mxu0 %v5655
        %v6714 = vpop.f32.mrf.mxu0
        %v6715 = vadd.f32 %v6546, %v6714
        %v6716 = vpop.f32.mrf.mxu0
        %v6717 = vadd.f32 %v6548, %v6716
        %6718 = vmatmul.bf16.gmra.mxu0 %v5658
        %v6719 = vpop.f32.mrf.mxu0
        %v6720 = vadd.f32 %v6551, %v6719
        %v6721 = vpop.f32.mrf.mxu0
        %v6722 = vadd.f32 %v6553, %v6721
        %6723 = vdwg.mxu0
        %6724 = vmatpush.bf16.msra.mxu0 0
        %6725 = vmatpush.bf16.msra.mxu0 0
        %6726 = vmatpush.bf16.msra.mxu0 0
        %6727 = vmatpush.bf16.msra.mxu0 0
        %6728 = vmatpush.bf16.msra.mxu0 %v5915
        %6729 = vmatpush.bf16.msra.mxu0 %v5914
        %6730 = vmatpush.bf16.msra.mxu0 %v5913
        %6731 = vmatpush.bf16.msra.mxu0 %v5912
        %6732 = vmatmul.bf16.gmra.mxu0 %v5953
        %v6733 = vpop.f32.mrf.mxu0
        %v6734 = vadd.f32 %v6565, %v6733
        %v6735 = vpop.f32.mrf.mxu0
        %v6736 = vadd.f32 %v6567, %v6735
        %6737 = vmatmul.bf16.gmra.mxu0 %v5956
        %v6738 = vpop.f32.mrf.mxu0
        %v6739 = vadd.f32 %v6570, %v6738
        %v6740 = vpop.f32.mrf.mxu0
        %v6741 = vadd.f32 %v6572, %v6740
        %6742 = vmatmul.bf16.gmra.mxu0 %v5959
        %v6743 = vpop.f32.mrf.mxu0
        %v6744 = vadd.f32 %v6575, %v6743
        %v6745 = vpop.f32.mrf.mxu0
        %v6746 = vadd.f32 %v6577, %v6745
        %6747 = vmatmul.bf16.gmra.mxu0 %v5962
        %v6748 = vpop.f32.mrf.mxu0
        %v6749 = vadd.f32 %v6580, %v6748
        %v6750 = vpop.f32.mrf.mxu0
        %v6751 = vadd.f32 %v6582, %v6750
        %6752 = vmatmul.bf16.gmra.mxu0 %v5965
        %v6753 = vpop.f32.mrf.mxu0
        %v6754 = vadd.f32 %v6585, %v6753
        %v6755 = vpop.f32.mrf.mxu0
        %v6756 = vadd.f32 %v6587, %v6755
        %6757 = vmatmul.bf16.gmra.mxu0 %v5968
        %v6758 = vpop.f32.mrf.mxu0
        %v6759 = vadd.f32 %v6590, %v6758
        %v6760 = vpop.f32.mrf.mxu0
        %v6761 = vadd.f32 %v6592, %v6760
        %6762 = vmatmul.bf16.gmra.mxu0 %v5971
        %v6763 = vpop.f32.mrf.mxu0
        %v6764 = vadd.f32 %v6595, %v6763
        %v6765 = vpop.f32.mrf.mxu0
        %v6766 = vadd.f32 %v6597, %v6765
        %6767 = vmatmul.bf16.gmra.mxu0 %v5974
        %v6768 = vpop.f32.mrf.mxu0
        %v6769 = vadd.f32 %v6600, %v6768
        %v6770 = vpop.f32.mrf.mxu0
        %v6771 = vadd.f32 %v6602, %v6770
        %6772 = vmatmul.bf16.gmra.mxu0 %v5977
        %v6773 = vpop.f32.mrf.mxu0
        %v6774 = vadd.f32 %v6605, %v6773
        %v6775 = vpop.f32.mrf.mxu0
        %v6776 = vadd.f32 %v6607, %v6775
        %6777 = vmatmul.bf16.gmra.mxu0 %v5980
        %v6778 = vpop.f32.mrf.mxu0
        %v6779 = vadd.f32 %v6610, %v6778
        %v6780 = vpop.f32.mrf.mxu0
        %v6781 = vadd.f32 %v6612, %v6780
        %6782 = vmatmul.bf16.gmra.mxu0 %v5983
        %v6783 = vpop.f32.mrf.mxu0
        %v6784 = vadd.f32 %v6615, %v6783
        %v6785 = vpop.f32.mrf.mxu0
        %v6786 = vadd.f32 %v6617, %v6785
        %6787 = vmatmul.bf16.gmra.mxu0 %v5986
        %v6788 = vpop.f32.mrf.mxu0
        %v6789 = vadd.f32 %v6620, %v6788
        %v6790 = vpop.f32.mrf.mxu0
        %v6791 = vadd.f32 %v6622, %v6790
        %6792 = vmatmul.bf16.gmra.mxu0 %v5989
        %v6793 = vpop.f32.mrf.mxu0
        %v6794 = vadd.f32 %v6625, %v6793
        %v6795 = vpop.f32.mrf.mxu0
        %v6796 = vadd.f32 %v6627, %v6795
        %6797 = vmatmul.bf16.gmra.mxu0 %v5992
        %v6798 = vpop.f32.mrf.mxu0
        %v6799 = vadd.f32 %v6630, %v6798
        %v6800 = vpop.f32.mrf.mxu0
        %v6801 = vadd.f32 %v6632, %v6800
        %6802 = vmatmul.bf16.gmra.mxu0 %v5995
        %v6803 = vpop.f32.mrf.mxu0
        %v6804 = vadd.f32 %v6635, %v6803
        %v6805 = vpop.f32.mrf.mxu0
        %v6806 = vadd.f32 %v6637, %v6805
        %6807 = vmatmul.bf16.gmra.mxu0 %v5998
        %v6808 = vpop.f32.mrf.mxu0
        %v6809 = vadd.f32 %v6640, %v6808
        %v6810 = vpop.f32.mrf.mxu0
        %v6811 = vadd.f32 %v6642, %v6810
        %6812 = vmatmul.bf16.gmra.mxu0 %v6001
        %v6813 = vpop.f32.mrf.mxu0
        %v6814 = vadd.f32 %v6645, %v6813
        %v6815 = vpop.f32.mrf.mxu0
        %v6816 = vadd.f32 %v6647, %v6815
        %6817 = vmatmul.bf16.gmra.mxu0 %v6004
        %v6818 = vpop.f32.mrf.mxu0
        %v6819 = vadd.f32 %v6650, %v6818
        %v6820 = vpop.f32.mrf.mxu0
        %v6821 = vadd.f32 %v6652, %v6820
        %6822 = vmatmul.bf16.gmra.mxu0 %v6007
        %v6823 = vpop.f32.mrf.mxu0
        %v6824 = vadd.f32 %v6655, %v6823
        %v6825 = vpop.f32.mrf.mxu0
        %v6826 = vadd.f32 %v6657, %v6825
        %6827 = vmatmul.bf16.gmra.mxu0 %v6010
        %v6828 = vpop.f32.mrf.mxu0
        %v6829 = vadd.f32 %v6660, %v6828
        %v6830 = vpop.f32.mrf.mxu0
        %v6831 = vadd.f32 %v6662, %v6830
        %6832 = vmatmul.bf16.gmra.mxu0 %v6013
        %v6833 = vpop.f32.mrf.mxu0
        %v6834 = vadd.f32 %v6665, %v6833
        %v6835 = vpop.f32.mrf.mxu0
        %v6836 = vadd.f32 %v6667, %v6835
        %6837 = vmatmul.bf16.gmra.mxu0 %v6016
        %v6838 = vpop.f32.mrf.mxu0
        %v6839 = vadd.f32 %v6670, %v6838
        %v6840 = vpop.f32.mrf.mxu0
        %v6841 = vadd.f32 %v6672, %v6840
        %6842 = vmatmul.bf16.gmra.mxu0 %v6019
        %v6843 = vpop.f32.mrf.mxu0
        %v6844 = vadd.f32 %v6675, %v6843
        %v6845 = vpop.f32.mrf.mxu0
        %v6846 = vadd.f32 %v6677, %v6845
        %6847 = vmatmul.bf16.gmra.mxu0 %v6022
        %v6848 = vpop.f32.mrf.mxu0
        %v6849 = vadd.f32 %v6680, %v6848
        %v6850 = vpop.f32.mrf.mxu0
        %v6851 = vadd.f32 %v6682, %v6850
        %6852 = vmatmul.bf16.gmra.mxu0 %v6025
        %v6853 = vpop.f32.mrf.mxu0
        %v6854 = vadd.f32 %v6685, %v6853
        %v6855 = vpop.f32.mrf.mxu0
        %v6856 = vadd.f32 %v6687, %v6855
        %6857 = vmatmul.bf16.gmra.mxu0 %v6028
        %v6858 = vpop.f32.mrf.mxu0
        %v6859 = vadd.f32 %v6690, %v6858
        %v6860 = vpop.f32.mrf.mxu0
        %v6861 = vadd.f32 %v6692, %v6860
        %6862 = vmatmul.bf16.gmra.mxu0 %v6031
        %v6863 = vpop.f32.mrf.mxu0
        %v6864 = vadd.f32 %v6695, %v6863
        %v6865 = vpop.f32.mrf.mxu0
        %v6866 = vadd.f32 %v6697, %v6865
        %6867 = vmatmul.bf16.gmra.mxu0 %v6034
        %v6868 = vpop.f32.mrf.mxu0
        %v6869 = vadd.f32 %v6700, %v6868
        %v6870 = vpop.f32.mrf.mxu0
        %v6871 = vadd.f32 %v6702, %v6870
        %6872 = vmatmul.bf16.gmra.mxu0 %v6037
        %v6873 = vpop.f32.mrf.mxu0
        %v6874 = vadd.f32 %v6705, %v6873
        %v6875 = vpop.f32.mrf.mxu0
        %v6876 = vadd.f32 %v6707, %v6875
        %6877 = vmatmul.bf16.gmra.mxu0 %v6040
        %v6878 = vpop.f32.mrf.mxu0
        %v6879 = vadd.f32 %v6710, %v6878
        %v6880 = vpop.f32.mrf.mxu0
        %v6881 = vadd.f32 %v6712, %v6880
        %6882 = vmatmul.bf16.gmra.mxu0 %v6043
        %v6883 = vpop.f32.mrf.mxu0
        %v6884 = vadd.f32 %v6715, %v6883
        %v6885 = vpop.f32.mrf.mxu0
        %v6886 = vadd.f32 %v6717, %v6885
        %6887 = vmatmul.bf16.gmra.mxu0 %v6046
        %v6888 = vpop.f32.mrf.mxu0
        %v6889 = vadd.f32 %v6720, %v6888
        %v6890 = vpop.f32.mrf.mxu0
        %v6891 = vadd.f32 %v6722, %v6890
        %6892 = vdwg.mxu0
        %v6893 = vmax.f32 %v6734, 0.0
        %v6894 = vmax.f32 %v6736, 0.0
        %v6895 = vmax.f32 %v6739, 0.0
        %v6896 = vmax.f32 %v6741, 0.0
        %v6897 = vmax.f32 %v6744, 0.0
        %v6898 = vmax.f32 %v6746, 0.0
        %v6899 = vmax.f32 %v6749, 0.0
        %v6900 = vmax.f32 %v6751, 0.0
        %v6901 = vmax.f32 %v6754, 0.0
        %v6902 = vmax.f32 %v6756, 0.0
        %v6903 = vmax.f32 %v6759, 0.0
        %v6904 = vmax.f32 %v6761, 0.0
        %v6905 = vmax.f32 %v6764, 0.0
        %v6906 = vmax.f32 %v6766, 0.0
        %v6907 = vmax.f32 %v6769, 0.0
        %v6908 = vmax.f32 %v6771, 0.0
        %v6909 = vmax.f32 %v6774, 0.0
        %v6910 = vmax.f32 %v6776, 0.0
        %v6911 = vmax.f32 %v6779, 0.0
        %v6912 = vmax.f32 %v6781, 0.0
        %v6913 = vmax.f32 %v6784, 0.0
        %v6914 = vmax.f32 %v6786, 0.0
        %v6915 = vmax.f32 %v6789, 0.0
        %v6916 = vmax.f32 %v6791, 0.0
        %v6917 = vmax.f32 %v6794, 0.0
        %v6918 = vmax.f32 %v6796, 0.0
        %v6919 = vmax.f32 %v6799, 0.0
        %v6920 = vmax.f32 %v6801, 0.0
        %v6921 = vmax.f32 %v6804, 0.0
        %v6922 = vmax.f32 %v6806, 0.0
        %v6923 = vmax.f32 %v6809, 0.0
        %v6924 = vmax.f32 %v6811, 0.0
        %v6925 = vmax.f32 %v6814, 0.0
        %v6926 = vmax.f32 %v6816, 0.0
        %v6927 = vmax.f32 %v6819, 0.0
        %v6928 = vmax.f32 %v6821, 0.0
        %v6929 = vmax.f32 %v6824, 0.0
        %v6930 = vmax.f32 %v6826, 0.0
        %v6931 = vmax.f32 %v6829, 0.0
        %v6932 = vmax.f32 %v6831, 0.0
        %v6933 = vmax.f32 %v6834, 0.0
        %v6934 = vmax.f32 %v6836, 0.0
        %v6935 = vmax.f32 %v6839, 0.0
        %v6936 = vmax.f32 %v6841, 0.0
        %v6937 = vmax.f32 %v6844, 0.0
        %v6938 = vmax.f32 %v6846, 0.0
        %v6939 = vmax.f32 %v6849, 0.0
        %v6940 = vmax.f32 %v6851, 0.0
        %v6941 = vmax.f32 %v6854, 0.0
        %v6942 = vmax.f32 %v6856, 0.0
        %v6943 = vmax.f32 %v6859, 0.0
        %v6944 = vmax.f32 %v6861, 0.0
        %v6945 = vmax.f32 %v6864, 0.0
        %v6946 = vmax.f32 %v6866, 0.0
        %v6947 = vmax.f32 %v6869, 0.0
        %v6948 = vmax.f32 %v6871, 0.0
        %v6949 = vmax.f32 %v6874, 0.0
        %v6950 = vmax.f32 %v6876, 0.0
        %v6951 = vmax.f32 %v6879, 0.0
        %v6952 = vmax.f32 %v6881, 0.0
        %v6953 = vmax.f32 %v6884, 0.0
        %v6954 = vmax.f32 %v6886, 0.0
        %v6955 = vmax.f32 %v6889, 0.0
        %v6956 = vmax.f32 %v6891, 0.0
        %v6957 = vpack.c.bf16 %v6894, %v6893
        %v6958 = vpack.c.bf16 %v6896, %v6895
        %v6959 = vpack.c.bf16 %v6898, %v6897
        %v6960 = vpack.c.bf16 %v6900, %v6899
        %v6961 = vpack.c.bf16 %v6902, %v6901
        %v6962 = vpack.c.bf16 %v6904, %v6903
        %v6963 = vpack.c.bf16 %v6906, %v6905
        %v6964 = vpack.c.bf16 %v6908, %v6907
        %v6965 = vpack.c.bf16 %v6910, %v6909
        %v6966 = vpack.c.bf16 %v6912, %v6911
        %v6967 = vpack.c.bf16 %v6914, %v6913
        %v6968 = vpack.c.bf16 %v6916, %v6915
        %v6969 = vpack.c.bf16 %v6918, %v6917
        %v6970 = vpack.c.bf16 %v6920, %v6919
        %v6971 = vpack.c.bf16 %v6922, %v6921
        %v6972 = vpack.c.bf16 %v6924, %v6923
        %v6973 = vpack.c.bf16 %v6926, %v6925
        %v6974 = vpack.c.bf16 %v6928, %v6927
        %v6975 = vpack.c.bf16 %v6930, %v6929
        %v6976 = vpack.c.bf16 %v6932, %v6931
        %v6977 = vpack.c.bf16 %v6934, %v6933
        %v6978 = vpack.c.bf16 %v6936, %v6935
        %v6979 = vpack.c.bf16 %v6938, %v6937
        %v6980 = vpack.c.bf16 %v6940, %v6939
        %v6981 = vpack.c.bf16 %v6942, %v6941
        %v6982 = vpack.c.bf16 %v6944, %v6943
        %v6983 = vpack.c.bf16 %v6946, %v6945
        %v6984 = vpack.c.bf16 %v6948, %v6947
        %v6985 = vpack.c.bf16 %v6950, %v6949
        %v6986 = vpack.c.bf16 %v6952, %v6951
        %v6987 = vpack.c.bf16 %v6954, %v6953
        %v6988 = vpack.c.bf16 %v6956, %v6955
        %v6989 = vld [vmem:[%s5] sm:$0xff]
        %v6990 = vld [vmem:[%s5 + $0x8] sm:$0xff]
        %v6991 = vld [vmem:[%s5 + $0x10] sm:$0xff]
        %v6992 = vld [vmem:[%s5 + $0x18] sm:$0xff]
        %v6993 = vld [vmem:[%s5 + $0x20] sm:$0xff]
        %v6994 = vld [vmem:[%s5 + $0x28] sm:$0xff]
        %v6995 = vld [vmem:[%s5 + $0x30] sm:$0xff]
        %v6996 = vld [vmem:[%s5 + $0x38] sm:$0xff]
        %v6997 = vld [vmem:[%s6] sm:$0x3]
        %v6999 = vperm.slane %v6997, 0
        %v7000 = vperm.slane %v6997, 1
        %v7011 = vunpack.c.l.b16 %v6989
        %v7012 = vunpack.c.h.b16 %v6989
        %v7013 = vunpack.c.l.b16 %v6990
        %v7014 = vunpack.c.h.b16 %v6990
        %v7015 = vunpack.c.l.b16 %v6991
        %v7016 = vunpack.c.h.b16 %v6991
        %v7017 = vunpack.c.l.b16 %v6992
        %v7018 = vunpack.c.h.b16 %v6992
        %v7019 = vunpack.c.l.b16 %v6993
        %v7020 = vunpack.c.h.b16 %v6993
        %v7021 = vunpack.c.l.b16 %v6994
        %v7022 = vunpack.c.h.b16 %v6994
        %v7023 = vunpack.c.l.b16 %v6995
        %v7024 = vunpack.c.h.b16 %v6995
        %v7025 = vunpack.c.l.b16 %v6996
        %v7026 = vunpack.c.h.b16 %v6996
        %v7027 = vpack.c.b16 %v7013, %v7011
        %v7028 = vpack.c.b16 %v7014, %v7012
        %v7029 = vpack.c.b16 %v7017, %v7015
        %v7030 = vpack.c.b16 %v7018, %v7016
        %v7031 = vpack.c.b16 %v7021, %v7019
        %v7032 = vpack.c.b16 %v7022, %v7020
        %v7033 = vpack.c.b16 %v7025, %v7023
        %v7034 = vpack.c.b16 %v7026, %v7024
        %v7044 = vsel %vm5211, %v6957, 0
        %v7047 = vsel %vm5211, %v6958, 0
        %v7050 = vsel %vm5211, %v6959, 0
        %v7053 = vsel %vm5211, %v6960, 0
        %v7056 = vsel %vm5211, %v6961, 0
        %v7059 = vsel %vm5211, %v6962, 0
        %v7062 = vsel %vm5211, %v6963, 0
        %v7065 = vsel %vm5211, %v6964, 0
        %v7068 = vsel %vm5211, %v6965, 0
        %v7071 = vsel %vm5211, %v6966, 0
        %v7074 = vsel %vm5211, %v6967, 0
        %v7077 = vsel %vm5211, %v6968, 0
        %v7080 = vsel %vm5211, %v6969, 0
        %v7083 = vsel %vm5211, %v6970, 0
        %v7086 = vsel %vm5211, %v6971, 0
        %v7089 = vsel %vm5211, %v6972, 0
        %v7092 = vsel %vm5211, %v6973, 0
        %v7095 = vsel %vm5211, %v6974, 0
        %v7098 = vsel %vm5211, %v6975, 0
        %v7101 = vsel %vm5211, %v6976, 0
        %v7104 = vsel %vm5211, %v6977, 0
        %v7107 = vsel %vm5211, %v6978, 0
        %v7110 = vsel %vm5211, %v6979, 0
        %v7113 = vsel %vm5211, %v6980, 0
        %v7116 = vsel %vm5211, %v6981, 0
        %v7119 = vsel %vm5211, %v6982, 0
        %v7122 = vsel %vm5211, %v6983, 0
        %v7125 = vsel %vm5211, %v6984, 0
        %v7128 = vsel %vm5211, %v6985, 0
        %v7131 = vsel %vm5211, %v6986, 0
        %v7134 = vsel %vm5211, %v6987, 0
        %v7137 = vsel %vm5211, %v6988, 0
        %7139 = vmatpush.bf16.msra.mxu0 0
        %7140 = vmatpush.bf16.msra.mxu0 0
        %7141 = vmatpush.bf16.msra.mxu0 0
        %7142 = vmatpush.bf16.msra.mxu0 0
        %7143 = vmatpush.bf16.msra.mxu0 %v7033
        %7144 = vmatpush.bf16.msra.mxu0 %v7031
        %7145 = vmatpush.bf16.msra.mxu0 %v7029
        %7146 = vmatpush.bf16.msra.mxu0 %v7027
        %7147 = vmatmul.bf16.gmra.mxu0 %v7044
        %v7148 = vpop.f32.mrf.mxu0
        %v7149 = vadd.f32 %v6999, %v7148
        %v7150 = vpop.f32.mrf.mxu0
        %v7151 = vadd.f32 %v6999, %v7150
        %7152 = vmatmul.bf16.gmra.mxu0 %v7047
        %v7153 = vpop.f32.mrf.mxu0
        %v7154 = vadd.f32 %v6999, %v7153
        %v7155 = vpop.f32.mrf.mxu0
        %v7156 = vadd.f32 %v6999, %v7155
        %7157 = vmatmul.bf16.gmra.mxu0 %v7050
        %v7158 = vpop.f32.mrf.mxu0
        %v7159 = vadd.f32 %v6999, %v7158
        %v7160 = vpop.f32.mrf.mxu0
        %v7161 = vadd.f32 %v6999, %v7160
        %7162 = vmatmul.bf16.gmra.mxu0 %v7053
        %v7163 = vpop.f32.mrf.mxu0
        %v7164 = vadd.f32 %v6999, %v7163
        %v7165 = vpop.f32.mrf.mxu0
        %v7166 = vadd.f32 %v6999, %v7165
        %7167 = vmatmul.bf16.gmra.mxu0 %v7056
        %v7168 = vpop.f32.mrf.mxu0
        %v7169 = vadd.f32 %v6999, %v7168
        %v7170 = vpop.f32.mrf.mxu0
        %v7171 = vadd.f32 %v6999, %v7170
        %7172 = vmatmul.bf16.gmra.mxu0 %v7059
        %v7173 = vpop.f32.mrf.mxu0
        %v7174 = vadd.f32 %v6999, %v7173
        %v7175 = vpop.f32.mrf.mxu0
        %v7176 = vadd.f32 %v6999, %v7175
        %7177 = vmatmul.bf16.gmra.mxu0 %v7062
        %v7178 = vpop.f32.mrf.mxu0
        %v7179 = vadd.f32 %v6999, %v7178
        %v7180 = vpop.f32.mrf.mxu0
        %v7181 = vadd.f32 %v6999, %v7180
        %7182 = vmatmul.bf16.gmra.mxu0 %v7065
        %v7183 = vpop.f32.mrf.mxu0
        %v7184 = vadd.f32 %v6999, %v7183
        %v7185 = vpop.f32.mrf.mxu0
        %v7186 = vadd.f32 %v6999, %v7185
        %7187 = vmatmul.bf16.gmra.mxu0 %v7068
        %v7188 = vpop.f32.mrf.mxu0
        %v7189 = vadd.f32 %v6999, %v7188
        %v7190 = vpop.f32.mrf.mxu0
        %v7191 = vadd.f32 %v6999, %v7190
        %7192 = vmatmul.bf16.gmra.mxu0 %v7071
        %v7193 = vpop.f32.mrf.mxu0
        %v7194 = vadd.f32 %v6999, %v7193
        %v7195 = vpop.f32.mrf.mxu0
        %v7196 = vadd.f32 %v6999, %v7195
        %7197 = vmatmul.bf16.gmra.mxu0 %v7074
        %v7198 = vpop.f32.mrf.mxu0
        %v7199 = vadd.f32 %v6999, %v7198
        %v7200 = vpop.f32.mrf.mxu0
        %v7201 = vadd.f32 %v6999, %v7200
        %7202 = vmatmul.bf16.gmra.mxu0 %v7077
        %v7203 = vpop.f32.mrf.mxu0
        %v7204 = vadd.f32 %v6999, %v7203
        %v7205 = vpop.f32.mrf.mxu0
        %v7206 = vadd.f32 %v6999, %v7205
        %7207 = vmatmul.bf16.gmra.mxu0 %v7080
        %v7208 = vpop.f32.mrf.mxu0
        %v7209 = vadd.f32 %v6999, %v7208
        %v7210 = vpop.f32.mrf.mxu0
        %v7211 = vadd.f32 %v6999, %v7210
        %7212 = vmatmul.bf16.gmra.mxu0 %v7083
        %v7213 = vpop.f32.mrf.mxu0
        %v7214 = vadd.f32 %v6999, %v7213
        %v7215 = vpop.f32.mrf.mxu0
        %v7216 = vadd.f32 %v6999, %v7215
        %7217 = vmatmul.bf16.gmra.mxu0 %v7086
        %v7218 = vpop.f32.mrf.mxu0
        %v7219 = vadd.f32 %v6999, %v7218
        %v7220 = vpop.f32.mrf.mxu0
        %v7221 = vadd.f32 %v6999, %v7220
        %7222 = vmatmul.bf16.gmra.mxu0 %v7089
        %v7223 = vpop.f32.mrf.mxu0
        %v7224 = vadd.f32 %v6999, %v7223
        %v7225 = vpop.f32.mrf.mxu0
        %v7226 = vadd.f32 %v6999, %v7225
        %7227 = vmatmul.bf16.gmra.mxu0 %v7092
        %v7228 = vpop.f32.mrf.mxu0
        %v7229 = vadd.f32 %v6999, %v7228
        %v7230 = vpop.f32.mrf.mxu0
        %v7231 = vadd.f32 %v6999, %v7230
        %7232 = vmatmul.bf16.gmra.mxu0 %v7095
        %v7233 = vpop.f32.mrf.mxu0
        %v7234 = vadd.f32 %v6999, %v7233
        %v7235 = vpop.f32.mrf.mxu0
        %v7236 = vadd.f32 %v6999, %v7235
        %7237 = vmatmul.bf16.gmra.mxu0 %v7098
        %v7238 = vpop.f32.mrf.mxu0
        %v7239 = vadd.f32 %v6999, %v7238
        %v7240 = vpop.f32.mrf.mxu0
        %v7241 = vadd.f32 %v6999, %v7240
        %7242 = vmatmul.bf16.gmra.mxu0 %v7101
        %v7243 = vpop.f32.mrf.mxu0
        %v7244 = vadd.f32 %v6999, %v7243
        %v7245 = vpop.f32.mrf.mxu0
        %v7246 = vadd.f32 %v6999, %v7245
        %7247 = vmatmul.bf16.gmra.mxu0 %v7104
        %v7248 = vpop.f32.mrf.mxu0
        %v7249 = vadd.f32 %v6999, %v7248
        %v7250 = vpop.f32.mrf.mxu0
        %v7251 = vadd.f32 %v6999, %v7250
        %7252 = vmatmul.bf16.gmra.mxu0 %v7107
        %v7253 = vpop.f32.mrf.mxu0
        %v7254 = vadd.f32 %v6999, %v7253
        %v7255 = vpop.f32.mrf.mxu0
        %v7256 = vadd.f32 %v6999, %v7255
        %7257 = vmatmul.bf16.gmra.mxu0 %v7110
        %v7258 = vpop.f32.mrf.mxu0
        %v7259 = vadd.f32 %v6999, %v7258
        %v7260 = vpop.f32.mrf.mxu0
        %v7261 = vadd.f32 %v6999, %v7260
        %7262 = vmatmul.bf16.gmra.mxu0 %v7113
        %v7263 = vpop.f32.mrf.mxu0
        %v7264 = vadd.f32 %v6999, %v7263
        %v7265 = vpop.f32.mrf.mxu0
        %v7266 = vadd.f32 %v6999, %v7265
        %7267 = vmatmul.bf16.gmra.mxu0 %v7116
        %v7268 = vpop.f32.mrf.mxu0
        %v7269 = vadd.f32 %v6999, %v7268
        %v7270 = vpop.f32.mrf.mxu0
        %v7271 = vadd.f32 %v6999, %v7270
        %7272 = vmatmul.bf16.gmra.mxu0 %v7119
        %v7273 = vpop.f32.mrf.mxu0
        %v7274 = vadd.f32 %v6999, %v7273
        %v7275 = vpop.f32.mrf.mxu0
        %v7276 = vadd.f32 %v6999, %v7275
        %7277 = vmatmul.bf16.gmra.mxu0 %v7122
        %v7278 = vpop.f32.mrf.mxu0
        %v7279 = vadd.f32 %v6999, %v7278
        %v7280 = vpop.f32.mrf.mxu0
        %v7281 = vadd.f32 %v6999, %v7280
        %7282 = vmatmul.bf16.gmra.mxu0 %v7125
        %v7283 = vpop.f32.mrf.mxu0
        %v7284 = vadd.f32 %v6999, %v7283
        %v7285 = vpop.f32.mrf.mxu0
        %v7286 = vadd.f32 %v6999, %v7285
        %7287 = vmatmul.bf16.gmra.mxu0 %v7128
        %v7288 = vpop.f32.mrf.mxu0
        %v7289 = vadd.f32 %v6999, %v7288
        %v7290 = vpop.f32.mrf.mxu0
        %v7291 = vadd.f32 %v6999, %v7290
        %7292 = vmatmul.bf16.gmra.mxu0 %v7131
        %v7293 = vpop.f32.mrf.mxu0
        %v7294 = vadd.f32 %v6999, %v7293
        %v7295 = vpop.f32.mrf.mxu0
        %v7296 = vadd.f32 %v6999, %v7295
        %7297 = vmatmul.bf16.gmra.mxu0 %v7134
        %v7298 = vpop.f32.mrf.mxu0
        %v7299 = vadd.f32 %v6999, %v7298
        %v7300 = vpop.f32.mrf.mxu0
        %v7301 = vadd.f32 %v6999, %v7300
        %7302 = vmatmul.bf16.gmra.mxu0 %v7137
        %v7303 = vpop.f32.mrf.mxu0
        %v7304 = vadd.f32 %v6999, %v7303
        %v7305 = vpop.f32.mrf.mxu0
        %v7306 = vadd.f32 %v6999, %v7305
        %7307 = vdwg.mxu0
        %7308 = vmatpush.bf16.msra.mxu0 0
        %7309 = vmatpush.bf16.msra.mxu0 0
        %7310 = vmatpush.bf16.msra.mxu0 0
        %7311 = vmatpush.bf16.msra.mxu0 0
        %7312 = vmatpush.bf16.msra.mxu0 %v7034
        %7313 = vmatpush.bf16.msra.mxu0 %v7032
        %7314 = vmatpush.bf16.msra.mxu0 %v7030
        %7315 = vmatpush.bf16.msra.mxu0 %v7028
        %7316 = vmatmul.bf16.gmra.mxu0 %v7044
        %v7317 = vpop.f32.mrf.mxu0
        %v7318 = vadd.f32 %v7000, %v7317
        %v7319 = vpop.f32.mrf.mxu0
        %v7320 = vadd.f32 %v7000, %v7319
        %7321 = vmatmul.bf16.gmra.mxu0 %v7047
        %v7322 = vpop.f32.mrf.mxu0
        %v7323 = vadd.f32 %v7000, %v7322
        %v7324 = vpop.f32.mrf.mxu0
        %v7325 = vadd.f32 %v7000, %v7324
        %7326 = vmatmul.bf16.gmra.mxu0 %v7050
        %v7327 = vpop.f32.mrf.mxu0
        %v7328 = vadd.f32 %v7000, %v7327
        %v7329 = vpop.f32.mrf.mxu0
        %v7330 = vadd.f32 %v7000, %v7329
        %7331 = vmatmul.bf16.gmra.mxu0 %v7053
        %v7332 = vpop.f32.mrf.mxu0
        %v7333 = vadd.f32 %v7000, %v7332
        %v7334 = vpop.f32.mrf.mxu0
        %v7335 = vadd.f32 %v7000, %v7334
        %7336 = vmatmul.bf16.gmra.mxu0 %v7056
        %v7337 = vpop.f32.mrf.mxu0
        %v7338 = vadd.f32 %v7000, %v7337
        %v7339 = vpop.f32.mrf.mxu0
        %v7340 = vadd.f32 %v7000, %v7339
        %7341 = vmatmul.bf16.gmra.mxu0 %v7059
        %v7342 = vpop.f32.mrf.mxu0
        %v7343 = vadd.f32 %v7000, %v7342
        %v7344 = vpop.f32.mrf.mxu0
        %v7345 = vadd.f32 %v7000, %v7344
        %7346 = vmatmul.bf16.gmra.mxu0 %v7062
        %v7347 = vpop.f32.mrf.mxu0
        %v7348 = vadd.f32 %v7000, %v7347
        %v7349 = vpop.f32.mrf.mxu0
        %v7350 = vadd.f32 %v7000, %v7349
        %7351 = vmatmul.bf16.gmra.mxu0 %v7065
        %v7352 = vpop.f32.mrf.mxu0
        %v7353 = vadd.f32 %v7000, %v7352
        %v7354 = vpop.f32.mrf.mxu0
        %v7355 = vadd.f32 %v7000, %v7354
        %7356 = vmatmul.bf16.gmra.mxu0 %v7068
        %v7357 = vpop.f32.mrf.mxu0
        %v7358 = vadd.f32 %v7000, %v7357
        %v7359 = vpop.f32.mrf.mxu0
        %v7360 = vadd.f32 %v7000, %v7359
        %7361 = vmatmul.bf16.gmra.mxu0 %v7071
        %v7362 = vpop.f32.mrf.mxu0
        %v7363 = vadd.f32 %v7000, %v7362
        %v7364 = vpop.f32.mrf.mxu0
        %v7365 = vadd.f32 %v7000, %v7364
        %7366 = vmatmul.bf16.gmra.mxu0 %v7074
        %v7367 = vpop.f32.mrf.mxu0
        %v7368 = vadd.f32 %v7000, %v7367
        %v7369 = vpop.f32.mrf.mxu0
        %v7370 = vadd.f32 %v7000, %v7369
        %7371 = vmatmul.bf16.gmra.mxu0 %v7077
        %v7372 = vpop.f32.mrf.mxu0
        %v7373 = vadd.f32 %v7000, %v7372
        %v7374 = vpop.f32.mrf.mxu0
        %v7375 = vadd.f32 %v7000, %v7374
        %7376 = vmatmul.bf16.gmra.mxu0 %v7080
        %v7377 = vpop.f32.mrf.mxu0
        %v7378 = vadd.f32 %v7000, %v7377
        %v7379 = vpop.f32.mrf.mxu0
        %v7380 = vadd.f32 %v7000, %v7379
        %7381 = vmatmul.bf16.gmra.mxu0 %v7083
        %v7382 = vpop.f32.mrf.mxu0
        %v7383 = vadd.f32 %v7000, %v7382
        %v7384 = vpop.f32.mrf.mxu0
        %v7385 = vadd.f32 %v7000, %v7384
        %7386 = vmatmul.bf16.gmra.mxu0 %v7086
        %v7387 = vpop.f32.mrf.mxu0
        %v7388 = vadd.f32 %v7000, %v7387
        %v7389 = vpop.f32.mrf.mxu0
        %v7390 = vadd.f32 %v7000, %v7389
        %7391 = vmatmul.bf16.gmra.mxu0 %v7089
        %v7392 = vpop.f32.mrf.mxu0
        %v7393 = vadd.f32 %v7000, %v7392
        %v7394 = vpop.f32.mrf.mxu0
        %v7395 = vadd.f32 %v7000, %v7394
        %7396 = vmatmul.bf16.gmra.mxu0 %v7092
        %v7397 = vpop.f32.mrf.mxu0
        %v7398 = vadd.f32 %v7000, %v7397
        %v7399 = vpop.f32.mrf.mxu0
        %v7400 = vadd.f32 %v7000, %v7399
        %7401 = vmatmul.bf16.gmra.mxu0 %v7095
        %v7402 = vpop.f32.mrf.mxu0
        %v7403 = vadd.f32 %v7000, %v7402
        %v7404 = vpop.f32.mrf.mxu0
        %v7405 = vadd.f32 %v7000, %v7404
        %7406 = vmatmul.bf16.gmra.mxu0 %v7098
        %v7407 = vpop.f32.mrf.mxu0
        %v7408 = vadd.f32 %v7000, %v7407
        %v7409 = vpop.f32.mrf.mxu0
        %v7410 = vadd.f32 %v7000, %v7409
        %7411 = vmatmul.bf16.gmra.mxu0 %v7101
        %v7412 = vpop.f32.mrf.mxu0
        %v7413 = vadd.f32 %v7000, %v7412
        %v7414 = vpop.f32.mrf.mxu0
        %v7415 = vadd.f32 %v7000, %v7414
        %7416 = vmatmul.bf16.gmra.mxu0 %v7104
        %v7417 = vpop.f32.mrf.mxu0
        %v7418 = vadd.f32 %v7000, %v7417
        %v7419 = vpop.f32.mrf.mxu0
        %v7420 = vadd.f32 %v7000, %v7419
        %7421 = vmatmul.bf16.gmra.mxu0 %v7107
        %v7422 = vpop.f32.mrf.mxu0
        %v7423 = vadd.f32 %v7000, %v7422
        %v7424 = vpop.f32.mrf.mxu0
        %v7425 = vadd.f32 %v7000, %v7424
        %7426 = vmatmul.bf16.gmra.mxu0 %v7110
        %v7427 = vpop.f32.mrf.mxu0
        %v7428 = vadd.f32 %v7000, %v7427
        %v7429 = vpop.f32.mrf.mxu0
        %v7430 = vadd.f32 %v7000, %v7429
        %7431 = vmatmul.bf16.gmra.mxu0 %v7113
        %v7432 = vpop.f32.mrf.mxu0
        %v7433 = vadd.f32 %v7000, %v7432
        %v7434 = vpop.f32.mrf.mxu0
        %v7435 = vadd.f32 %v7000, %v7434
        %7436 = vmatmul.bf16.gmra.mxu0 %v7116
        %v7437 = vpop.f32.mrf.mxu0
        %v7438 = vadd.f32 %v7000, %v7437
        %v7439 = vpop.f32.mrf.mxu0
        %v7440 = vadd.f32 %v7000, %v7439
        %7441 = vmatmul.bf16.gmra.mxu0 %v7119
        %v7442 = vpop.f32.mrf.mxu0
        %v7443 = vadd.f32 %v7000, %v7442
        %v7444 = vpop.f32.mrf.mxu0
        %v7445 = vadd.f32 %v7000, %v7444
        %7446 = vmatmul.bf16.gmra.mxu0 %v7122
        %v7447 = vpop.f32.mrf.mxu0
        %v7448 = vadd.f32 %v7000, %v7447
        %v7449 = vpop.f32.mrf.mxu0
        %v7450 = vadd.f32 %v7000, %v7449
        %7451 = vmatmul.bf16.gmra.mxu0 %v7125
        %v7452 = vpop.f32.mrf.mxu0
        %v7453 = vadd.f32 %v7000, %v7452
        %v7454 = vpop.f32.mrf.mxu0
        %v7455 = vadd.f32 %v7000, %v7454
        %7456 = vmatmul.bf16.gmra.mxu0 %v7128
        %v7457 = vpop.f32.mrf.mxu0
        %v7458 = vadd.f32 %v7000, %v7457
        %v7459 = vpop.f32.mrf.mxu0
        %v7460 = vadd.f32 %v7000, %v7459
        %7461 = vmatmul.bf16.gmra.mxu0 %v7131
        %v7462 = vpop.f32.mrf.mxu0
        %v7463 = vadd.f32 %v7000, %v7462
        %v7464 = vpop.f32.mrf.mxu0
        %v7465 = vadd.f32 %v7000, %v7464
        %7466 = vmatmul.bf16.gmra.mxu0 %v7134
        %v7467 = vpop.f32.mrf.mxu0
        %v7468 = vadd.f32 %v7000, %v7467
        %v7469 = vpop.f32.mrf.mxu0
        %v7470 = vadd.f32 %v7000, %v7469
        %7471 = vmatmul.bf16.gmra.mxu0 %v7137
        %v7472 = vpop.f32.mrf.mxu0
        %v7473 = vadd.f32 %v7000, %v7472
        %v7474 = vpop.f32.mrf.mxu0
        %v7475 = vadd.f32 %v7000, %v7474
        %7476 = vdwg.mxu0
        %v7477 = vadd.f32 %v303, %v7149
        %v7478 = vadd.f32 %v304, %v7318
        %v7479 = vadd.f32 %v305, %v7151
        %v7480 = vadd.f32 %v306, %v7320
        %v7481 = vadd.f32 %v307, %v7154
        %v7482 = vadd.f32 %v308, %v7323
        %v7483 = vadd.f32 %v309, %v7156
        %v7484 = vadd.f32 %v310, %v7325
        %v7485 = vadd.f32 %v311, %v7159
        %v7486 = vadd.f32 %v312, %v7328
        %v7487 = vadd.f32 %v313, %v7161
        %v7488 = vadd.f32 %v314, %v7330
        %v7489 = vadd.f32 %v315, %v7164
        %v7490 = vadd.f32 %v316, %v7333
        %v7491 = vadd.f32 %v317, %v7166
        %v7492 = vadd.f32 %v318, %v7335
        %v7493 = vadd.f32 %v319, %v7169
        %v7494 = vadd.f32 %v320, %v7338
        %v7495 = vadd.f32 %v321, %v7171
        %v7496 = vadd.f32 %v322, %v7340
        %v7497 = vadd.f32 %v323, %v7174
        %v7498 = vadd.f32 %v324, %v7343
        %v7499 = vadd.f32 %v325, %v7176
        %v7500 = vadd.f32 %v326, %v7345
        %v7501 = vadd.f32 %v327, %v7179
        %v7502 = vadd.f32 %v328, %v7348
        %v7503 = vadd.f32 %v329, %v7181
        %v7504 = vadd.f32 %v330, %v7350
        %v7505 = vadd.f32 %v331, %v7184
        %v7506 = vadd.f32 %v332, %v7353
        %v7507 = vadd.f32 %v333, %v7186
        %v7508 = vadd.f32 %v334, %v7355
        %v7509 = vadd.f32 %v335, %v7189
        %v7510 = vadd.f32 %v336, %v7358
        %v7511 = vadd.f32 %v337, %v7191
        %v7512 = vadd.f32 %v338, %v7360
        %v7513 = vadd.f32 %v339, %v7194
        %v7514 = vadd.f32 %v340, %v7363
        %v7515 = vadd.f32 %v341, %v7196
        %v7516 = vadd.f32 %v342, %v7365
        %v7517 = vadd.f32 %v343, %v7199
        %v7518 = vadd.f32 %v344, %v7368
        %v7519 = vadd.f32 %v345, %v7201
        %v7520 = vadd.f32 %v346, %v7370
        %v7521 = vadd.f32 %v347, %v7204
        %v7522 = vadd.f32 %v348, %v7373
        %v7523 = vadd.f32 %v349, %v7206
        %v7524 = vadd.f32 %v350, %v7375
        %v7525 = vadd.f32 %v351, %v7209
        %v7526 = vadd.f32 %v352, %v7378
        %v7527 = vadd.f32 %v353, %v7211
        %v7528 = vadd.f32 %v354, %v7380
        %v7529 = vadd.f32 %v355, %v7214
        %v7530 = vadd.f32 %v356, %v7383
        %v7531 = vadd.f32 %v357, %v7216
        %v7532 = vadd.f32 %v358, %v7385
        %v7533 = vadd.f32 %v359, %v7219
        %v7534 = vadd.f32 %v360, %v7388
        %v7535 = vadd.f32 %v361, %v7221
        %v7536 = vadd.f32 %v362, %v7390
        %v7537 = vadd.f32 %v363, %v7224
        %v7538 = vadd.f32 %v364, %v7393
        %v7539 = vadd.f32 %v365, %v7226
        %v7540 = vadd.f32 %v366, %v7395
        %v7541 = vadd.f32 %v367, %v7229
        %v7542 = vadd.f32 %v368, %v7398
        %v7543 = vadd.f32 %v369, %v7231
        %v7544 = vadd.f32 %v370, %v7400
        %v7545 = vadd.f32 %v371, %v7234
        %v7546 = vadd.f32 %v372, %v7403
        %v7547 = vadd.f32 %v373, %v7236
        %v7548 = vadd.f32 %v374, %v7405
        %v7549 = vadd.f32 %v375, %v7239
        %v7550 = vadd.f32 %v376, %v7408
        %v7551 = vadd.f32 %v377, %v7241
        %v7552 = vadd.f32 %v378, %v7410
        %v7553 = vadd.f32 %v379, %v7244
        %v7554 = vadd.f32 %v380, %v7413
        %v7555 = vadd.f32 %v381, %v7246
        %v7556 = vadd.f32 %v382, %v7415
        %v7557 = vadd.f32 %v383, %v7249
        %v7558 = vadd.f32 %v384, %v7418
        %v7559 = vadd.f32 %v385, %v7251
        %v7560 = vadd.f32 %v386, %v7420
        %v7561 = vadd.f32 %v387, %v7254
        %v7562 = vadd.f32 %v388, %v7423
        %v7563 = vadd.f32 %v389, %v7256
        %v7564 = vadd.f32 %v390, %v7425
        %v7565 = vadd.f32 %v391, %v7259
        %v7566 = vadd.f32 %v392, %v7428
        %v7567 = vadd.f32 %v393, %v7261
        %v7568 = vadd.f32 %v394, %v7430
        %v7569 = vadd.f32 %v395, %v7264
        %v7570 = vadd.f32 %v396, %v7433
        %v7571 = vadd.f32 %v397, %v7266
        %v7572 = vadd.f32 %v398, %v7435
        %v7573 = vadd.f32 %v399, %v7269
        %v7574 = vadd.f32 %v400, %v7438
        %v7575 = vadd.f32 %v401, %v7271
        %v7576 = vadd.f32 %v402, %v7440
        %v7577 = vadd.f32 %v403, %v7274
        %v7578 = vadd.f32 %v404, %v7443
        %v7579 = vadd.f32 %v405, %v7276
        %v7580 = vadd.f32 %v406, %v7445
        %v7581 = vadd.f32 %v407, %v7279
        %v7582 = vadd.f32 %v408, %v7448
        %v7583 = vadd.f32 %v409, %v7281
        %v7584 = vadd.f32 %v410, %v7450
        %v7585 = vadd.f32 %v411, %v7284
        %v7586 = vadd.f32 %v412, %v7453
        %v7587 = vadd.f32 %v413, %v7286
        %v7588 = vadd.f32 %v414, %v7455
        %v7589 = vadd.f32 %v415, %v7289
        %v7590 = vadd.f32 %v416, %v7458
        %v7591 = vadd.f32 %v417, %v7291
        %v7592 = vadd.f32 %v418, %v7460
        %v7593 = vadd.f32 %v419, %v7294
        %v7594 = vadd.f32 %v420, %v7463
        %v7595 = vadd.f32 %v421, %v7296
        %v7596 = vadd.f32 %v422, %v7465
        %v7597 = vadd.f32 %v423, %v7299
        %v7598 = vadd.f32 %v424, %v7468
        %v7599 = vadd.f32 %v425, %v7301
        %v7600 = vadd.f32 %v426, %v7470
        %v7601 = vadd.f32 %v427, %v7304
        %v7602 = vadd.f32 %v428, %v7473
        %v7603 = vadd.f32 %v429, %v7306
        %v7604 = vadd.f32 %v430, %v7475
        %7605 = vst [vmem:[%s299] sm:$0xff] %v7477
        %7606 = vst [vmem:[%s299 + $0x8] sm:$0xff] %v7478
        %7607 = vst [vmem:[%s299 + $0x10] sm:$0xff] %v7479
        %7608 = vst [vmem:[%s299 + $0x18] sm:$0xff] %v7480
        %7609 = vst [vmem:[%s299 + $0x20] sm:$0xff] %v7481
        %7610 = vst [vmem:[%s299 + $0x28] sm:$0xff] %v7482
        %7611 = vst [vmem:[%s299 + $0x30] sm:$0xff] %v7483
        %7612 = vst [vmem:[%s299 + $0x38] sm:$0xff] %v7484
        %7613 = vst [vmem:[%s299 + $0x40] sm:$0xff] %v7485
        %7614 = vst [vmem:[%s299 + $0x48] sm:$0xff] %v7486
        %7615 = vst [vmem:[%s299 + $0x50] sm:$0xff] %v7487
        %7616 = vst [vmem:[%s299 + $0x58] sm:$0xff] %v7488
        %7617 = vst [vmem:[%s299 + $0x60] sm:$0xff] %v7489
        %7618 = vst [vmem:[%s299 + $0x68] sm:$0xff] %v7490
        %7619 = vst [vmem:[%s299 + $0x70] sm:$0xff] %v7491
        %7620 = vst [vmem:[%s299 + $0x78] sm:$0xff] %v7492
        %7621 = vst [vmem:[%s299 + $0x80] sm:$0xff] %v7493
        %7622 = vst [vmem:[%s299 + $0x88] sm:$0xff] %v7494
        %7623 = vst [vmem:[%s299 + $0x90] sm:$0xff] %v7495
        %7624 = vst [vmem:[%s299 + $0x98] sm:$0xff] %v7496
        %7625 = vst [vmem:[%s299 + $0xa0] sm:$0xff] %v7497
        %7626 = vst [vmem:[%s299 + $0xa8] sm:$0xff] %v7498
        %7627 = vst [vmem:[%s299 + $0xb0] sm:$0xff] %v7499
        %7628 = vst [vmem:[%s299 + $0xb8] sm:$0xff] %v7500
        %7629 = vst [vmem:[%s299 + $0xc0] sm:$0xff] %v7501
        %7630 = vst [vmem:[%s299 + $0xc8] sm:$0xff] %v7502
        %7631 = vst [vmem:[%s299 + $0xd0] sm:$0xff] %v7503
        %7632 = vst [vmem:[%s299 + $0xd8] sm:$0xff] %v7504
        %7633 = vst [vmem:[%s299 + $0xe0] sm:$0xff] %v7505
        %7634 = vst [vmem:[%s299 + $0xe8] sm:$0xff] %v7506
        %7635 = vst [vmem:[%s299 + $0xf0] sm:$0xff] %v7507
        %7636 = vst [vmem:[%s299 + $0xf8] sm:$0xff] %v7508
        %7637 = vst [vmem:[%s299 + $0x100] sm:$0xff] %v7509
        %7638 = vst [vmem:[%s299 + $0x108] sm:$0xff] %v7510
        %7639 = vst [vmem:[%s299 + $0x110] sm:$0xff] %v7511
        %7640 = vst [vmem:[%s299 + $0x118] sm:$0xff] %v7512
        %7641 = vst [vmem:[%s299 + $0x120] sm:$0xff] %v7513
        %7642 = vst [vmem:[%s299 + $0x128] sm:$0xff] %v7514
        %7643 = vst [vmem:[%s299 + $0x130] sm:$0xff] %v7515
        %7644 = vst [vmem:[%s299 + $0x138] sm:$0xff] %v7516
        %7645 = vst [vmem:[%s299 + $0x140] sm:$0xff] %v7517
        %7646 = vst [vmem:[%s299 + $0x148] sm:$0xff] %v7518
        %7647 = vst [vmem:[%s299 + $0x150] sm:$0xff] %v7519
        %7648 = vst [vmem:[%s299 + $0x158] sm:$0xff] %v7520
        %7649 = vst [vmem:[%s299 + $0x160] sm:$0xff] %v7521
        %7650 = vst [vmem:[%s299 + $0x168] sm:$0xff] %v7522
        %7651 = vst [vmem:[%s299 + $0x170] sm:$0xff] %v7523
        %7652 = vst [vmem:[%s299 + $0x178] sm:$0xff] %v7524
        %7653 = vst [vmem:[%s299 + $0x180] sm:$0xff] %v7525
        %7654 = vst [vmem:[%s299 + $0x188] sm:$0xff] %v7526
        %7655 = vst [vmem:[%s299 + $0x190] sm:$0xff] %v7527
        %7656 = vst [vmem:[%s299 + $0x198] sm:$0xff] %v7528
        %7657 = vst [vmem:[%s299 + $0x1a0] sm:$0xff] %v7529
        %7658 = vst [vmem:[%s299 + $0x1a8] sm:$0xff] %v7530
        %7659 = vst [vmem:[%s299 + $0x1b0] sm:$0xff] %v7531
        %7660 = vst [vmem:[%s299 + $0x1b8] sm:$0xff] %v7532
        %7661 = vst [vmem:[%s299 + $0x1c0] sm:$0xff] %v7533
        %7662 = vst [vmem:[%s299 + $0x1c8] sm:$0xff] %v7534
        %7663 = vst [vmem:[%s299 + $0x1d0] sm:$0xff] %v7535
        %7664 = vst [vmem:[%s299 + $0x1d8] sm:$0xff] %v7536
        %7665 = vst [vmem:[%s299 + $0x1e0] sm:$0xff] %v7537
        %7666 = vst [vmem:[%s299 + $0x1e8] sm:$0xff] %v7538
        %7667 = vst [vmem:[%s299 + $0x1f0] sm:$0xff] %v7539
        %7668 = vst [vmem:[%s299 + $0x1f8] sm:$0xff] %v7540
        %7669 = vst [vmem:[%s299 + $0x200] sm:$0xff] %v7541
        %7670 = vst [vmem:[%s299 + $0x208] sm:$0xff] %v7542
        %7671 = vst [vmem:[%s299 + $0x210] sm:$0xff] %v7543
        %7672 = vst [vmem:[%s299 + $0x218] sm:$0xff] %v7544
        %7673 = vst [vmem:[%s299 + $0x220] sm:$0xff] %v7545
        %7674 = vst [vmem:[%s299 + $0x228] sm:$0xff] %v7546
        %7675 = vst [vmem:[%s299 + $0x230] sm:$0xff] %v7547
        %7676 = vst [vmem:[%s299 + $0x238] sm:$0xff] %v7548
        %7677 = vst [vmem:[%s299 + $0x240] sm:$0xff] %v7549
        %7678 = vst [vmem:[%s299 + $0x248] sm:$0xff] %v7550
        %7679 = vst [vmem:[%s299 + $0x250] sm:$0xff] %v7551
        %7680 = vst [vmem:[%s299 + $0x258] sm:$0xff] %v7552
        %7681 = vst [vmem:[%s299 + $0x260] sm:$0xff] %v7553
        %7682 = vst [vmem:[%s299 + $0x268] sm:$0xff] %v7554
        %7683 = vst [vmem:[%s299 + $0x270] sm:$0xff] %v7555
        %7684 = vst [vmem:[%s299 + $0x278] sm:$0xff] %v7556
        %7685 = vst [vmem:[%s299 + $0x280] sm:$0xff] %v7557
        %7686 = vst [vmem:[%s299 + $0x288] sm:$0xff] %v7558
        %7687 = vst [vmem:[%s299 + $0x290] sm:$0xff] %v7559
        %7688 = vst [vmem:[%s299 + $0x298] sm:$0xff] %v7560
        %7689 = vst [vmem:[%s299 + $0x2a0] sm:$0xff] %v7561
        %7690 = vst [vmem:[%s299 + $0x2a8] sm:$0xff] %v7562
        %7691 = vst [vmem:[%s299 + $0x2b0] sm:$0xff] %v7563
        %7692 = vst [vmem:[%s299 + $0x2b8] sm:$0xff] %v7564
        %7693 = vst [vmem:[%s299 + $0x2c0] sm:$0xff] %v7565
        %7694 = vst [vmem:[%s299 + $0x2c8] sm:$0xff] %v7566
        %7695 = vst [vmem:[%s299 + $0x2d0] sm:$0xff] %v7567
        %7696 = vst [vmem:[%s299 + $0x2d8] sm:$0xff] %v7568
        %7697 = vst [vmem:[%s299 + $0x2e0] sm:$0xff] %v7569
        %7698 = vst [vmem:[%s299 + $0x2e8] sm:$0xff] %v7570
        %7699 = vst [vmem:[%s299 + $0x2f0] sm:$0xff] %v7571
        %7700 = vst [vmem:[%s299 + $0x2f8] sm:$0xff] %v7572
        %7701 = vst [vmem:[%s299 + $0x300] sm:$0xff] %v7573
        %7702 = vst [vmem:[%s299 + $0x308] sm:$0xff] %v7574
        %7703 = vst [vmem:[%s299 + $0x310] sm:$0xff] %v7575
        %7704 = vst [vmem:[%s299 + $0x318] sm:$0xff] %v7576
        %7705 = vst [vmem:[%s299 + $0x320] sm:$0xff] %v7577
        %7706 = vst [vmem:[%s299 + $0x328] sm:$0xff] %v7578
        %7707 = vst [vmem:[%s299 + $0x330] sm:$0xff] %v7579
        %7708 = vst [vmem:[%s299 + $0x338] sm:$0xff] %v7580
        %7709 = vst [vmem:[%s299 + $0x340] sm:$0xff] %v7581
        %7710 = vst [vmem:[%s299 + $0x348] sm:$0xff] %v7582
        %7711 = vst [vmem:[%s299 + $0x350] sm:$0xff] %v7583
        %7712 = vst [vmem:[%s299 + $0x358] sm:$0xff] %v7584
        %7713 = vst [vmem:[%s299 + $0x360] sm:$0xff] %v7585
        %7714 = vst [vmem:[%s299 + $0x368] sm:$0xff] %v7586
        %7715 = vst [vmem:[%s299 + $0x370] sm:$0xff] %v7587
        %7716 = vst [vmem:[%s299 + $0x378] sm:$0xff] %v7588
        %7717 = vst [vmem:[%s299 + $0x380] sm:$0xff] %v7589
        %7718 = vst [vmem:[%s299 + $0x388] sm:$0xff] %v7590
        %7719 = vst [vmem:[%s299 + $0x390] sm:$0xff] %v7591
        %7720 = vst [vmem:[%s299 + $0x398] sm:$0xff] %v7592
        %7721 = vst [vmem:[%s299 + $0x3a0] sm:$0xff] %v7593
        %7722 = vst [vmem:[%s299 + $0x3a8] sm:$0xff] %v7594
        %7723 = vst [vmem:[%s299 + $0x3b0] sm:$0xff] %v7595
        %7724 = vst [vmem:[%s299 + $0x3b8] sm:$0xff] %v7596
        %7725 = vst [vmem:[%s299 + $0x3c0] sm:$0xff] %v7597
        %7726 = vst [vmem:[%s299 + $0x3c8] sm:$0xff] %v7598
        %7727 = vst [vmem:[%s299 + $0x3d0] sm:$0xff] %v7599
        %7728 = vst [vmem:[%s299 + $0x3d8] sm:$0xff] %v7600
        %7729 = vst [vmem:[%s299 + $0x3e0] sm:$0xff] %v7601
        %7730 = vst [vmem:[%s299 + $0x3e8] sm:$0xff] %v7602
        %7731 = vst [vmem:[%s299 + $0x3f0] sm:$0xff] %v7603
        %7732 = vst [vmem:[%s299 + $0x3f8] sm:$0xff] %v7604
        %s7733 = sand.u32 %s184, 1
        %s7734 = scalar_lea.sflag [#allocation5], %s7733
        %s7735 = sand.u32 %s184, 1
        %s7736 = smul.addr %s7735, 1024
        %s7737 = scalar_lea.vmem [#allocation6], %s7736
        // Predicated region
        $region53: #{tpu_custom_call.1} parent=47 // pred_check
          %p7738 = pneg %p194
        $region54: #{tpu_custom_call.1} parent=47 // pred_check_branch
          %7740 = sbr.rel (%p7738) target = $region56
        $region55: #{tpu_custom_call.1} parent=47 // pred_region
          %s7741 = smul.u32 2, %s24
          %7743 = vsyncadd %s7734, 0
          %s7744 = smul.addr %s7741, 64
          %s7745 = smul.addr %s7744, 8
          %s7746 = scalar_lea.hbm %s7, %s7745
          %s7747 = sshll.u32 %s7737, 4
          %s7748 = int_to_ptr.vmem [resolvable:$true] %s7747
          %s7749 = sshll.u32 %s7746, 4
          %s7750 = int_to_ptr.hbm [resolvable:$true] %s7749
          %7755 = dma.vmem_to_hbm [thread:$0]  %s7748, 16384, %s7750, %s7734, 256, 256, 16
        $region56: #{tpu_custom_call.1} parent=47 // pred_fallthru
          _
      $region48: #{tpu_custom_call.1} parent=5 // pred_fallthru
        _
      %p7756 = scmp.le.s32.totalorder 2, %s19
      // Predicated region
      $region57: #{tpu_custom_call.1} parent=5 // pred_check
        %p7757 = pneg %p7756
      $region58: #{tpu_custom_call.1} parent=5 // pred_check_branch
        %7759 = sbr.rel (%p7757) target = $region60
      $region59: #{tpu_custom_call.1} parent=5 // pred_region
        %s7760 = ssub.s32 %s19, 2
        // Predicated region
        $region61: #{tpu_custom_call.1} parent=59 // pred_check
          %p7761 = pneg %p200
        $region62: #{tpu_custom_call.1} parent=59 // pred_check_branch
          %7763 = sbr.rel (%p7761) target = $region64
        $region63: #{tpu_custom_call.1} parent=59 // pred_region
          %s7764 = sand.u32 %s185, 1
          %s7765 = scalar_lea.sflag [#allocation5], %s7764
          %s7766 = sand.u32 %s185, 1
          %s7767 = smul.addr %s7766, 1024
          %s7768 = scalar_lea.vmem [#allocation6], %s7767
          %7770 = dma.done %s7765, 16384
        $region64: #{tpu_custom_call.1} parent=59 // pred_fallthru
          _
      $region60: #{tpu_custom_call.1} parent=5 // pred_fallthru
        _
    $region6: #{tpu_custom_call.1} parent=1 // loop_footer
      %s23 = sadd.s32 1, %s19
    $region7: #{tpu_custom_call.1} parent=1 // loop_footer_branch
      %18 = sbr.rel target = $region3
    $region8: #{tpu_custom_call.1} parent=1 // loop_exit
      _
    %7771 = vsyncpa [#allocation4], 1
    %s7772 = scalar_lea.sflag [#allocation4], 1
    %7773 = vsyncpa %s7772, 1
    %7774 = vsyncpa [#allocation5], 1
    %s7775 = scalar_lea.sflag [#allocation5], 1
    %7776 = vsyncpa %s7775, 1

</llo_original>
